<compile_context>
chip_gen: v7x
topology: tpu7x:2x2x1
jax: 0.10.0
libtpu: 0.0.40
codegen_flags: <defaults>
</compile_context>

<pallas_src>
import functools

import jax
import jax.numpy as jnp
from jax.experimental import pallas as pl
from jax.experimental.pallas import tpu as pltpu

MAX_TILE_N = 65536               # voxels per grid step (lane axis), multiple of 128
VMEM_LIMIT = 32 * 1024 * 1024    # safe on v5e/v6e (128 MiB phys) and v7x (64 MiB phys)


def _round_up(x, m):
    return ((x + m - 1) // m) * m


def _tiling(dhw):
    """Tile the per-batch voxel axis (D*H*W)."""
    tile_n = min(MAX_TILE_N, _round_up(dhw, 128))
    spc = pl.cdiv(dhw, tile_n)          # voxel-sweep steps per batch item
    return tile_n, spc


def _cparams():
    # batch axis "parallel" (megacore shard on v7x), voxel sweep "arbitrary"
    return pltpu.CompilerParams(
        dimension_semantics=("parallel", "arbitrary"),
        vmem_limit_bytes=VMEM_LIMIT)


# ----------------------------- Pallas kernels ------------------------------

def _pass1_kernel(logits_ref, feat_ref, tgt_ref,
                  tp_o, ps_o, oh_o, lp_o, fs_o,
                  acc_tp, acc_p, acc_oh, acc_lp, acc_f,
                  *, dhw, tile_n, spc, has_partial):
    """Fused: softmax + dice stats (tp / sum(p) / class counts) + CE log-prob sum
    + positive-feature sum.  Block-wide partials live in VMEM scratch; cross-lane
    reductions + narrow stores happen once in the last-step epilogue (per batch)."""
    j = pl.program_id(1)
    K = logits_ref.shape[1]

    @pl.when(j == 0)
    def _():
        acc_tp[...] = jnp.zeros_like(acc_tp)
        acc_p[...] = jnp.zeros_like(acc_p)
        acc_oh[...] = jnp.zeros_like(acc_oh)
        acc_lp[...] = jnp.zeros_like(acc_lp)
        acc_f[...] = jnp.zeros_like(acc_f)

    logits = logits_ref[0].astype(jnp.float32)              # (K, T)
    feat = feat_ref[0].astype(jnp.float32)                  # (C, T)
    tgt = tgt_ref[0].astype(jnp.int32)                      # (1, T)

    if has_partial:
        # Sanitize the (possibly garbage) overhang of the last partial block so
        # no NaN/Inf can poison the accumulators through 0*Inf.
        col = jax.lax.broadcasted_iota(jnp.int32, (1, tile_n), 1)
        inb = (j * tile_n + col) < dhw                      # (1, T) bool
        validf = inb.astype(jnp.float32)
        logits = jnp.where(inb, logits, 0.0)
        feat = jnp.where(inb, feat, 0.0)
        tgt = jnp.where(inb, tgt, K)                        # out-of-range -> one-hot 0

    # --- softmax (reciprocal on the EUP instead of K*T divides) ---
    m = jnp.max(logits, axis=0, keepdims=True)              # (1, T)
    e = jnp.exp(logits - m)
    s = jnp.sum(e, axis=0, keepdims=True)
    inv_s = pl.reciprocal(s, approx=True)                   # (1, T), EUP
    p = e * inv_s                                           # softmax (K, T)
    logs = jnp.log(s)                                       # (1, T)

    classes = jax.lax.broadcasted_iota(jnp.int32, (K, tile_n), 0)
    ohv = (classes == tgt).astype(jnp.float32)              # one-hot (K, T)
    if K >= 2:
        posm = ohv[1:2]                                     # (1, T) == (tgt == 1) & valid
    else:
        posm = jnp.zeros((1, tile_n), jnp.float32)

    # CE: sum_k logp * onehot = sum_k (logits - m)*onehot - log(s)  (per valid voxel)
    gathered = jnp.sum((logits - m) * ohv, axis=0, keepdims=True)   # (1, T)

    acc_tp[...] += p * ohv
    acc_oh[...] += ohv
    acc_f[...] += feat * posm
    if has_partial:
        acc_p[...] += p * validf
        acc_lp[...] += gathered - logs * validf
    else:
        acc_p[...] += p
        acc_lp[...] += gathered - logs

    @pl.when(j == spc - 1)
    def _():
        tp_o[0] = jnp.sum(acc_tp[...], axis=1, keepdims=True)   # (K, 1)
        ps_o[0] = jnp.sum(acc_p[...], axis=1, keepdims=True)
        oh_o[0] = jnp.sum(acc_oh[...], axis=1, keepdims=True)
        lp_o[0] = jnp.sum(acc_lp[...], axis=1, keepdims=True)   # (1, 1)
        fs_o[0] = jnp.sum(acc_f[...], axis=1, keepdims=True)    # (C, 1)


def _sim_kernel(feat_ref, code_ref, snorm_ref,
                cs_ref, pos_o, misc_o,
                acc_pos, acc_misc,
                *, dhw, tile_n, spc, has_partial):
    """Per-voxel cosine-similarity map with the unit standard feature, plus fused
    positive-sim sum and misclassified-ring relu(sim) sum.
    code: 0 = other, 1 = positive, 2 = misclassified ring.
    cs = dot(f, s_unit) * rsqrt(|f|^2)  == dot(normalize(f), s_unit)."""
    j = pl.program_id(1)

    @pl.when(j == 0)
    def _():
        acc_pos[...] = jnp.zeros_like(acc_pos)
        acc_misc[...] = jnp.zeros_like(acc_misc)

    f = feat_ref[0].astype(jnp.float32)                     # (C, T)
    s = snorm_ref[...]                                      # (C, 1), unit norm (or zero)
    code = code_ref[0].astype(jnp.int32)                    # (1, T)

    if has_partial:
        col = jax.lax.broadcasted_iota(jnp.int32, (1, tile_n), 1)
        inb = (j * tile_n + col) < dhw
        f = jnp.where(inb, f, 0.0)
        code = jnp.where(inb, code, 0)

    dot = jnp.sum(f * s, axis=0, keepdims=True)             # (1, T)
    nrm2 = jnp.sum(f * f, axis=0, keepdims=True)            # (1, T)
    cs = dot * jax.lax.rsqrt(jnp.maximum(nrm2, 1e-24))      # == dot / max(|f|, 1e-12)

    cs_ref[0] = cs
    posf = (code == 1).astype(jnp.float32)
    miscf = (code == 2).astype(jnp.float32)
    acc_pos[...] += cs * posf
    acc_misc[...] += jnp.maximum(cs, 0.0) * miscf

    @pl.when(j == spc - 1)
    def _():
        pos_o[0] = jnp.sum(acc_pos[...], axis=1, keepdims=True)
        misc_o[0] = jnp.sum(acc_misc[...], axis=1, keepdims=True)


# ----------------------------- Pallas wrappers ------------------------------

def pallas_dice_ce_possum(logits_b, feat_b, tgt_b, dhw, tile_n, spc):
    """logits_b: (B, K, DHW), feat_b: (B, C, DHW), tgt_b: (B, 1, DHW) int32."""
    B, K, _ = logits_b.shape
    C = feat_b.shape[1]
    has_partial = (spc * tile_n != dhw)
    kernel = functools.partial(_pass1_kernel, dhw=dhw, tile_n=tile_n, spc=spc,
                               has_partial=has_partial)
    vox_map = lambda b, j: (b, 0, j)
    out_map = lambda b, j: (b, 0, 0)
    tp, ps, oh, lp, fs = pl.pallas_call(
        kernel,
        out_shape=(jax.ShapeDtypeStruct((B, K, 1), jnp.float32),
                   jax.ShapeDtypeStruct((B, K, 1), jnp.float32),
                   jax.ShapeDtypeStruct((B, K, 1), jnp.float32),
                   jax.ShapeDtypeStruct((B, 1, 1), jnp.float32),
                   jax.ShapeDtypeStruct((B, C, 1), jnp.float32)),
        grid_spec=pltpu.PrefetchScalarGridSpec(
            num_scalar_prefetch=0,
            grid=(B, spc),
            in_specs=[pl.BlockSpec((1, K, tile_n), vox_map),
                      pl.BlockSpec((1, C, tile_n), vox_map),
                      pl.BlockSpec((1, 1, tile_n), vox_map)],
            out_specs=(pl.BlockSpec((1, K, 1), out_map),
                       pl.BlockSpec((1, K, 1), out_map),
                       pl.BlockSpec((1, K, 1), out_map),
                       pl.BlockSpec((1, 1, 1), out_map),
                       pl.BlockSpec((1, C, 1), out_map)),
            scratch_shapes=[pltpu.VMEM((K, tile_n), jnp.float32),
                            pltpu.VMEM((K, tile_n), jnp.float32),
                            pltpu.VMEM((K, tile_n), jnp.float32),
                            pltpu.VMEM((1, tile_n), jnp.float32),
                            pltpu.VMEM((C, tile_n), jnp.float32)]),
        compiler_params=_cparams(),
    )(logits_b, feat_b, tgt_b)
    # batch_dice=True: sum the per-batch partials
    return (tp.sum(0)[:, 0], ps.sum(0)[:, 0], oh.sum(0)[:, 0],
            lp.sum(), fs.sum(0)[:, 0])


def pallas_sim(feat_b, code_b, s_norm_col, dhw, tile_n, spc):
    """feat_b: (B, C, DHW), code_b: (B, 1, DHW) int8, s_norm_col: (C, 1)."""
    B, C, _ = feat_b.shape
    n_out = spc * tile_n            # lane-dense (multiple of 128) output slab
    has_partial = (n_out != dhw)
    kernel = functools.partial(_sim_kernel, dhw=dhw, tile_n=tile_n, spc=spc,
                               has_partial=has_partial)
    vox_map = lambda b, j: (b, 0, j)
    out_map = lambda b, j: (b, 0, 0)
    cs, pos_p, misc_p = pl.pallas_call(
        kernel,
        out_shape=(jax.ShapeDtypeStruct((B, 1, n_out), jnp.float32),
                   jax.ShapeDtypeStruct((B, 1, 1), jnp.float32),
                   jax.ShapeDtypeStruct((B, 1, 1), jnp.float32)),
        grid_spec=pltpu.PrefetchScalarGridSpec(
            num_scalar_prefetch=0,
            grid=(B, spc),
            in_specs=[pl.BlockSpec((1, C, tile_n), vox_map),
                      pl.BlockSpec((1, 1, tile_n), vox_map),
                      pl.BlockSpec((C, 1), lambda b, j: (0, 0))],
            out_specs=(pl.BlockSpec((1, 1, tile_n), vox_map),
                       pl.BlockSpec((1, 1, 1), out_map),
                       pl.BlockSpec((1, 1, 1), out_map)),
            scratch_shapes=[pltpu.VMEM((1, tile_n), jnp.float32),
                            pltpu.VMEM((1, tile_n), jnp.float32)]),
        compiler_params=_cparams(),
    )(feat_b, code_b, s_norm_col)
    return cs, pos_p.sum(), misc_p.sum()


# ------------------------------ JAX glue ------------------------------------

def _dilate10(mask_f):
    # 10x (3x3x3 conv + >0) == Chebyshev dilation of radius 10 == 21^3 max filter,
    # computed as three separable 1-D max filters (63 instead of 9261 cmp/voxel).
    x = mask_f
    for win in ((1, 21, 1, 1), (1, 1, 21, 1), (1, 1, 1, 21)):
        x = jax.lax.reduce_window(x, 0.0, jax.lax.max, win, (1, 1, 1, 1), "SAME")
    return x


def dc_and_ce_loss(feature, net_output, target,
                   weight_ce=1.0, weight_dice=1.0, smooth=1e-5):
    B, K, D, H, W = net_output.shape
    C = feature.shape[1]
    dhw = D * H * W
    nvox = B * dhw
    tile_n, spc = _tiling(dhw)

    lbl = target[:, 0].astype(jnp.int32)                    # (B, D, H, W)

    # Free, contiguous reshapes (no transpose, no pad): voxel axis on lanes.
    logits_b = net_output.reshape(B, K, dhw)
    feat_b = feature.reshape(B, C, dhw)
    tgt_b = lbl.reshape(B, 1, dhw)

    # ---- fused SoftDice stats + CE sum + positive-feature sum (one sweep) ----
    tp, psum, ohsum, logp_sum, feat_pos_sum = pallas_dice_ce_possum(
        logits_b, feat_b, tgt_b, dhw, tile_n, spc)
    fp = psum - tp
    fn = ohsum - tp
    dc = (2.0 * tp + smooth) / jnp.maximum(2.0 * tp + fp + fn + smooth, 1e-8)
    dc_loss = -jnp.mean(dc[1:])                 # batch_dice=True, do_bg=False
    ce_loss = -logp_sum / nvox                  # mean reduction

    # ---- FRLoss ----
    cnt_pos = ohsum[1]                          # #voxels with label == 1
    std = jnp.where(cnt_pos > 0, feat_pos_sum / jnp.maximum(cnt_pos, 1.0), 0.0)
    s_norm = std / jnp.maximum(jnp.sqrt(jnp.sum(std * std)), 1e-12)

    pos = lbl == 1
    dil_pos = _dilate10(pos.astype(jnp.float32))
    misc = (dil_pos > 0) & (~pos)
    code_b = (pos.astype(jnp.int8) + 2 * misc.astype(jnp.int8)).reshape(B, 1, dhw)

    cs_full, pos_sim_sum, misc_sum = pallas_sim(
        feat_b, code_b, s_norm.reshape(C, 1), dhw, tile_n, spc)
    cs = cs_full[:, 0, :dhw].reshape(B, D, H, W)

    misc_cnt = jnp.sum(misc.astype(jnp.float32))
    positive_loss = jnp.where(cnt_pos > 0,
                              1.0 - pos_sim_sum / jnp.maximum(cnt_pos, 1.0), 0.0)
    misclassified_loss = jnp.where(misc_cnt > 0,
                                   misc_sum / jnp.maximum(misc_cnt, 1.0), 0.0)

    # top-250 most-positive-looking negatives, dilated, excluding positives.
    # (tiny reduction -> plain XLA, fuses with the dilation; no 3rd pallas_call)
    neg = lbl == 0
    masked = jnp.where(neg, cs, -jnp.inf).reshape(-1)
    k = min(250, nvox)
    thresh = jax.lax.top_k(masked, k)[0][k - 1]
    high = (neg & (cs >= thresh)).astype(jnp.float32)
    fin = (_dilate10(high) > 0) & (~pos)
    fin_f = fin.astype(jnp.float32)
    fin_cnt = jnp.sum(fin_f)
    fin_sum = jnp.sum(jnp.maximum(cs, 0.0) * fin_f)
    negative_dilated_loss = jnp.where(fin_cnt > 0,
                                      fin_sum / jnp.maximum(fin_cnt, 1.0), 0.0)

    fr_loss = positive_loss + misclassified_loss + negative_dilated_loss
    return weight_ce * ce_loss + weight_dice * dc_loss + 5.0 * fr_loss


# ----------------------- pure-JAX reference (sanity) ------------------------

def ref_dc_and_ce_loss(feature, net_output, target, smooth=1e-5):
    B, K, D, H, W = net_output.shape
    lbl = target[:, 0].astype(jnp.int32)
    logits = jnp.moveaxis(net_output, 1, -1).astype(jnp.float32)
    p = jax.nn.softmax(logits, axis=-1)
    logp = jax.nn.log_softmax(logits, axis=-1)
    onehot = jax.nn.one_hot(lbl, K, dtype=jnp.float32)
    axes = (0, 1, 2, 3)
    tp = jnp.sum(p * onehot, axis=axes)
    fp = jnp.sum(p * (1 - onehot), axis=axes)
    fn = jnp.sum((1 - p) * onehot, axis=axes)
    dc = (2 * tp + smooth) / jnp.maximum(2 * tp + fp + fn + smooth, 1e-8)
    dc_loss = -jnp.mean(dc[1:])
    ce_loss = -jnp.mean(jnp.sum(logp * onehot, axis=-1))

    feat = jnp.moveaxis(feature, 1, -1).astype(jnp.float32)
    pos = lbl == 1
    posf = pos.astype(jnp.float32)[..., None]
    cnt_pos = jnp.sum(posf)
    std = jnp.where(cnt_pos > 0,
                    jnp.sum(feat * posf, axis=(0, 1, 2, 3)) / jnp.maximum(cnt_pos, 1.0), 0.0)
    s_norm = std / jnp.maximum(jnp.sqrt(jnp.sum(std * std)), 1e-12)
    fhat = feat / jnp.maximum(
        jnp.sqrt(jnp.sum(feat * feat, axis=-1, keepdims=True)), 1e-12)
    dot = jnp.sum(fhat * s_norm, axis=-1)
    cs = dot / jnp.maximum(
        jnp.sqrt(jnp.sum(fhat * fhat, axis=-1)) * jnp.sqrt(jnp.sum(s_norm * s_norm)), 1e-8)
    pos_loss = jnp.where(cnt_pos > 0,
                         1.0 - jnp.sum(cs * pos) / jnp.maximum(cnt_pos, 1.0), 0.0)
    dil_pos = _dilate10(pos.astype(jnp.float32))
    misc = ((dil_pos > 0) & (~pos)).astype(jnp.float32)
    cm = jnp.sum(misc)
    misc_loss = jnp.where(cm > 0, jnp.sum(jnp.maximum(cs, 0) * misc) / jnp.maximum(cm, 1.0), 0.0)
    neg = lbl == 0
    masked = jnp.where(neg, dot, -jnp.inf).reshape(-1)
    k = min(250, masked.size)
    thresh = jax.lax.top_k(masked, k)[0][k - 1]
    high = (neg & (dot >= thresh)).astype(jnp.float32)
    fin = ((_dilate10(high) > 0) & (~pos)).astype(jnp.float32)
    cf = jnp.sum(fin)
    neg_loss = jnp.where(cf > 0, jnp.sum(jnp.maximum(cs, 0) * fin) / jnp.maximum(cf, 1.0), 0.0)
    return ce_loss + dc_loss + 5.0 * (pos_loss + misc_loss + neg_loss)


# --------------------------------- main --------------------------------------

if __name__ == "__main__":
    key = jax.random.PRNGKey(0)
    B, Cfeat, K, D, H, W = 2, 8, 4, 8, 16, 16            # Nvox = 4096, DHW = 2048
    k1, k2, k3 = jax.random.split(key, 3)
    feature = jax.random.normal(k1, (B, Cfeat, D, H, W), jnp.float32)
    net_output = jax.random.normal(k2, (B, K, D, H, W), jnp.float32)
    target = jax.random.randint(k3, (B, 1, D, H, W), 0, K).astype(jnp.int32)

    loss = jax.block_until_ready(jax.jit(dc_and_ce_loss)(feature, net_output, target))
    ref = jax.block_until_ready(ref_dc_and_ce_loss(feature, net_output, target))

    assert bool(jnp.isfinite(loss)), "non-finite loss"
    assert abs(float(loss) - float(ref)) < 1e-2 * max(1.0, abs(float(ref))), \
        (float(loss), float(ref))
    print("KERNEL_OK")
</pallas_src>

<mosaic_0001>
module attributes {stable_mosaic.version = 11 : i64} {
  func.func @_pass1_kernel(%arg0: i32, %arg1: i32, %arg2: memref<1x4x2048xf32, #tpu.memory_space<vmem>>, %arg3: memref<1x8x2048xf32, #tpu.memory_space<vmem>>, %arg4: memref<1x1x2048xi32, #tpu.memory_space<vmem>>, %arg5: memref<1x4x1xf32, #tpu.memory_space<vmem>>, %arg6: memref<1x4x1xf32, #tpu.memory_space<vmem>>, %arg7: memref<1x4x1xf32, #tpu.memory_space<vmem>>, %arg8: memref<1x1x1xf32, #tpu.memory_space<vmem>>, %arg9: memref<1x8x1xf32, #tpu.memory_space<vmem>>, %arg10: memref<4x2048xf32, #tpu.memory_space<vmem>>, %arg11: memref<4x2048xf32, #tpu.memory_space<vmem>>, %arg12: memref<4x2048xf32, #tpu.memory_space<vmem>>, %arg13: memref<1x2048xf32, #tpu.memory_space<vmem>>, %arg14: memref<8x2048xf32, #tpu.memory_space<vmem>>) attributes {dimension_semantics = [#tpu.dimension_semantics<parallel>, #tpu.dimension_semantics<arbitrary>], iteration_bounds = array<i64: 2, 1>, scalar_prefetch = 0 : i64, scratch_operands = 5 : i64, tpu.core_type = #tpu.core_type<tc>, window_params = [{transform_indices = @transform_0, window_bounds = array<i64: 1, 4, 2048>}, {transform_indices = @transform_1, window_bounds = array<i64: 1, 8, 2048>}, {transform_indices = @transform_2, window_bounds = array<i64: 1, 1, 2048>}, {transform_indices = @transform_3, window_bounds = array<i64: 1, 4, 1>}, {transform_indices = @transform_4, window_bounds = array<i64: 1, 4, 1>}, {transform_indices = @transform_5, window_bounds = array<i64: 1, 4, 1>}, {transform_indices = @transform_6, window_bounds = array<i64: 1, 1, 1>}, {transform_indices = @transform_7, window_bounds = array<i64: 1, 8, 1>}]} {
    %c0_i32 = arith.constant 0 : i32
    %0 = arith.cmpi eq, %arg1, %c0_i32 : i32
    %1 = arith.extui %0 : i1 to i32
    %c0_i32_0 = arith.constant 0 : i32
    %2 = arith.cmpi ne, %1, %c0_i32_0 : i32
    scf.if %2 {
      %cst_33 = arith.constant 0.000000e+00 : f32
      %53 = vector.broadcast %cst_33 : f32 to vector<4x2048xf32>
      %c0_34 = arith.constant 0 : index
      %c0_35 = arith.constant 0 : index
      %54 = vector.load %arg10[%c0_34, %c0_35] : memref<4x2048xf32, #tpu.memory_space<vmem>>, vector<4x2048xf32>
      tpu.vector_store %arg10[%c0_34, %c0_35], %53 {strides = array<i32>} : memref<4x2048xf32, #tpu.memory_space<vmem>>, vector<4x2048xf32>,
      %cst_36 = arith.constant 0.000000e+00 : f32
      %55 = vector.broadcast %cst_36 : f32 to vector<4x2048xf32>
      %c0_37 = arith.constant 0 : index
      %c0_38 = arith.constant 0 : index
      %56 = vector.load %arg11[%c0_37, %c0_38] : memref<4x2048xf32, #tpu.memory_space<vmem>>, vector<4x2048xf32>
      tpu.vector_store %arg11[%c0_37, %c0_38], %55 {strides = array<i32>} : memref<4x2048xf32, #tpu.memory_space<vmem>>, vector<4x2048xf32>,
      %cst_39 = arith.constant 0.000000e+00 : f32
      %57 = vector.broadcast %cst_39 : f32 to vector<4x2048xf32>
      %c0_40 = arith.constant 0 : index
      %c0_41 = arith.constant 0 : index
      %58 = vector.load %arg12[%c0_40, %c0_41] : memref<4x2048xf32, #tpu.memory_space<vmem>>, vector<4x2048xf32>
      tpu.vector_store %arg12[%c0_40, %c0_41], %57 {strides = array<i32>} : memref<4x2048xf32, #tpu.memory_space<vmem>>, vector<4x2048xf32>,
      %cst_42 = arith.constant 0.000000e+00 : f32
      %59 = vector.broadcast %cst_42 : f32 to vector<1x2048xf32>
      %c0_43 = arith.constant 0 : index
      %c0_44 = arith.constant 0 : index
      %60 = vector.load %arg13[%c0_43, %c0_44] : memref<1x2048xf32, #tpu.memory_space<vmem>>, vector<1x2048xf32>
      tpu.vector_store %arg13[%c0_43, %c0_44], %59 {strides = array<i32>} : memref<1x2048xf32, #tpu.memory_space<vmem>>, vector<1x2048xf32>,
      %cst_45 = arith.constant 0.000000e+00 : f32
      %61 = vector.broadcast %cst_45 : f32 to vector<8x2048xf32>
      %c0_46 = arith.constant 0 : index
      %c0_47 = arith.constant 0 : index
      %62 = vector.load %arg14[%c0_46, %c0_47] : memref<8x2048xf32, #tpu.memory_space<vmem>>, vector<8x2048xf32>
      tpu.vector_store %arg14[%c0_46, %c0_47], %61 {strides = array<i32>} : memref<8x2048xf32, #tpu.memory_space<vmem>>, vector<8x2048xf32>,
    } else {
    }
    %c0 = arith.constant 0 : index
    %c0_1 = arith.constant 0 : index
    %c0_2 = arith.constant 0 : index
    %3 = vector.load %arg2[%c0, %c0_1, %c0_2] : memref<1x4x2048xf32, #tpu.memory_space<vmem>>, vector<1x4x2048xf32>
    %4 = vector.shape_cast %3 : vector<1x4x2048xf32> to vector<4x2048xf32>
    %c0_3 = arith.constant 0 : index
    %c0_4 = arith.constant 0 : index
    %c0_5 = arith.constant 0 : index
    %5 = vector.load %arg3[%c0_3, %c0_4, %c0_5] : memref<1x8x2048xf32, #tpu.memory_space<vmem>>, vector<1x8x2048xf32>
    %6 = vector.shape_cast %5 : vector<1x8x2048xf32> to vector<8x2048xf32>
    %c0_6 = arith.constant 0 : index
    %c0_7 = arith.constant 0 : index
    %c0_8 = arith.constant 0 : index
    %7 = vector.load %arg4[%c0_6, %c0_7, %c0_8] : memref<1x1x2048xi32, #tpu.memory_space<vmem>>, vector<1x1x2048xi32>
    %8 = vector.shape_cast %7 : vector<1x1x2048xi32> to vector<1x2048xi32>
    %cst = arith.constant dense<0xFF800000> : vector<2048xf32>
    %9 = vector.multi_reduction <maximumf>, %4, %cst [0] : vector<4x2048xf32> to vector<2048xf32>
    %10 = vector.shape_cast %9 : vector<2048xf32> to vector<1x2048xf32>
    %11 = vector.broadcast %10 : vector<1x2048xf32> to vector<4x2048xf32>
    %12 = arith.subf %4, %11 : vector<4x2048xf32>
    %13 = math.exp %12 : vector<4x2048xf32>
    %cst_9 = arith.constant dense<0.000000e+00> : vector<2048xf32>
    %14 = vector.multi_reduction <add>, %13, %cst_9 [0] : vector<4x2048xf32> to vector<2048xf32>
    %15 = vector.shape_cast %14 : vector<2048xf32> to vector<1x2048xf32>
    %16 = tpu.reciprocal %15 {approx = true} : vector<1x2048xf32> -> vector<1x2048xf32>
    %17 = vector.broadcast %16 : vector<1x2048xf32> to vector<4x2048xf32>
    %18 = arith.mulf %13, %17 : vector<4x2048xf32>
    %19 = math.log %15 : vector<1x2048xf32>
    %20 = tpu.iota {dimensions = array<i32: 0>} : vector<4x2048xi32>
    %21 = vector.broadcast %8 : vector<1x2048xi32> to vector<4x2048xi32>
    %22 = arith.cmpi eq, %20, %21 : vector<4x2048xi32>
    %23 = arith.extui %22 : vector<4x2048xi1> to vector<4x2048xi32>
    %24 = arith.sitofp %23 : vector<4x2048xi32> to vector<4x2048xf32>
    %25 = vector.extract_strided_slice %24 {offsets = [1, 0], sizes = [1, 2048], strides = [1, 1]} : vector<4x2048xf32> to vector<1x2048xf32>
    %26 = vector.broadcast %10 : vector<1x2048xf32> to vector<4x2048xf32>
    %27 = arith.subf %4, %26 : vector<4x2048xf32>
    %28 = arith.mulf %27, %24 : vector<4x2048xf32>
    %cst_10 = arith.constant dense<0.000000e+00> : vector<2048xf32>
    %29 = vector.multi_reduction <add>, %28, %cst_10 [0] : vector<4x2048xf32> to vector<2048xf32>
    %30 = vector.shape_cast %29 : vector<2048xf32> to vector<1x2048xf32>
    %c0_11 = arith.constant 0 : index
    %c0_12 = arith.constant 0 : index
    %31 = vector.load %arg10[%c0_11, %c0_12] : memref<4x2048xf32, #tpu.memory_space<vmem>>, vector<4x2048xf32>
    %32 = arith.mulf %18, %24 : vector<4x2048xf32>
    %33 = arith.addf %31, %32 : vector<4x2048xf32>
    %c0_13 = arith.constant 0 : index
    %c0_14 = arith.constant 0 : index
    %34 = vector.load %arg10[%c0_13, %c0_14] : memref<4x2048xf32, #tpu.memory_space<vmem>>, vector<4x2048xf32>
    tpu.vector_store %arg10[%c0_13, %c0_14], %33 {strides = array<i32>} : memref<4x2048xf32, #tpu.memory_space<vmem>>, vector<4x2048xf32>,
    %c0_15 = arith.constant 0 : index
    %c0_16 = arith.constant 0 : index
    %35 = vector.load %arg12[%c0_15, %c0_16] : memref<4x2048xf32, #tpu.memory_space<vmem>>, vector<4x2048xf32>
    %36 = arith.addf %35, %24 : vector<4x2048xf32>
    %c0_17 = arith.constant 0 : index
    %c0_18 = arith.constant 0 : index
    %37 = vector.load %arg12[%c0_17, %c0_18] : memref<4x2048xf32, #tpu.memory_space<vmem>>, vector<4x2048xf32>
    tpu.vector_store %arg12[%c0_17, %c0_18], %36 {strides = array<i32>} : memref<4x2048xf32, #tpu.memory_space<vmem>>, vector<4x2048xf32>,
    %c0_19 = arith.constant 0 : index
    %c0_20 = arith.constant 0 : index
    %38 = vector.load %arg14[%c0_19, %c0_20] : memref<8x2048xf32, #tpu.memory_space<vmem>>, vector<8x2048xf32>
    %39 = vector.broadcast %25 : vector<1x2048xf32> to vector<8x2048xf32>
    %40 = arith.mulf %6, %39 : vector<8x2048xf32>
    %41 = arith.addf %38, %40 : vector<8x2048xf32>
    %c0_21 = arith.constant 0 : index
    %c0_22 = arith.constant 0 : index
    %42 = vector.load %arg14[%c0_21, %c0_22] : memref<8x2048xf32, #tpu.memory_space<vmem>>, vector<8x2048xf32>
    tpu.vector_store %arg14[%c0_21, %c0_22], %41 {strides = array<i32>} : memref<8x2048xf32, #tpu.memory_space<vmem>>, vector<8x2048xf32>,
    %c0_23 = arith.constant 0 : index
    %c0_24 = arith.constant 0 : index
    %43 = vector.load %arg11[%c0_23, %c0_24] : memref<4x2048xf32, #tpu.memory_space<vmem>>, vector<4x2048xf32>
    %44 = arith.addf %43, %18 : vector<4x2048xf32>
    %c0_25 = arith.constant 0 : index
    %c0_26 = arith.constant 0 : index
    %45 = vector.load %arg11[%c0_25, %c0_26] : memref<4x2048xf32, #tpu.memory_space<vmem>>, vector<4x2048xf32>
    tpu.vector_store %arg11[%c0_25, %c0_26], %44 {strides = array<i32>} : memref<4x2048xf32, #tpu.memory_space<vmem>>, vector<4x2048xf32>,
    %c0_27 = arith.constant 0 : index
    %c0_28 = arith.constant 0 : index
    %46 = vector.load %arg13[%c0_27, %c0_28] : memref<1x2048xf32, #tpu.memory_space<vmem>>, vector<1x2048xf32>
    %47 = arith.subf %30, %19 : vector<1x2048xf32>
    %48 = arith.addf %46, %47 : vector<1x2048xf32>
    %c0_29 = arith.constant 0 : index
    %c0_30 = arith.constant 0 : index
    %49 = vector.load %arg13[%c0_29, %c0_30] : memref<1x2048xf32, #tpu.memory_space<vmem>>, vector<1x2048xf32>
    tpu.vector_store %arg13[%c0_29, %c0_30], %48 {strides = array<i32>} : memref<1x2048xf32, #tpu.memory_space<vmem>>, vector<1x2048xf32>,
    %c0_i32_31 = arith.constant 0 : i32
    %50 = arith.cmpi eq, %arg1, %c0_i32_31 : i32
    %51 = arith.extui %50 : i1 to i32
    %c0_i32_32 = arith.constant 0 : i32
    %52 = arith.cmpi ne, %51, %c0_i32_32 : i32
    scf.if %52 {
      %c0_33 = arith.constant 0 : index
      %c0_34 = arith.constant 0 : index
      %53 = vector.load %arg10[%c0_33, %c0_34] : memref<4x2048xf32, #tpu.memory_space<vmem>>, vector<4x2048xf32>
      %cst_35 = arith.constant dense<0.000000e+00> : vector<4xf32>
      %54 = vector.multi_reduction <add>, %53, %cst_35 [1] : vector<4x2048xf32> to vector<4xf32>
      %55 = vector.shape_cast %54 : vector<4xf32> to vector<4x1xf32>
      %c0_36 = arith.constant 0 : index
      %c0_37 = arith.constant 0 : index
      %c0_38 = arith.constant 0 : index
      %56 = vector.load %arg5[%c0_36, %c0_37, %c0_38] : memref<1x4x1xf32, #tpu.memory_space<vmem>>, vector<1x4x1xf32>
      %57 = vector.shape_cast %56 : vector<1x4x1xf32> to vector<4x1xf32>
      %58 = vector.shape_cast %55 : vector<4x1xf32> to vector<1x4x1xf32>
      tpu.vector_store %arg5[%c0_36, %c0_37, %c0_38], %58 {strides = array<i32>} : memref<1x4x1xf32, #tpu.memory_space<vmem>>, vector<1x4x1xf32>,
      %c0_39 = arith.constant 0 : index
      %c0_40 = arith.constant 0 : index
      %59 = vector.load %arg11[%c0_39, %c0_40] : memref<4x2048xf32, #tpu.memory_space<vmem>>, vector<4x2048xf32>
      %cst_41 = arith.constant dense<0.000000e+00> : vector<4xf32>
      %60 = vector.multi_reduction <add>, %59, %cst_41 [1] : vector<4x2048xf32> to vector<4xf32>
      %61 = vector.shape_cast %60 : vector<4xf32> to vector<4x1xf32>
      %c0_42 = arith.constant 0 : index
      %c0_43 = arith.constant 0 : index
      %c0_44 = arith.constant 0 : index
      %62 = vector.load %arg6[%c0_42, %c0_43, %c0_44] : memref<1x4x1xf32, #tpu.memory_space<vmem>>, vector<1x4x1xf32>
      %63 = vector.shape_cast %62 : vector<1x4x1xf32> to vector<4x1xf32>
      %64 = vector.shape_cast %61 : vector<4x1xf32> to vector<1x4x1xf32>
      tpu.vector_store %arg6[%c0_42, %c0_43, %c0_44], %64 {strides = array<i32>} : memref<1x4x1xf32, #tpu.memory_space<vmem>>, vector<1x4x1xf32>,
      %c0_45 = arith.constant 0 : index
      %c0_46 = arith.constant 0 : index
      %65 = vector.load %arg12[%c0_45, %c0_46] : memref<4x2048xf32, #tpu.memory_space<vmem>>, vector<4x2048xf32>
      %cst_47 = arith.constant dense<0.000000e+00> : vector<4xf32>
      %66 = vector.multi_reduction <add>, %65, %cst_47 [1] : vector<4x2048xf32> to vector<4xf32>
      %67 = vector.shape_cast %66 : vector<4xf32> to vector<4x1xf32>
      %c0_48 = arith.constant 0 : index
      %c0_49 = arith.constant 0 : index
      %c0_50 = arith.constant 0 : index
      %68 = vector.load %arg7[%c0_48, %c0_49, %c0_50] : memref<1x4x1xf32, #tpu.memory_space<vmem>>, vector<1x4x1xf32>
      %69 = vector.shape_cast %68 : vector<1x4x1xf32> to vector<4x1xf32>
      %70 = vector.shape_cast %67 : vector<4x1xf32> to vector<1x4x1xf32>
      tpu.vector_store %arg7[%c0_48, %c0_49, %c0_50], %70 {strides = array<i32>} : memref<1x4x1xf32, #tpu.memory_space<vmem>>, vector<1x4x1xf32>,
      %c0_51 = arith.constant 0 : index
      %c0_52 = arith.constant 0 : index
      %71 = vector.load %arg13[%c0_51, %c0_52] : memref<1x2048xf32, #tpu.memory_space<vmem>>, vector<1x2048xf32>
      %cst_53 = arith.constant dense<0.000000e+00> : vector<1xf32>
      %72 = vector.multi_reduction <add>, %71, %cst_53 [1] : vector<1x2048xf32> to vector<1xf32>
      %73 = vector.shape_cast %72 : vector<1xf32> to vector<1x1xf32>
      %c0_54 = arith.constant 0 : index
      %c0_55 = arith.constant 0 : index
      %c0_56 = arith.constant 0 : index
      %74 = vector.load %arg8[%c0_54, %c0_55, %c0_56] : memref<1x1x1xf32, #tpu.memory_space<vmem>>, vector<1x1x1xf32>
      %75 = vector.shape_cast %74 : vector<1x1x1xf32> to vector<1x1xf32>
      %76 = vector.shape_cast %73 : vector<1x1xf32> to vector<1x1x1xf32>
      tpu.vector_store %arg8[%c0_54, %c0_55, %c0_56], %76 {strides = array<i32>} : memref<1x1x1xf32, #tpu.memory_space<vmem>>, vector<1x1x1xf32>,
      %c0_57 = arith.constant 0 : index
      %c0_58 = arith.constant 0 : index
      %77 = vector.load %arg14[%c0_57, %c0_58] : memref<8x2048xf32, #tpu.memory_space<vmem>>, vector<8x2048xf32>
      %cst_59 = arith.constant dense<0.000000e+00> : vector<8xf32>
      %78 = vector.multi_reduction <add>, %77, %cst_59 [1] : vector<8x2048xf32> to vector<8xf32>
      %79 = vector.shape_cast %78 : vector<8xf32> to vector<8x1xf32>
      %c0_60 = arith.constant 0 : index
      %c0_61 = arith.constant 0 : index
      %c0_62 = arith.constant 0 : index
      %80 = vector.load %arg9[%c0_60, %c0_61, %c0_62] : memref<1x8x1xf32, #tpu.memory_space<vmem>>, vector<1x8x1xf32>
      %81 = vector.shape_cast %80 : vector<1x8x1xf32> to vector<8x1xf32>
      %82 = vector.shape_cast %79 : vector<8x1xf32> to vector<1x8x1xf32>
      tpu.vector_store %arg9[%c0_60, %c0_61, %c0_62], %82 {strides = array<i32>} : memref<1x8x1xf32, #tpu.memory_space<vmem>>, vector<1x8x1xf32>,
    } else {
    }
    return
  }
  func.func @transform_0(%arg0: i32, %arg1: i32) -> (i32, i32, i32) {
    %c0_i32 = arith.constant 0 : i32
    %c0_i32_0 = arith.constant 0 : i32
    return %arg0, %c0_i32, %arg1 : i32, i32, i32
  }
  func.func @transform_1(%arg0: i32, %arg1: i32) -> (i32, i32, i32) {
    %c0_i32 = arith.constant 0 : i32
    %c0_i32_0 = arith.constant 0 : i32
    return %arg0, %c0_i32, %arg1 : i32, i32, i32
  }
  func.func @transform_2(%arg0: i32, %arg1: i32) -> (i32, i32, i32) {
    %c0_i32 = arith.constant 0 : i32
    %c0_i32_0 = arith.constant 0 : i32
    return %arg0, %c0_i32, %arg1 : i32, i32, i32
  }
  func.func @transform_3(%arg0: i32, %arg1: i32) -> (i32, i32, i32) {
    %c0_i32 = arith.constant 0 : i32
    %c0_i32_0 = arith.constant 0 : i32
    %c0_i32_1 = arith.constant 0 : i32
    return %arg0, %c0_i32, %c0_i32_0 : i32, i32, i32
  }
  func.func @transform_4(%arg0: i32, %arg1: i32) -> (i32, i32, i32) {
    %c0_i32 = arith.constant 0 : i32
    %c0_i32_0 = arith.constant 0 : i32
    %c0_i32_1 = arith.constant 0 : i32
    return %arg0, %c0_i32, %c0_i32_0 : i32, i32, i32
  }
  func.func @transform_5(%arg0: i32, %arg1: i32) -> (i32, i32, i32) {
    %c0_i32 = arith.constant 0 : i32
    %c0_i32_0 = arith.constant 0 : i32
    %c0_i32_1 = arith.constant 0 : i32
    return %arg0, %c0_i32, %c0_i32_0 : i32, i32, i32
  }
  func.func @transform_6(%arg0: i32, %arg1: i32) -> (i32, i32, i32) {
    %c0_i32 = arith.constant 0 : i32
    %c0_i32_0 = arith.constant 0 : i32
    %c0_i32_1 = arith.constant 0 : i32
    return %arg0, %c0_i32, %c0_i32_0 : i32, i32, i32
  }
  func.func @transform_7(%arg0: i32, %arg1: i32) -> (i32, i32, i32) {
    %c0_i32 = arith.constant 0 : i32
    %c0_i32_0 = arith.constant 0 : i32
    %c0_i32_1 = arith.constant 0 : i32
    return %arg0, %c0_i32, %c0_i32_0 : i32, i32, i32
  }
}

module attributes {stable_mosaic.version = 11 : i64} {
  func.func @_sim_kernel(%arg0: i32, %arg1: i32, %arg2: memref<1x8x2048xf32, #tpu.memory_space<vmem>>, %arg3: memref<1x1x2048xi8, #tpu.memory_space<vmem>>, %arg4: memref<8x1xf32, #tpu.memory_space<vmem>>, %arg5: memref<1x1x2048xf32, #tpu.memory_space<vmem>>, %arg6: memref<1x1x1xf32, #tpu.memory_space<vmem>>, %arg7: memref<1x1x1xf32, #tpu.memory_space<vmem>>, %arg8: memref<1x2048xf32, #tpu.memory_space<vmem>>, %arg9: memref<1x2048xf32, #tpu.memory_space<vmem>>) attributes {dimension_semantics = [#tpu.dimension_semantics<parallel>, #tpu.dimension_semantics<arbitrary>], iteration_bounds = array<i64: 2, 1>, scalar_prefetch = 0 : i64, scratch_operands = 2 : i64, tpu.core_type = #tpu.core_type<tc>, window_params = [{transform_indices = @transform_0, window_bounds = array<i64: 1, 8, 2048>}, {transform_indices = @transform_1, window_bounds = array<i64: 1, 1, 2048>}, {pipeline_mode = #tpu.pipeline_mode<synchronous>, transform_indices = @transform_2, window_bounds = array<i64: 8, 1>}, {transform_indices = @transform_3, window_bounds = array<i64: 1, 1, 2048>}, {transform_indices = @transform_4, window_bounds = array<i64: 1, 1, 1>}, {transform_indices = @transform_5, window_bounds = array<i64: 1, 1, 1>}]} {
    %c0_i32 = arith.constant 0 : i32
    %0 = arith.cmpi eq, %arg1, %c0_i32 : i32
    %1 = arith.extui %0 : i1 to i32
    %c0_i32_0 = arith.constant 0 : i32
    %2 = arith.cmpi ne, %1, %c0_i32_0 : i32
    scf.if %2 {
      %cst_24 = arith.constant 0.000000e+00 : f32
      %44 = vector.broadcast %cst_24 : f32 to vector<1x2048xf32>
      %c0_25 = arith.constant 0 : index
      %c0_26 = arith.constant 0 : index
      %45 = vector.load %arg8[%c0_25, %c0_26] : memref<1x2048xf32, #tpu.memory_space<vmem>>, vector<1x2048xf32>
      tpu.vector_store %arg8[%c0_25, %c0_26], %44 {strides = array<i32>} : memref<1x2048xf32, #tpu.memory_space<vmem>>, vector<1x2048xf32>,
      %cst_27 = arith.constant 0.000000e+00 : f32
      %46 = vector.broadcast %cst_27 : f32 to vector<1x2048xf32>
      %c0_28 = arith.constant 0 : index
      %c0_29 = arith.constant 0 : index
      %47 = vector.load %arg9[%c0_28, %c0_29] : memref<1x2048xf32, #tpu.memory_space<vmem>>, vector<1x2048xf32>
      tpu.vector_store %arg9[%c0_28, %c0_29], %46 {strides = array<i32>} : memref<1x2048xf32, #tpu.memory_space<vmem>>, vector<1x2048xf32>,
    } else {
    }
    %c0 = arith.constant 0 : index
    %c0_1 = arith.constant 0 : index
    %c0_2 = arith.constant 0 : index
    %3 = vector.load %arg2[%c0, %c0_1, %c0_2] : memref<1x8x2048xf32, #tpu.memory_space<vmem>>, vector<1x8x2048xf32>
    %4 = vector.shape_cast %3 : vector<1x8x2048xf32> to vector<8x2048xf32>
    %c0_3 = arith.constant 0 : index
    %c0_4 = arith.constant 0 : index
    %5 = vector.load %arg4[%c0_3, %c0_4] : memref<8x1xf32, #tpu.memory_space<vmem>>, vector<8x1xf32>
    %c0_5 = arith.constant 0 : index
    %c0_6 = arith.constant 0 : index
    %c0_7 = arith.constant 0 : index
    %6 = vector.load %arg3[%c0_5, %c0_6, %c0_7] : memref<1x1x2048xi8, #tpu.memory_space<vmem>>, vector<1x1x2048xi8>
    %7 = vector.shape_cast %6 : vector<1x1x2048xi8> to vector<1x2048xi8>
    %8 = arith.extsi %7 : vector<1x2048xi8> to vector<1x2048xi32>
    %9 = vector.broadcast %5 : vector<8x1xf32> to vector<8x2048xf32>
    %10 = arith.mulf %4, %9 : vector<8x2048xf32>
    %cst = arith.constant dense<0.000000e+00> : vector<2048xf32>
    %11 = vector.multi_reduction <add>, %10, %cst [0] : vector<8x2048xf32> to vector<2048xf32>
    %12 = vector.shape_cast %11 : vector<2048xf32> to vector<1x2048xf32>
    %13 = arith.mulf %4, %4 : vector<8x2048xf32>
    %cst_8 = arith.constant dense<0.000000e+00> : vector<2048xf32>
    %14 = vector.multi_reduction <add>, %13, %cst_8 [0] : vector<8x2048xf32> to vector<2048xf32>
    %15 = vector.shape_cast %14 : vector<2048xf32> to vector<1x2048xf32>
    %cst_9 = arith.constant 1.000000e-24 : f32
    %16 = vector.broadcast %cst_9 : f32 to vector<1x2048xf32>
    %17 = arith.maximumf %15, %16 : vector<1x2048xf32>
    %18 = math.rsqrt %17 : vector<1x2048xf32>
    %19 = arith.mulf %12, %18 : vector<1x2048xf32>
    %c0_10 = arith.constant 0 : index
    %c0_11 = arith.constant 0 : index
    %c0_12 = arith.constant 0 : index
    %20 = vector.load %arg5[%c0_10, %c0_11, %c0_12] : memref<1x1x2048xf32, #tpu.memory_space<vmem>>, vector<1x1x2048xf32>
    %21 = vector.shape_cast %20 : vector<1x1x2048xf32> to vector<1x2048xf32>
    %22 = vector.shape_cast %19 : vector<1x2048xf32> to vector<1x1x2048xf32>
    tpu.vector_store %arg5[%c0_10, %c0_11, %c0_12], %22 {strides = array<i32>} : memref<1x1x2048xf32, #tpu.memory_space<vmem>>, vector<1x1x2048xf32>,
    %c1_i32 = arith.constant 1 : i32
    %23 = vector.broadcast %c1_i32 : i32 to vector<1x2048xi32>
    %24 = arith.cmpi eq, %8, %23 : vector<1x2048xi32>
    %25 = arith.extui %24 : vector<1x2048xi1> to vector<1x2048xi32>
    %26 = arith.sitofp %25 : vector<1x2048xi32> to vector<1x2048xf32>
    %c2_i32 = arith.constant 2 : i32
    %27 = vector.broadcast %c2_i32 : i32 to vector<1x2048xi32>
    %28 = arith.cmpi eq, %8, %27 : vector<1x2048xi32>
    %29 = arith.extui %28 : vector<1x2048xi1> to vector<1x2048xi32>
    %30 = arith.sitofp %29 : vector<1x2048xi32> to vector<1x2048xf32>
    %c0_13 = arith.constant 0 : index
    %c0_14 = arith.constant 0 : index
    %31 = vector.load %arg8[%c0_13, %c0_14] : memref<1x2048xf32, #tpu.memory_space<vmem>>, vector<1x2048xf32>
    %32 = arith.mulf %19, %26 : vector<1x2048xf32>
    %33 = arith.addf %31, %32 : vector<1x2048xf32>
    %c0_15 = arith.constant 0 : index
    %c0_16 = arith.constant 0 : index
    %34 = vector.load %arg8[%c0_15, %c0_16] : memref<1x2048xf32, #tpu.memory_space<vmem>>, vector<1x2048xf32>
    tpu.vector_store %arg8[%c0_15, %c0_16], %33 {strides = array<i32>} : memref<1x2048xf32, #tpu.memory_space<vmem>>, vector<1x2048xf32>,
    %c0_17 = arith.constant 0 : index
    %c0_18 = arith.constant 0 : index
    %35 = vector.load %arg9[%c0_17, %c0_18] : memref<1x2048xf32, #tpu.memory_space<vmem>>, vector<1x2048xf32>
    %cst_19 = arith.constant 0.000000e+00 : f32
    %36 = vector.broadcast %cst_19 : f32 to vector<1x2048xf32>
    %37 = arith.maximumf %19, %36 : vector<1x2048xf32>
    %38 = arith.mulf %37, %30 : vector<1x2048xf32>
    %39 = arith.addf %35, %38 : vector<1x2048xf32>
    %c0_20 = arith.constant 0 : index
    %c0_21 = arith.constant 0 : index
    %40 = vector.load %arg9[%c0_20, %c0_21] : memref<1x2048xf32, #tpu.memory_space<vmem>>, vector<1x2048xf32>
    tpu.vector_store %arg9[%c0_20, %c0_21], %39 {strides = array<i32>} : memref<1x2048xf32, #tpu.memory_space<vmem>>, vector<1x2048xf32>,
    %c0_i32_22 = arith.constant 0 : i32
    %41 = arith.cmpi eq, %arg1, %c0_i32_22 : i32
    %42 = arith.extui %41 : i1 to i32
    %c0_i32_23 = arith.constant 0 : i32
    %43 = arith.cmpi ne, %42, %c0_i32_23 : i32
    scf.if %43 {
      %c0_24 = arith.constant 0 : index
      %c0_25 = arith.constant 0 : index
      %44 = vector.load %arg8[%c0_24, %c0_25] : memref<1x2048xf32, #tpu.memory_space<vmem>>, vector<1x2048xf32>
      %cst_26 = arith.constant dense<0.000000e+00> : vector<1xf32>
      %45 = vector.multi_reduction <add>, %44, %cst_26 [1] : vector<1x2048xf32> to vector<1xf32>
      %46 = vector.shape_cast %45 : vector<1xf32> to vector<1x1xf32>
      %c0_27 = arith.constant 0 : index
      %c0_28 = arith.constant 0 : index
      %c0_29 = arith.constant 0 : index
      %47 = vector.load %arg6[%c0_27, %c0_28, %c0_29] : memref<1x1x1xf32, #tpu.memory_space<vmem>>, vector<1x1x1xf32>
      %48 = vector.shape_cast %47 : vector<1x1x1xf32> to vector<1x1xf32>
      %49 = vector.shape_cast %46 : vector<1x1xf32> to vector<1x1x1xf32>
      tpu.vector_store %arg6[%c0_27, %c0_28, %c0_29], %49 {strides = array<i32>} : memref<1x1x1xf32, #tpu.memory_space<vmem>>, vector<1x1x1xf32>,
      %c0_30 = arith.constant 0 : index
      %c0_31 = arith.constant 0 : index
      %50 = vector.load %arg9[%c0_30, %c0_31] : memref<1x2048xf32, #tpu.memory_space<vmem>>, vector<1x2048xf32>
      %cst_32 = arith.constant dense<0.000000e+00> : vector<1xf32>
      %51 = vector.multi_reduction <add>, %50, %cst_32 [1] : vector<1x2048xf32> to vector<1xf32>
      %52 = vector.shape_cast %51 : vector<1xf32> to vector<1x1xf32>
      %c0_33 = arith.constant 0 : index
      %c0_34 = arith.constant 0 : index
      %c0_35 = arith.constant 0 : index
      %53 = vector.load %arg7[%c0_33, %c0_34, %c0_35] : memref<1x1x1xf32, #tpu.memory_space<vmem>>, vector<1x1x1xf32>
      %54 = vector.shape_cast %53 : vector<1x1x1xf32> to vector<1x1xf32>
      %55 = vector.shape_cast %52 : vector<1x1xf32> to vector<1x1x1xf32>
      tpu.vector_store %arg7[%c0_33, %c0_34, %c0_35], %55 {strides = array<i32>} : memref<1x1x1xf32, #tpu.memory_space<vmem>>, vector<1x1x1xf32>,
    } else {
    }
    return
  }
  func.func @transform_0(%arg0: i32, %arg1: i32) -> (i32, i32, i32) {
    %c0_i32 = arith.constant 0 : i32
    %c0_i32_0 = arith.constant 0 : i32
    return %arg0, %c0_i32, %arg1 : i32, i32, i32
  }
  func.func @transform_1(%arg0: i32, %arg1: i32) -> (i32, i32, i32) {
    %c0_i32 = arith.constant 0 : i32
    %c0_i32_0 = arith.constant 0 : i32
    return %arg0, %c0_i32, %arg1 : i32, i32, i32
  }
  func.func @transform_2(%arg0: i32, %arg1: i32) -> (i32, i32) {
    %c0_i32 = arith.constant 0 : i32
    %c0_i32_0 = arith.constant 0 : i32
    %c0_i32_1 = arith.constant 0 : i32
    return %c0_i32, %c0_i32_0 : i32, i32
  }
  func.func @transform_3(%arg0: i32, %arg1: i32) -> (i32, i32, i32) {
    %c0_i32 = arith.constant 0 : i32
    %c0_i32_0 = arith.constant 0 : i32
    return %arg0, %c0_i32, %arg1 : i32, i32, i32
  }
  func.func @transform_4(%arg0: i32, %arg1: i32) -> (i32, i32, i32) {
    %c0_i32 = arith.constant 0 : i32
    %c0_i32_0 = arith.constant 0 : i32
    %c0_i32_1 = arith.constant 0 : i32
    return %arg0, %c0_i32, %c0_i32_0 : i32, i32, i32
  }
  func.func @transform_5(%arg0: i32, %arg1: i32) -> (i32, i32, i32) {
    %c0_i32 = arith.constant 0 : i32
    %c0_i32_0 = arith.constant 0 : i32
    %c0_i32_1 = arith.constant 0 : i32
    return %arg0, %c0_i32, %c0_i32_0 : i32, i32, i32
  }
}

</mosaic_0001>

<llo_original>
// kernel: squeeze.10
$region0: #{squeeze.10}
  %s0 = inlined_call_operand.vmem [shape: s32[2,1,8,16,16], index: 0, kind: input, shape index: {}]
  %s1 = inlined_call_operand.vmem [shape: s32[2,1,2048], index: 1, kind: output, shape index: {}]
  $region1: #{squeeze.10} parent=0
    #allocation0 [shape = 'u8[131072]{0}', space=vmem, size = 0x20000, scoped, tag = 'scoped mem for output reshape']
    %v2 = vld [vmem:[%s0] ss:$8 sm:$0xf]
    %v3 = vld [vmem:[%s0] ss:$8 sm:$0xf0]
    %vm4 = vcmask 1047556
    %v5 = vsel %vm4, %v3, %v2
    %vm6 = vcmask 130048
    %7 = vst.msk [vmem:[#allocation0] ss:$8 sm:$0xf] %vm6, %v5
    %8 = vst.msk [vmem:[#allocation0] ss:$8 sm:$0xf0] %vm6, %v5
    %s9 = scalar_lea.vmem %s0, 64
    %v10 = vld [vmem:[%s9] ss:$8 sm:$0xf]
    %s11 = scalar_lea.vmem %s0, 64
    %v12 = vld [vmem:[%s11] ss:$8 sm:$0xf0]
    %vm13 = vcmask 1047556
    %v14 = vsel %vm13, %v12, %v10
    %vm15 = vcmask 130048
    %s16 = scalar_lea.vmem [#allocation0], 64
    %17 = vst.msk [vmem:[%s16] ss:$8 sm:$0xf] %vm15, %v14
    %s18 = scalar_lea.vmem [#allocation0], 64
    %19 = vst.msk [vmem:[%s18] ss:$8 sm:$0xf0] %vm15, %v14
    %s20 = scalar_lea.vmem %s0, 128
    %v21 = vld [vmem:[%s20] ss:$8 sm:$0xf]
    %s22 = scalar_lea.vmem %s0, 128
    %v23 = vld [vmem:[%s22] ss:$8 sm:$0xf0]
    %vm24 = vcmask 1047556
    %v25 = vsel %vm24, %v23, %v21
    %vm26 = vcmask 130048
    %s27 = scalar_lea.vmem [#allocation0], 128
    %28 = vst.msk [vmem:[%s27] ss:$8 sm:$0xf] %vm26, %v25
    %s29 = scalar_lea.vmem [#allocation0], 128
    %30 = vst.msk [vmem:[%s29] ss:$8 sm:$0xf0] %vm26, %v25
    %s31 = scalar_lea.vmem %s0, 192
    %v32 = vld [vmem:[%s31] ss:$8 sm:$0xf]
    %s33 = scalar_lea.vmem %s0, 192
    %v34 = vld [vmem:[%s33] ss:$8 sm:$0xf0]
    %vm35 = vcmask 1047556
    %v36 = vsel %vm35, %v34, %v32
    %vm37 = vcmask 130048
    %s38 = scalar_lea.vmem [#allocation0], 192
    %39 = vst.msk [vmem:[%s38] ss:$8 sm:$0xf] %vm37, %v36
    %s40 = scalar_lea.vmem [#allocation0], 192
    %41 = vst.msk [vmem:[%s40] ss:$8 sm:$0xf0] %vm37, %v36
    %s42 = scalar_lea.vmem %s0, 7
    %v43 = vld [vmem:[%s42] ss:$8 sm:$0xf]
    %s44 = scalar_lea.vmem %s0, 7
    %v45 = vld [vmem:[%s44] ss:$8 sm:$0xf0]
    %vm46 = vcmask 1047556
    %v47 = vsel %vm46, %v45, %v43
    %48 = vrot.lane.b32.xlu0 %v47, 112
    %v49 = vpop.permute.xlu0 %48
    %vm50 = vcmask 1048448
    %51 = vst.msk [vmem:[#allocation0] ss:$8 sm:$0xf] %vm50, %v49
    %52 = vst.msk [vmem:[#allocation0] ss:$8 sm:$0xf0] %vm50, %v49
    %s53 = scalar_lea.vmem %s0, 71
    %v54 = vld [vmem:[%s53] ss:$8 sm:$0xf]
    %s55 = scalar_lea.vmem %s0, 71
    %v56 = vld [vmem:[%s55] ss:$8 sm:$0xf0]
    %vm57 = vcmask 1047556
    %v58 = vsel %vm57, %v56, %v54
    %59 = vrot.lane.b32.xlu0 %v58, 112
    %v60 = vpop.permute.xlu0 %59
    %vm61 = vcmask 1048448
    %s62 = scalar_lea.vmem [#allocation0], 64
    %63 = vst.msk [vmem:[%s62] ss:$8 sm:$0xf] %vm61, %v60
    %s64 = scalar_lea.vmem [#allocation0], 64
    %65 = vst.msk [vmem:[%s64] ss:$8 sm:$0xf0] %vm61, %v60
    %s66 = scalar_lea.vmem %s0, 135
    %v67 = vld [vmem:[%s66] ss:$8 sm:$0xf]
    %s68 = scalar_lea.vmem %s0, 135
    %v69 = vld [vmem:[%s68] ss:$8 sm:$0xf0]
    %vm70 = vcmask 1047556
    %v71 = vsel %vm70, %v69, %v67
    %72 = vrot.lane.b32.xlu0 %v71, 112
    %v73 = vpop.permute.xlu0 %72
    %vm74 = vcmask 1048448
    %s75 = scalar_lea.vmem [#allocation0], 128
    %76 = vst.msk [vmem:[%s75] ss:$8 sm:$0xf] %vm74, %v73
    %s77 = scalar_lea.vmem [#allocation0], 128
    %78 = vst.msk [vmem:[%s77] ss:$8 sm:$0xf0] %vm74, %v73
    %s79 = scalar_lea.vmem %s0, 199
    %v80 = vld [vmem:[%s79] ss:$8 sm:$0xf]
    %s81 = scalar_lea.vmem %s0, 199
    %v82 = vld [vmem:[%s81] ss:$8 sm:$0xf0]
    %vm83 = vcmask 1047556
    %v84 = vsel %vm83, %v82, %v80
    %85 = vrot.lane.b32.xlu0 %v84, 112
    %v86 = vpop.permute.xlu0 %85
    %vm87 = vcmask 1048448
    %s88 = scalar_lea.vmem [#allocation0], 192
    %89 = vst.msk [vmem:[%s88] ss:$8 sm:$0xf] %vm87, %v86
    %s90 = scalar_lea.vmem [#allocation0], 192
    %91 = vst.msk [vmem:[%s90] ss:$8 sm:$0xf0] %vm87, %v86
    %s92 = scalar_lea.vmem %s0, 6
    %v93 = vld [vmem:[%s92] ss:$8 sm:$0xf]
    %s94 = scalar_lea.vmem %s0, 6
    %v95 = vld [vmem:[%s94] ss:$8 sm:$0xf0]
    %vm96 = vcmask 1047556
    %v97 = vsel %vm96, %v95, %v93
    %98 = vrot.lane.b32.xlu0 %v97, 96
    %v99 = vpop.permute.xlu0 %98
    %vm100 = vcmask 917248
    %101 = vst.msk [vmem:[#allocation0] ss:$8 sm:$0xf] %vm100, %v99
    %102 = vst.msk [vmem:[#allocation0] ss:$8 sm:$0xf0] %vm100, %v99
    %s103 = scalar_lea.vmem %s0, 70
    %v104 = vld [vmem:[%s103] ss:$8 sm:$0xf]
    %s105 = scalar_lea.vmem %s0, 70
    %v106 = vld [vmem:[%s105] ss:$8 sm:$0xf0]
    %vm107 = vcmask 1047556
    %v108 = vsel %vm107, %v106, %v104
    %109 = vrot.lane.b32.xlu0 %v108, 96
    %v110 = vpop.permute.xlu0 %109
    %vm111 = vcmask 917248
    %s112 = scalar_lea.vmem [#allocation0], 64
    %113 = vst.msk [vmem:[%s112] ss:$8 sm:$0xf] %vm111, %v110
    %s114 = scalar_lea.vmem [#allocation0], 64
    %115 = vst.msk [vmem:[%s114] ss:$8 sm:$0xf0] %vm111, %v110
    %s116 = scalar_lea.vmem %s0, 134
    %v117 = vld [vmem:[%s116] ss:$8 sm:$0xf]
    %s118 = scalar_lea.vmem %s0, 134
    %v119 = vld [vmem:[%s118] ss:$8 sm:$0xf0]
    %vm120 = vcmask 1047556
    %v121 = vsel %vm120, %v119, %v117
    %122 = vrot.lane.b32.xlu0 %v121, 96
    %v123 = vpop.permute.xlu0 %122
    %vm124 = vcmask 917248
    %s125 = scalar_lea.vmem [#allocation0], 128
    %126 = vst.msk [vmem:[%s125] ss:$8 sm:$0xf] %vm124, %v123
    %s127 = scalar_lea.vmem [#allocation0], 128
    %128 = vst.msk [vmem:[%s127] ss:$8 sm:$0xf0] %vm124, %v123
    %s129 = scalar_lea.vmem %s0, 198
    %v130 = vld [vmem:[%s129] ss:$8 sm:$0xf]
    %s131 = scalar_lea.vmem %s0, 198
    %v132 = vld [vmem:[%s131] ss:$8 sm:$0xf0]
    %vm133 = vcmask 1047556
    %v134 = vsel %vm133, %v132, %v130
    %135 = vrot.lane.b32.xlu0 %v134, 96
    %v136 = vpop.permute.xlu0 %135
    %vm137 = vcmask 917248
    %s138 = scalar_lea.vmem [#allocation0], 192
    %139 = vst.msk [vmem:[%s138] ss:$8 sm:$0xf] %vm137, %v136
    %s140 = scalar_lea.vmem [#allocation0], 192
    %141 = vst.msk [vmem:[%s140] ss:$8 sm:$0xf0] %vm137, %v136
    %s142 = scalar_lea.vmem %s0, 5
    %v143 = vld [vmem:[%s142] ss:$8 sm:$0xf]
    %s144 = scalar_lea.vmem %s0, 5
    %v145 = vld [vmem:[%s144] ss:$8 sm:$0xf0]
    %vm146 = vcmask 1047556
    %v147 = vsel %vm146, %v145, %v143
    %148 = vrot.lane.b32.xlu0 %v147, 80
    %v149 = vpop.permute.xlu0 %148
    %vm150 = vcmask 786048
    %151 = vst.msk [vmem:[#allocation0] ss:$8 sm:$0xf] %vm150, %v149
    %152 = vst.msk [vmem:[#allocation0] ss:$8 sm:$0xf0] %vm150, %v149
    %s153 = scalar_lea.vmem %s0, 69
    %v154 = vld [vmem:[%s153] ss:$8 sm:$0xf]
    %s155 = scalar_lea.vmem %s0, 69
    %v156 = vld [vmem:[%s155] ss:$8 sm:$0xf0]
    %vm157 = vcmask 1047556
    %v158 = vsel %vm157, %v156, %v154
    %159 = vrot.lane.b32.xlu0 %v158, 80
    %v160 = vpop.permute.xlu0 %159
    %vm161 = vcmask 786048
    %s162 = scalar_lea.vmem [#allocation0], 64
    %163 = vst.msk [vmem:[%s162] ss:$8 sm:$0xf] %vm161, %v160
    %s164 = scalar_lea.vmem [#allocation0], 64
    %165 = vst.msk [vmem:[%s164] ss:$8 sm:$0xf0] %vm161, %v160
    %s166 = scalar_lea.vmem %s0, 133
    %v167 = vld [vmem:[%s166] ss:$8 sm:$0xf]
    %s168 = scalar_lea.vmem %s0, 133
    %v169 = vld [vmem:[%s168] ss:$8 sm:$0xf0]
    %vm170 = vcmask 1047556
    %v171 = vsel %vm170, %v169, %v167
    %172 = vrot.lane.b32.xlu0 %v171, 80
    %v173 = vpop.permute.xlu0 %172
    %vm174 = vcmask 786048
    %s175 = scalar_lea.vmem [#allocation0], 128
    %176 = vst.msk [vmem:[%s175] ss:$8 sm:$0xf] %vm174, %v173
    %s177 = scalar_lea.vmem [#allocation0], 128
    %178 = vst.msk [vmem:[%s177] ss:$8 sm:$0xf0] %vm174, %v173
    %s179 = scalar_lea.vmem %s0, 197
    %v180 = vld [vmem:[%s179] ss:$8 sm:$0xf]
    %s181 = scalar_lea.vmem %s0, 197
    %v182 = vld [vmem:[%s181] ss:$8 sm:$0xf0]
    %vm183 = vcmask 1047556
    %v184 = vsel %vm183, %v182, %v180
    %185 = vrot.lane.b32.xlu0 %v184, 80
    %v186 = vpop.permute.xlu0 %185
    %vm187 = vcmask 786048
    %s188 = scalar_lea.vmem [#allocation0], 192
    %189 = vst.msk [vmem:[%s188] ss:$8 sm:$0xf] %vm187, %v186
    %s190 = scalar_lea.vmem [#allocation0], 192
    %191 = vst.msk [vmem:[%s190] ss:$8 sm:$0xf0] %vm187, %v186
    %s192 = scalar_lea.vmem %s0, 4
    %v193 = vld [vmem:[%s192] ss:$8 sm:$0xf]
    %s194 = scalar_lea.vmem %s0, 4
    %v195 = vld [vmem:[%s194] ss:$8 sm:$0xf0]
    %vm196 = vcmask 1047556
    %v197 = vsel %vm196, %v195, %v193
    %198 = vrot.lane.b32.xlu0 %v197, 64
    %v199 = vpop.permute.xlu0 %198
    %vm200 = vcmask 654848
    %201 = vst.msk [vmem:[#allocation0] ss:$8 sm:$0xf] %vm200, %v199
    %202 = vst.msk [vmem:[#allocation0] ss:$8 sm:$0xf0] %vm200, %v199
    %s203 = scalar_lea.vmem %s0, 68
    %v204 = vld [vmem:[%s203] ss:$8 sm:$0xf]
    %s205 = scalar_lea.vmem %s0, 68
    %v206 = vld [vmem:[%s205] ss:$8 sm:$0xf0]
    %vm207 = vcmask 1047556
    %v208 = vsel %vm207, %v206, %v204
    %209 = vrot.lane.b32.xlu0 %v208, 64
    %v210 = vpop.permute.xlu0 %209
    %vm211 = vcmask 654848
    %s212 = scalar_lea.vmem [#allocation0], 64
    %213 = vst.msk [vmem:[%s212] ss:$8 sm:$0xf] %vm211, %v210
    %s214 = scalar_lea.vmem [#allocation0], 64
    %215 = vst.msk [vmem:[%s214] ss:$8 sm:$0xf0] %vm211, %v210
    %s216 = scalar_lea.vmem %s0, 132
    %v217 = vld [vmem:[%s216] ss:$8 sm:$0xf]
    %s218 = scalar_lea.vmem %s0, 132
    %v219 = vld [vmem:[%s218] ss:$8 sm:$0xf0]
    %vm220 = vcmask 1047556
    %v221 = vsel %vm220, %v219, %v217
    %222 = vrot.lane.b32.xlu0 %v221, 64
    %v223 = vpop.permute.xlu0 %222
    %vm224 = vcmask 654848
    %s225 = scalar_lea.vmem [#allocation0], 128
    %226 = vst.msk [vmem:[%s225] ss:$8 sm:$0xf] %vm224, %v223
    %s227 = scalar_lea.vmem [#allocation0], 128
    %228 = vst.msk [vmem:[%s227] ss:$8 sm:$0xf0] %vm224, %v223
    %s229 = scalar_lea.vmem %s0, 196
    %v230 = vld [vmem:[%s229] ss:$8 sm:$0xf]
    %s231 = scalar_lea.vmem %s0, 196
    %v232 = vld [vmem:[%s231] ss:$8 sm:$0xf0]
    %vm233 = vcmask 1047556
    %v234 = vsel %vm233, %v232, %v230
    %235 = vrot.lane.b32.xlu0 %v234, 64
    %v236 = vpop.permute.xlu0 %235
    %vm237 = vcmask 654848
    %s238 = scalar_lea.vmem [#allocation0], 192
    %239 = vst.msk [vmem:[%s238] ss:$8 sm:$0xf] %vm237, %v236
    %s240 = scalar_lea.vmem [#allocation0], 192
    %241 = vst.msk [vmem:[%s240] ss:$8 sm:$0xf0] %vm237, %v236
    %s242 = scalar_lea.vmem %s0, 3
    %v243 = vld [vmem:[%s242] ss:$8 sm:$0xf]
    %s244 = scalar_lea.vmem %s0, 3
    %v245 = vld [vmem:[%s244] ss:$8 sm:$0xf0]
    %vm246 = vcmask 1047556
    %v247 = vsel %vm246, %v245, %v243
    %248 = vrot.lane.b32.xlu0 %v247, 48
    %v249 = vpop.permute.xlu0 %248
    %vm250 = vcmask 523648
    %251 = vst.msk [vmem:[#allocation0] ss:$8 sm:$0xf] %vm250, %v249
    %252 = vst.msk [vmem:[#allocation0] ss:$8 sm:$0xf0] %vm250, %v249
    %s253 = scalar_lea.vmem %s0, 67
    %v254 = vld [vmem:[%s253] ss:$8 sm:$0xf]
    %s255 = scalar_lea.vmem %s0, 67
    %v256 = vld [vmem:[%s255] ss:$8 sm:$0xf0]
    %vm257 = vcmask 1047556
    %v258 = vsel %vm257, %v256, %v254
    %259 = vrot.lane.b32.xlu0 %v258, 48
    %v260 = vpop.permute.xlu0 %259
    %vm261 = vcmask 523648
    %s262 = scalar_lea.vmem [#allocation0], 64
    %263 = vst.msk [vmem:[%s262] ss:$8 sm:$0xf] %vm261, %v260
    %s264 = scalar_lea.vmem [#allocation0], 64
    %265 = vst.msk [vmem:[%s264] ss:$8 sm:$0xf0] %vm261, %v260
    %s266 = scalar_lea.vmem %s0, 131
    %v267 = vld [vmem:[%s266] ss:$8 sm:$0xf]
    %s268 = scalar_lea.vmem %s0, 131
    %v269 = vld [vmem:[%s268] ss:$8 sm:$0xf0]
    %vm270 = vcmask 1047556
    %v271 = vsel %vm270, %v269, %v267
    %272 = vrot.lane.b32.xlu0 %v271, 48
    %v273 = vpop.permute.xlu0 %272
    %vm274 = vcmask 523648
    %s275 = scalar_lea.vmem [#allocation0], 128
    %276 = vst.msk [vmem:[%s275] ss:$8 sm:$0xf] %vm274, %v273
    %s277 = scalar_lea.vmem [#allocation0], 128
    %278 = vst.msk [vmem:[%s277] ss:$8 sm:$0xf0] %vm274, %v273
    %s279 = scalar_lea.vmem %s0, 195
    %v280 = vld [vmem:[%s279] ss:$8 sm:$0xf]
    %s281 = scalar_lea.vmem %s0, 195
    %v282 = vld [vmem:[%s281] ss:$8 sm:$0xf0]
    %vm283 = vcmask 1047556
    %v284 = vsel %vm283, %v282, %v280
    %285 = vrot.lane.b32.xlu0 %v284, 48
    %v286 = vpop.permute.xlu0 %285
    %vm287 = vcmask 523648
    %s288 = scalar_lea.vmem [#allocation0], 192
    %289 = vst.msk [vmem:[%s288] ss:$8 sm:$0xf] %vm287, %v286
    %s290 = scalar_lea.vmem [#allocation0], 192
    %291 = vst.msk [vmem:[%s290] ss:$8 sm:$0xf0] %vm287, %v286
    %s292 = scalar_lea.vmem %s0, 2
    %v293 = vld [vmem:[%s292] ss:$8 sm:$0xf]
    %s294 = scalar_lea.vmem %s0, 2
    %v295 = vld [vmem:[%s294] ss:$8 sm:$0xf0]
    %vm296 = vcmask 1047556
    %v297 = vsel %vm296, %v295, %v293
    %298 = vrot.lane.b32.xlu0 %v297, 32
    %v299 = vpop.permute.xlu0 %298
    %vm300 = vcmask 392448
    %301 = vst.msk [vmem:[#allocation0] ss:$8 sm:$0xf] %vm300, %v299
    %302 = vst.msk [vmem:[#allocation0] ss:$8 sm:$0xf0] %vm300, %v299
    %s303 = scalar_lea.vmem %s0, 66
    %v304 = vld [vmem:[%s303] ss:$8 sm:$0xf]
    %s305 = scalar_lea.vmem %s0, 66
    %v306 = vld [vmem:[%s305] ss:$8 sm:$0xf0]
    %vm307 = vcmask 1047556
    %v308 = vsel %vm307, %v306, %v304
    %309 = vrot.lane.b32.xlu0 %v308, 32
    %v310 = vpop.permute.xlu0 %309
    %vm311 = vcmask 392448
    %s312 = scalar_lea.vmem [#allocation0], 64
    %313 = vst.msk [vmem:[%s312] ss:$8 sm:$0xf] %vm311, %v310
    %s314 = scalar_lea.vmem [#allocation0], 64
    %315 = vst.msk [vmem:[%s314] ss:$8 sm:$0xf0] %vm311, %v310
    %s316 = scalar_lea.vmem %s0, 130
    %v317 = vld [vmem:[%s316] ss:$8 sm:$0xf]
    %s318 = scalar_lea.vmem %s0, 130
    %v319 = vld [vmem:[%s318] ss:$8 sm:$0xf0]
    %vm320 = vcmask 1047556
    %v321 = vsel %vm320, %v319, %v317
    %322 = vrot.lane.b32.xlu0 %v321, 32
    %v323 = vpop.permute.xlu0 %322
    %vm324 = vcmask 392448
    %s325 = scalar_lea.vmem [#allocation0], 128
    %326 = vst.msk [vmem:[%s325] ss:$8 sm:$0xf] %vm324, %v323
    %s327 = scalar_lea.vmem [#allocation0], 128
    %328 = vst.msk [vmem:[%s327] ss:$8 sm:$0xf0] %vm324, %v323
    %s329 = scalar_lea.vmem %s0, 194
    %v330 = vld [vmem:[%s329] ss:$8 sm:$0xf]
    %s331 = scalar_lea.vmem %s0, 194
    %v332 = vld [vmem:[%s331] ss:$8 sm:$0xf0]
    %vm333 = vcmask 1047556
    %v334 = vsel %vm333, %v332, %v330
    %335 = vrot.lane.b32.xlu0 %v334, 32
    %v336 = vpop.permute.xlu0 %335
    %vm337 = vcmask 392448
    %s338 = scalar_lea.vmem [#allocation0], 192
    %339 = vst.msk [vmem:[%s338] ss:$8 sm:$0xf] %vm337, %v336
    %s340 = scalar_lea.vmem [#allocation0], 192
    %341 = vst.msk [vmem:[%s340] ss:$8 sm:$0xf0] %vm337, %v336
    %s342 = scalar_lea.vmem %s0, 1
    %v343 = vld [vmem:[%s342] ss:$8 sm:$0xf]
    %s344 = scalar_lea.vmem %s0, 1
    %v345 = vld [vmem:[%s344] ss:$8 sm:$0xf0]
    %vm346 = vcmask 1047556
    %v347 = vsel %vm346, %v345, %v343
    %348 = vrot.lane.b32.xlu0 %v347, 16
    %v349 = vpop.permute.xlu0 %348
    %vm350 = vcmask 261248
    %351 = vst.msk [vmem:[#allocation0] ss:$8 sm:$0xf] %vm350, %v349
    %352 = vst.msk [vmem:[#allocation0] ss:$8 sm:$0xf0] %vm350, %v349
    %s353 = scalar_lea.vmem %s0, 65
    %v354 = vld [vmem:[%s353] ss:$8 sm:$0xf]
    %s355 = scalar_lea.vmem %s0, 65
    %v356 = vld [vmem:[%s355] ss:$8 sm:$0xf0]
    %vm357 = vcmask 1047556
    %v358 = vsel %vm357, %v356, %v354
    %359 = vrot.lane.b32.xlu0 %v358, 16
    %v360 = vpop.permute.xlu0 %359
    %vm361 = vcmask 261248
    %s362 = scalar_lea.vmem [#allocation0], 64
    %363 = vst.msk [vmem:[%s362] ss:$8 sm:$0xf] %vm361, %v360
    %s364 = scalar_lea.vmem [#allocation0], 64
    %365 = vst.msk [vmem:[%s364] ss:$8 sm:$0xf0] %vm361, %v360
    %s366 = scalar_lea.vmem %s0, 129
    %v367 = vld [vmem:[%s366] ss:$8 sm:$0xf]
    %s368 = scalar_lea.vmem %s0, 129
    %v369 = vld [vmem:[%s368] ss:$8 sm:$0xf0]
    %vm370 = vcmask 1047556
    %v371 = vsel %vm370, %v369, %v367
    %372 = vrot.lane.b32.xlu0 %v371, 16
    %v373 = vpop.permute.xlu0 %372
    %vm374 = vcmask 261248
    %s375 = scalar_lea.vmem [#allocation0], 128
    %376 = vst.msk [vmem:[%s375] ss:$8 sm:$0xf] %vm374, %v373
    %s377 = scalar_lea.vmem [#allocation0], 128
    %378 = vst.msk [vmem:[%s377] ss:$8 sm:$0xf0] %vm374, %v373
    %s379 = scalar_lea.vmem %s0, 193
    %v380 = vld [vmem:[%s379] ss:$8 sm:$0xf]
    %s381 = scalar_lea.vmem %s0, 193
    %v382 = vld [vmem:[%s381] ss:$8 sm:$0xf0]
    %vm383 = vcmask 1047556
    %v384 = vsel %vm383, %v382, %v380
    %385 = vrot.lane.b32.xlu0 %v384, 16
    %v386 = vpop.permute.xlu0 %385
    %vm387 = vcmask 261248
    %s388 = scalar_lea.vmem [#allocation0], 192
    %389 = vst.msk [vmem:[%s388] ss:$8 sm:$0xf] %vm387, %v386
    %s390 = scalar_lea.vmem [#allocation0], 192
    %391 = vst.msk [vmem:[%s390] ss:$8 sm:$0xf0] %vm387, %v386
    %s393 = sshllo.u32 0, 1
    %v395 = vld [vmem:[#allocation0] sm:%s393]
    %s396 = sshllo.u32 0, 1
    %397 = vst [vmem:[%s1] sm:%s396] %v395
    %s398 = scalar_lea.vmem [#allocation0], 8
    %v399 = vld [vmem:[%s398] sm:%s393]
    %s400 = sshllo.u32 0, 1
    %s401 = scalar_lea.vmem %s1, 1
    %402 = vst [vmem:[%s401] sm:%s400] %v399
    %s403 = scalar_lea.vmem [#allocation0], 16
    %v404 = vld [vmem:[%s403] sm:%s393]
    %s405 = sshllo.u32 0, 1
    %s406 = smul.addr 1, 2
    %s407 = scalar_lea.vmem %s1, %s406
    %408 = vst [vmem:[%s407] sm:%s405] %v404
    %s409 = scalar_lea.vmem [#allocation0], 24
    %v410 = vld [vmem:[%s409] sm:%s393]
    %s411 = sshllo.u32 0, 1
    %s412 = smul.addr 1, 3
    %s413 = scalar_lea.vmem %s1, %s412
    %414 = vst [vmem:[%s413] sm:%s411] %v410
    %s415 = scalar_lea.vmem [#allocation0], 32
    %v416 = vld [vmem:[%s415] sm:%s393]
    %s417 = sshllo.u32 0, 1
    %s418 = smul.addr 1, 4
    %s419 = scalar_lea.vmem %s1, %s418
    %420 = vst [vmem:[%s419] sm:%s417] %v416
    %s421 = scalar_lea.vmem [#allocation0], 40
    %v422 = vld [vmem:[%s421] sm:%s393]
    %s423 = sshllo.u32 0, 1
    %s424 = smul.addr 1, 5
    %s425 = scalar_lea.vmem %s1, %s424
    %426 = vst [vmem:[%s425] sm:%s423] %v422
    %s427 = scalar_lea.vmem [#allocation0], 48
    %v428 = vld [vmem:[%s427] sm:%s393]
    %s429 = sshllo.u32 0, 1
    %s430 = smul.addr 1, 6
    %s431 = scalar_lea.vmem %s1, %s430
    %432 = vst [vmem:[%s431] sm:%s429] %v428
    %s433 = scalar_lea.vmem [#allocation0], 56
    %v434 = vld [vmem:[%s433] sm:%s393]
    %s435 = sshllo.u32 0, 1
    %s436 = smul.addr 1, 7
    %s437 = scalar_lea.vmem %s1, %s436
    %438 = vst [vmem:[%s437] sm:%s435] %v434
    %s439 = scalar_lea.vmem [#allocation0], 64
    %v440 = vld [vmem:[%s439] sm:%s393]
    %s441 = sshllo.u32 0, 1
    %s442 = smul.addr 1, 8
    %s443 = scalar_lea.vmem %s1, %s442
    %444 = vst [vmem:[%s443] sm:%s441] %v440
    %s445 = scalar_lea.vmem [#allocation0], 72
    %v446 = vld [vmem:[%s445] sm:%s393]
    %s447 = sshllo.u32 0, 1
    %s448 = smul.addr 1, 9
    %s449 = scalar_lea.vmem %s1, %s448
    %450 = vst [vmem:[%s449] sm:%s447] %v446
    %s451 = scalar_lea.vmem [#allocation0], 80
    %v452 = vld [vmem:[%s451] sm:%s393]
    %s453 = sshllo.u32 0, 1
    %s454 = smul.addr 1, 10
    %s455 = scalar_lea.vmem %s1, %s454
    %456 = vst [vmem:[%s455] sm:%s453] %v452
    %s457 = scalar_lea.vmem [#allocation0], 88
    %v458 = vld [vmem:[%s457] sm:%s393]
    %s459 = sshllo.u32 0, 1
    %s460 = smul.addr 1, 11
    %s461 = scalar_lea.vmem %s1, %s460
    %462 = vst [vmem:[%s461] sm:%s459] %v458
    %s463 = scalar_lea.vmem [#allocation0], 96
    %v464 = vld [vmem:[%s463] sm:%s393]
    %s465 = sshllo.u32 0, 1
    %s466 = smul.addr 1, 12
    %s467 = scalar_lea.vmem %s1, %s466
    %468 = vst [vmem:[%s467] sm:%s465] %v464
    %s469 = scalar_lea.vmem [#allocation0], 104
    %v470 = vld [vmem:[%s469] sm:%s393]
    %s471 = sshllo.u32 0, 1
    %s472 = smul.addr 1, 13
    %s473 = scalar_lea.vmem %s1, %s472
    %474 = vst [vmem:[%s473] sm:%s471] %v470
    %s475 = scalar_lea.vmem [#allocation0], 112
    %v476 = vld [vmem:[%s475] sm:%s393]
    %s477 = sshllo.u32 0, 1
    %s478 = smul.addr 1, 14
    %s479 = scalar_lea.vmem %s1, %s478
    %480 = vst [vmem:[%s479] sm:%s477] %v476
    %s481 = scalar_lea.vmem [#allocation0], 120
    %v482 = vld [vmem:[%s481] sm:%s393]
    %s483 = sshllo.u32 0, 1
    %s484 = smul.addr 1, 15
    %s485 = scalar_lea.vmem %s1, %s484
    %486 = vst [vmem:[%s485] sm:%s483] %v482
    %s487 = scalar_lea.vmem [#allocation0], 128
    %v488 = vld [vmem:[%s487] sm:%s393]
    %s489 = sshllo.u32 0, 1
    %s490 = smul.addr 1, 16
    %s491 = scalar_lea.vmem %s1, %s490
    %492 = vst [vmem:[%s491] sm:%s489] %v488
    %s493 = scalar_lea.vmem [#allocation0], 136
    %v494 = vld [vmem:[%s493] sm:%s393]
    %s495 = sshllo.u32 0, 1
    %s496 = smul.addr 1, 17
    %s497 = scalar_lea.vmem %s1, %s496
    %498 = vst [vmem:[%s497] sm:%s495] %v494
    %s499 = scalar_lea.vmem [#allocation0], 144
    %v500 = vld [vmem:[%s499] sm:%s393]
    %s501 = sshllo.u32 0, 1
    %s502 = smul.addr 1, 18
    %s503 = scalar_lea.vmem %s1, %s502
    %504 = vst [vmem:[%s503] sm:%s501] %v500
    %s505 = scalar_lea.vmem [#allocation0], 152
    %v506 = vld [vmem:[%s505] sm:%s393]
    %s507 = sshllo.u32 0, 1
    %s508 = smul.addr 1, 19
    %s509 = scalar_lea.vmem %s1, %s508
    %510 = vst [vmem:[%s509] sm:%s507] %v506
    %s511 = scalar_lea.vmem [#allocation0], 160
    %v512 = vld [vmem:[%s511] sm:%s393]
    %s513 = sshllo.u32 0, 1
    %s514 = smul.addr 1, 20
    %s515 = scalar_lea.vmem %s1, %s514
    %516 = vst [vmem:[%s515] sm:%s513] %v512
    %s517 = scalar_lea.vmem [#allocation0], 168
    %v518 = vld [vmem:[%s517] sm:%s393]
    %s519 = sshllo.u32 0, 1
    %s520 = smul.addr 1, 21
    %s521 = scalar_lea.vmem %s1, %s520
    %522 = vst [vmem:[%s521] sm:%s519] %v518
    %s523 = scalar_lea.vmem [#allocation0], 176
    %v524 = vld [vmem:[%s523] sm:%s393]
    %s525 = sshllo.u32 0, 1
    %s526 = smul.addr 1, 22
    %s527 = scalar_lea.vmem %s1, %s526
    %528 = vst [vmem:[%s527] sm:%s525] %v524
    %s529 = scalar_lea.vmem [#allocation0], 184
    %v530 = vld [vmem:[%s529] sm:%s393]
    %s531 = sshllo.u32 0, 1
    %s532 = smul.addr 1, 23
    %s533 = scalar_lea.vmem %s1, %s532
    %534 = vst [vmem:[%s533] sm:%s531] %v530
    %s535 = scalar_lea.vmem [#allocation0], 192
    %v536 = vld [vmem:[%s535] sm:%s393]
    %s537 = sshllo.u32 0, 1
    %s538 = smul.addr 1, 24
    %s539 = scalar_lea.vmem %s1, %s538
    %540 = vst [vmem:[%s539] sm:%s537] %v536
    %s541 = scalar_lea.vmem [#allocation0], 200
    %v542 = vld [vmem:[%s541] sm:%s393]
    %s543 = sshllo.u32 0, 1
    %s544 = smul.addr 1, 25
    %s545 = scalar_lea.vmem %s1, %s544
    %546 = vst [vmem:[%s545] sm:%s543] %v542
    %s547 = scalar_lea.vmem [#allocation0], 208
    %v548 = vld [vmem:[%s547] sm:%s393]
    %s549 = sshllo.u32 0, 1
    %s550 = smul.addr 1, 26
    %s551 = scalar_lea.vmem %s1, %s550
    %552 = vst [vmem:[%s551] sm:%s549] %v548
    %s553 = scalar_lea.vmem [#allocation0], 216
    %v554 = vld [vmem:[%s553] sm:%s393]
    %s555 = sshllo.u32 0, 1
    %s556 = smul.addr 1, 27
    %s557 = scalar_lea.vmem %s1, %s556
    %558 = vst [vmem:[%s557] sm:%s555] %v554
    %s559 = scalar_lea.vmem [#allocation0], 224
    %v560 = vld [vmem:[%s559] sm:%s393]
    %s561 = sshllo.u32 0, 1
    %s562 = smul.addr 1, 28
    %s563 = scalar_lea.vmem %s1, %s562
    %564 = vst [vmem:[%s563] sm:%s561] %v560
    %s565 = scalar_lea.vmem [#allocation0], 232
    %v566 = vld [vmem:[%s565] sm:%s393]
    %s567 = sshllo.u32 0, 1
    %s568 = smul.addr 1, 29
    %s569 = scalar_lea.vmem %s1, %s568
    %570 = vst [vmem:[%s569] sm:%s567] %v566
    %s571 = scalar_lea.vmem [#allocation0], 240
    %v572 = vld [vmem:[%s571] sm:%s393]
    %s573 = sshllo.u32 0, 1
    %s574 = smul.addr 1, 30
    %s575 = scalar_lea.vmem %s1, %s574
    %576 = vst [vmem:[%s575] sm:%s573] %v572
    %s577 = scalar_lea.vmem [#allocation0], 248
    %v578 = vld [vmem:[%s577] sm:%s393]
    %s579 = sshllo.u32 0, 1
    %s580 = smul.addr 1, 31
    %s581 = scalar_lea.vmem %s1, %s580
    %582 = vst [vmem:[%s581] sm:%s579] %v578

// kernel: dc_and_ce_loss.2
$region0: #{dc_and_ce_loss.2}
  #allocation0 [shape = 'u32[]', space=smem, size = 0x4, offset = 0x4, fixed_abs, tag = 'smem constant byte address 0x4 - core index']
  #allocation1 [shape = 'u32[144,128]{1,0:T(1,128)}', space=vmem, size = 0x12000, scoped, tag = 'internal scratch']
  #allocation2 [shape = 'f32[4,2048]{1,0:T(4,128)}', space=vmem, size = 0x8000, scoped, tag = 'scratch operand']
  #allocation3 [shape = 'f32[4,2048]{1,0:T(4,128)}', space=vmem, size = 0x8000, scoped, tag = 'scratch operand']
  #allocation4 [shape = 'f32[4,2048]{1,0:T(4,128)}', space=vmem, size = 0x8000, scoped, tag = 'scratch operand']
  #allocation5 [shape = 'f32[1,2048]{1,0:T(1,128)}', space=vmem, size = 0x2000, scoped, tag = 'scratch operand']
  #allocation6 [shape = 'f32[8,2048]{1,0:T(8,128)}', space=vmem, size = 0x10000, scoped, tag = 'scratch operand']
  %s0 = inlined_call_operand.vmem [shape: f32[2,4,2048], index: 0, kind: input, shape index: {}]
  %s1 = inlined_call_operand.vmem [shape: f32[2,8,2048], index: 1, kind: input, shape index: {}]
  %s2 = inlined_call_operand.vmem [shape: s32[2,1,2048], index: 2, kind: input, shape index: {}]
  %s3 = inlined_call_operand.vmem [shape: f32[2,4,1], index: 3, kind: output, shape index: {0}]
  %s4 = inlined_call_operand.vmem [shape: f32[2,4,1], index: 4, kind: output, shape index: {1}]
  %s5 = inlined_call_operand.vmem [shape: f32[2,4,1], index: 5, kind: output, shape index: {2}]
  %s6 = inlined_call_operand.vmem [shape: f32[2,1,1], index: 6, kind: output, shape index: {3}]
  %s7 = inlined_call_operand.vmem [shape: f32[2,8,1], index: 7, kind: output, shape index: {4}]
  %8 = xla_tuple %s3, %s4, %s5, %s6, %s7
  %s9 = sld [smem:[#allocation0]]
  $region85: #{dc_and_ce_loss.2} parent=0
    _
  %s11 = ssub.s32 1, %s9
  %s12 = scalar_select 0, %s11, %s9
  loop: start=0, step=1, limit=4
  $region2: #{dc_and_ce_loss.2} parent=0 // loop_pre_header
    _
  $region3: #{dc_and_ce_loss.2} parent=0 // loop_header
    %s14 = sphi 0, %s18
    %p15 = scmp.ge.s32.totalorder %s14, 4
    %s21 = sphi 0, %s33
    %s22 = sphi 0, %s29
    %s23 = sphi 0, %s21
    %s24 = sphi 0, %s22
    %s25 = sphi 0, %s23
    %s26 = sphi 0, %s24
    %s38 = sphi 0, %s40
    %s41 = sphi 0, %s38
    %s42 = sphi 0, %s41
    %s58 = sphi 0, %s42
    %s66 = sphi 0, %s68
    %s69 = sphi 0, %s66
    %s70 = sphi 0, %s69
    %s86 = sphi 0, %s70
    %s94 = sphi 0, %s96
    %s97 = sphi 0, %s94
    %s98 = sphi 0, %s97
    %s114 = sphi 0, %s98
    %s120 = sphi 0, %s122
    %s123 = sphi 0, %s120
    %s124 = sphi 0, %s123
    %s140 = sphi 0, %s124
    %s146 = sphi 0, %s148
    %s149 = sphi 0, %s146
    %s150 = sphi 0, %s149
    %s166 = sphi 0, %s150
    %s172 = sphi 0, %s174
    %s175 = sphi 0, %s172
    %s176 = sphi 0, %s175
    %s192 = sphi 0, %s176
    %s198 = sphi 0, %s200
    %s201 = sphi 0, %s198
    %s202 = sphi 0, %s201
    %s218 = sphi 0, %s202
    %s224 = sphi 0, %s226
    %s227 = sphi 0, %s224
    %s228 = sphi 0, %s227
    %s244 = sphi 0, %s228
  $region4: #{dc_and_ce_loss.2} parent=0 // loop_header_branch
    %17 = sbr.rel (%p15) target = $region8
  $region5: #{dc_and_ce_loss.2} parent=0 // loop_body
    %s19 = ssub.s32 %s14, 1
    %s20 = ssub.s32 %s14, 2
    %s27 = sadd.s32 1, %s22
    %p28 = scmp.ge.s32.totalorder %s27, 1
    %s29 = scalar_select %p28, 0, %s27
    %s30 = sadd.s32 1, %s21
    %s31 = scalar_select %p28, %s30, %s21
    %p32 = scmp.ge.s32.totalorder %s31, 2
    %s33 = scalar_select %p32, 0, %s31
    %s34 = ssub.s32 %s21, %s33
    %s35 = ssub.s32 %s22, %s29
    %s36 = sor.u32 %s34, %s35
    %p37 = scmp.eq.s32.totalorder %s36, 0
    %s39 = sadd.s32 %s38, 1
    %s40 = scalar_select %p37, %s38, %s39
    %p43 = pneg %p37
    %p44 = scmp.eq.s32.totalorder %s14, 1
    %p45 = por %p43, %p44
    %p46 = scmp.ne.s32.totalorder %s38, %s41
    %p47 = scmp.eq.s32.totalorder %s14, 0
    %p48 = por %p46, %p47
    %p49 = scmp.ne.s32.totalorder %s38, %s41
    %p50 = scmp.eq.s32.totalorder %s19, 1
    %p51 = por %p49, %p50
    %p52 = scmp.ne.s32.totalorder %s41, %s42
    %p53 = scmp.eq.s32.totalorder %s19, 0
    %p54 = por %p52, %p53
    %p55 = scmp.ne.s32.totalorder %s41, %s42
    %p56 = scmp.eq.s32.totalorder %s20, 1
    %p57 = por %p55, %p56
    %p59 = scmp.ne.s32.totalorder %s42, %s58
    %p60 = scmp.eq.s32.totalorder %s20, 0
    %p61 = por %p59, %p60
    %s62 = ssub.s32 %s21, %s33
    %s63 = ssub.s32 %s22, %s29
    %s64 = sor.u32 %s62, %s63
    %p65 = scmp.eq.s32.totalorder %s64, 0
    %s67 = sadd.s32 %s66, 1
    %s68 = scalar_select %p65, %s66, %s67
    %p71 = pneg %p65
    %p72 = scmp.eq.s32.totalorder %s14, 1
    %p73 = por %p71, %p72
    %p74 = scmp.ne.s32.totalorder %s66, %s69
    %p75 = scmp.eq.s32.totalorder %s14, 0
    %p76 = por %p74, %p75
    %p77 = scmp.ne.s32.totalorder %s66, %s69
    %p78 = scmp.eq.s32.totalorder %s19, 1
    %p79 = por %p77, %p78
    %p80 = scmp.ne.s32.totalorder %s69, %s70
    %p81 = scmp.eq.s32.totalorder %s19, 0
    %p82 = por %p80, %p81
    %p83 = scmp.ne.s32.totalorder %s69, %s70
    %p84 = scmp.eq.s32.totalorder %s20, 1
    %p85 = por %p83, %p84
    %p87 = scmp.ne.s32.totalorder %s70, %s86
    %p88 = scmp.eq.s32.totalorder %s20, 0
    %p89 = por %p87, %p88
    %s90 = ssub.s32 %s21, %s33
    %s91 = ssub.s32 %s22, %s29
    %s92 = sor.u32 %s90, %s91
    %p93 = scmp.eq.s32.totalorder %s92, 0
    %s95 = sadd.s32 %s94, 1
    %s96 = scalar_select %p93, %s94, %s95
    %p99 = pneg %p93
    %p100 = scmp.eq.s32.totalorder %s14, 1
    %p101 = por %p99, %p100
    %p102 = scmp.ne.s32.totalorder %s94, %s97
    %p103 = scmp.eq.s32.totalorder %s14, 0
    %p104 = por %p102, %p103
    %p105 = scmp.ne.s32.totalorder %s94, %s97
    %p106 = scmp.eq.s32.totalorder %s19, 1
    %p107 = por %p105, %p106
    %p108 = scmp.ne.s32.totalorder %s97, %s98
    %p109 = scmp.eq.s32.totalorder %s19, 0
    %p110 = por %p108, %p109
    %p111 = scmp.ne.s32.totalorder %s97, %s98
    %p112 = scmp.eq.s32.totalorder %s20, 1
    %p113 = por %p111, %p112
    %p115 = scmp.ne.s32.totalorder %s98, %s114
    %p116 = scmp.eq.s32.totalorder %s20, 0
    %p117 = por %p115, %p116
    %s118 = ssub.s32 %s21, %s33
    %p119 = scmp.eq.s32.totalorder %s118, 0
    %s121 = sadd.s32 %s120, 1
    %s122 = scalar_select %p119, %s120, %s121
    %p125 = pneg %p119
    %p126 = scmp.eq.s32.totalorder %s14, 1
    %p127 = por %p125, %p126
    %p128 = scmp.ne.s32.totalorder %s120, %s123
    %p129 = scmp.eq.s32.totalorder %s14, 0
    %p130 = por %p128, %p129
    %p131 = scmp.ne.s32.totalorder %s120, %s123
    %p132 = scmp.eq.s32.totalorder %s19, 1
    %p133 = por %p131, %p132
    %p134 = scmp.ne.s32.totalorder %s123, %s124
    %p135 = scmp.eq.s32.totalorder %s19, 0
    %p136 = por %p134, %p135
    %p137 = scmp.ne.s32.totalorder %s123, %s124
    %p138 = scmp.eq.s32.totalorder %s20, 1
    %p139 = por %p137, %p138
    %p141 = scmp.ne.s32.totalorder %s124, %s140
    %p142 = scmp.eq.s32.totalorder %s20, 0
    %p143 = por %p141, %p142
    %s144 = ssub.s32 %s21, %s33
    %p145 = scmp.eq.s32.totalorder %s144, 0
    %s147 = sadd.s32 %s146, 1
    %s148 = scalar_select %p145, %s146, %s147
    %p151 = pneg %p145
    %p152 = scmp.eq.s32.totalorder %s14, 1
    %p153 = por %p151, %p152
    %p154 = scmp.ne.s32.totalorder %s146, %s149
    %p155 = scmp.eq.s32.totalorder %s14, 0
    %p156 = por %p154, %p155
    %p157 = scmp.ne.s32.totalorder %s146, %s149
    %p158 = scmp.eq.s32.totalorder %s19, 1
    %p159 = por %p157, %p158
    %p160 = scmp.ne.s32.totalorder %s149, %s150
    %p161 = scmp.eq.s32.totalorder %s19, 0
    %p162 = por %p160, %p161
    %p163 = scmp.ne.s32.totalorder %s149, %s150
    %p164 = scmp.eq.s32.totalorder %s20, 1
    %p165 = por %p163, %p164
    %p167 = scmp.ne.s32.totalorder %s150, %s166
    %p168 = scmp.eq.s32.totalorder %s20, 0
    %p169 = por %p167, %p168
    %s170 = ssub.s32 %s21, %s33
    %p171 = scmp.eq.s32.totalorder %s170, 0
    %s173 = sadd.s32 %s172, 1
    %s174 = scalar_select %p171, %s172, %s173
    %p177 = pneg %p171
    %p178 = scmp.eq.s32.totalorder %s14, 1
    %p179 = por %p177, %p178
    %p180 = scmp.ne.s32.totalorder %s172, %s175
    %p181 = scmp.eq.s32.totalorder %s14, 0
    %p182 = por %p180, %p181
    %p183 = scmp.ne.s32.totalorder %s172, %s175
    %p184 = scmp.eq.s32.totalorder %s19, 1
    %p185 = por %p183, %p184
    %p186 = scmp.ne.s32.totalorder %s175, %s176
    %p187 = scmp.eq.s32.totalorder %s19, 0
    %p188 = por %p186, %p187
    %p189 = scmp.ne.s32.totalorder %s175, %s176
    %p190 = scmp.eq.s32.totalorder %s20, 1
    %p191 = por %p189, %p190
    %p193 = scmp.ne.s32.totalorder %s176, %s192
    %p194 = scmp.eq.s32.totalorder %s20, 0
    %p195 = por %p193, %p194
    %s196 = ssub.s32 %s21, %s33
    %p197 = scmp.eq.s32.totalorder %s196, 0
    %s199 = sadd.s32 %s198, 1
    %s200 = scalar_select %p197, %s198, %s199
    %p203 = pneg %p197
    %p204 = scmp.eq.s32.totalorder %s14, 1
    %p205 = por %p203, %p204
    %p206 = scmp.ne.s32.totalorder %s198, %s201
    %p207 = scmp.eq.s32.totalorder %s14, 0
    %p208 = por %p206, %p207
    %p209 = scmp.ne.s32.totalorder %s198, %s201
    %p210 = scmp.eq.s32.totalorder %s19, 1
    %p211 = por %p209, %p210
    %p212 = scmp.ne.s32.totalorder %s201, %s202
    %p213 = scmp.eq.s32.totalorder %s19, 0
    %p214 = por %p212, %p213
    %p215 = scmp.ne.s32.totalorder %s201, %s202
    %p216 = scmp.eq.s32.totalorder %s20, 1
    %p217 = por %p215, %p216
    %p219 = scmp.ne.s32.totalorder %s202, %s218
    %p220 = scmp.eq.s32.totalorder %s20, 0
    %p221 = por %p219, %p220
    %s222 = ssub.s32 %s21, %s33
    %p223 = scmp.eq.s32.totalorder %s222, 0
    %s225 = sadd.s32 %s224, 1
    %s226 = scalar_select %p223, %s224, %s225
    %p229 = pneg %p223
    %p230 = scmp.eq.s32.totalorder %s14, 1
    %p231 = por %p229, %p230
    %p232 = scmp.ne.s32.totalorder %s224, %s227
    %p233 = scmp.eq.s32.totalorder %s14, 0
    %p234 = por %p232, %p233
    %p235 = scmp.ne.s32.totalorder %s224, %s227
    %p236 = scmp.eq.s32.totalorder %s19, 1
    %p237 = por %p235, %p236
    %p238 = scmp.ne.s32.totalorder %s227, %s228
    %p239 = scmp.eq.s32.totalorder %s19, 0
    %p240 = por %p238, %p239
    %p241 = scmp.ne.s32.totalorder %s227, %s228
    %p242 = scmp.eq.s32.totalorder %s20, 1
    %p243 = por %p241, %p242
    %p245 = scmp.ne.s32.totalorder %s228, %s244
    %p246 = scmp.eq.s32.totalorder %s20, 0
    %p247 = por %p245, %p246
    %p248 = scmp.le.s32.totalorder 1, %s14
    %p249 = scmp.lt.s32.totalorder %s14, 3
    %p250 = pnand %p248, %p249
    %p251 = pneg %p250
    // Predicated region
    $region9: #{dc_and_ce_loss.2} parent=5 // pred_check
      _
    $region10: #{dc_and_ce_loss.2} parent=5 // pred_check_branch
      %253 = sbr.rel (%p250) target = $region12
    $region11: #{dc_and_ce_loss.2} parent=5 // pred_region
      %s254 = ssub.s32 %s14, 1
    $region12: #{dc_and_ce_loss.2} parent=5 // pred_fallthru
      _
    %p255 = scmp.lt.s32.totalorder %s14, 2
    // Predicated region
    $region13: #{dc_and_ce_loss.2} parent=5 // pred_check
      %p256 = pneg %p255
    $region14: #{dc_and_ce_loss.2} parent=5 // pred_check_branch
      %258 = sbr.rel (%p256) target = $region16
    $region15: #{dc_and_ce_loss.2} parent=5 // pred_region
      // Predicated region
      $region17: #{dc_and_ce_loss.2} parent=15 // pred_check
        %p259 = pneg %p48
      $region18: #{dc_and_ce_loss.2} parent=15 // pred_check_branch
        %261 = sbr.rel (%p259) target = $region20
      $region19: #{dc_and_ce_loss.2} parent=15 // pred_region
        %s262 = smul.u32 16, %s22
        %p263 = scmp.lt.s32.totalorder %s21, 1
        %s264 = scalar_select %p263, %s21, 1
        %p265 = scmp.lt.s32.totalorder %s262, 15
        %s266 = scalar_select %p265, %s262, 15
        %s267 = smul.addr %s264, 16
        %s268 = sadd.s32 %s266, %s267
        %s269 = smul.addr %s268, 4
        %s270 = scalar_lea.vmem %s0, %s269
        %s271 = smul.u32 16, %s22
      $region20: #{dc_and_ce_loss.2} parent=15 // pred_fallthru
        _
      // Predicated region
      $region21: #{dc_and_ce_loss.2} parent=15 // pred_check
        %p272 = pneg %p76
      $region22: #{dc_and_ce_loss.2} parent=15 // pred_check_branch
        %274 = sbr.rel (%p272) target = $region24
      $region23: #{dc_and_ce_loss.2} parent=15 // pred_region
        %s275 = smul.u32 16, %s22
        %p276 = scmp.lt.s32.totalorder %s21, 1
        %s277 = scalar_select %p276, %s21, 1
        %p278 = scmp.lt.s32.totalorder %s275, 15
        %s279 = scalar_select %p278, %s275, 15
        %s280 = smul.addr %s277, 16
        %s281 = sadd.s32 %s279, %s280
        %s282 = smul.addr %s281, 8
        %s283 = scalar_lea.vmem %s1, %s282
        %s284 = smul.u32 16, %s22
      $region24: #{dc_and_ce_loss.2} parent=15 // pred_fallthru
        _
      // Predicated region
      $region25: #{dc_and_ce_loss.2} parent=15 // pred_check
        %p285 = pneg %p104
      $region26: #{dc_and_ce_loss.2} parent=15 // pred_check_branch
        %287 = sbr.rel (%p285) target = $region28
      $region27: #{dc_and_ce_loss.2} parent=15 // pred_region
        %s288 = smul.u32 16, %s22
        %p289 = scmp.lt.s32.totalorder %s21, 1
        %s290 = scalar_select %p289, %s21, 1
        %p291 = scmp.lt.s32.totalorder %s288, 15
        %s292 = scalar_select %p291, %s288, 15
        %s293 = smul.addr %s290, 16
        %s294 = sadd.s32 %s292, %s293
        %s295 = scalar_lea.vmem %s2, %s294
        %s296 = smul.u32 16, %s22
      $region28: #{dc_and_ce_loss.2} parent=15 // pred_fallthru
        _
    $region16: #{dc_and_ce_loss.2} parent=5 // pred_fallthru
      _
    %p297 = scmp.le.s32.totalorder 1, %s14
    %p298 = scmp.lt.s32.totalorder %s14, 3
    %p299 = pnand %p297, %p298
    %p300 = pneg %p299
    // Predicated region
    $region29: #{dc_and_ce_loss.2} parent=5 // pred_check
      _
    $region30: #{dc_and_ce_loss.2} parent=5 // pred_check_branch
      %302 = sbr.rel (%p299) target = $region32
    $region31: #{dc_and_ce_loss.2} parent=5 // pred_region
      %s303 = ssub.s32 %s14, 1
      %s304 = smul.u32 16, %s24
      %p305 = scmp.lt.s32.totalorder %s23, 1
      %s306 = scalar_select %p305, %s23, 1
      %p307 = scmp.lt.s32.totalorder %s304, 15
      %s308 = scalar_select %p307, %s304, 15
      %s309 = smul.addr %s306, 16
      %s310 = sadd.s32 %s308, %s309
      %s311 = smul.addr %s310, 4
      %s312 = scalar_lea.vmem %s0, %s311
      %p313 = pneg %p54
      %p314 = pneg %p51
      %s315 = smul.u32 16, %s24
      %p316 = scmp.lt.s32.totalorder %s23, 1
      %s317 = scalar_select %p316, %s23, 1
      %p318 = scmp.lt.s32.totalorder %s315, 15
      %s319 = scalar_select %p318, %s315, 15
      %s320 = smul.addr %s317, 16
      %s321 = sadd.s32 %s319, %s320
      %s322 = smul.addr %s321, 8
      %s323 = scalar_lea.vmem %s1, %s322
      %p324 = pneg %p82
      %p325 = pneg %p79
      %s326 = smul.u32 16, %s24
      %p327 = scmp.lt.s32.totalorder %s23, 1
      %s328 = scalar_select %p327, %s23, 1
      %p329 = scmp.lt.s32.totalorder %s326, 15
      %s330 = scalar_select %p329, %s326, 15
      %s331 = smul.addr %s328, 16
      %s332 = sadd.s32 %s330, %s331
      %s333 = scalar_lea.vmem %s2, %s332
      %p334 = pneg %p110
      %p335 = pneg %p107
      %p336 = pneg %p136
      %p337 = pneg %p133
      %p338 = scmp.lt.s32.totalorder %s23, 1
      %s339 = scalar_select %p338, %s23, 1
      %s340 = smul.addr %s339, 4
      %s341 = scalar_lea.vmem %s3, %s340
      %p342 = pneg %p162
      %p343 = pneg %p159
      %p344 = scmp.lt.s32.totalorder %s23, 1
      %s345 = scalar_select %p344, %s23, 1
      %s346 = smul.addr %s345, 4
      %s347 = scalar_lea.vmem %s4, %s346
      %p348 = pneg %p188
      %p349 = pneg %p185
      %p350 = scmp.lt.s32.totalorder %s23, 1
      %s351 = scalar_select %p350, %s23, 1
      %s352 = smul.addr %s351, 4
      %s353 = scalar_lea.vmem %s5, %s352
      %p354 = pneg %p214
      %p355 = pneg %p211
      %p356 = scmp.lt.s32.totalorder %s23, 1
      %s357 = scalar_select %p356, %s23, 1
      %s358 = scalar_lea.vmem %s6, %s357
      %p359 = pneg %p240
      %p360 = pneg %p237
      %p361 = scmp.lt.s32.totalorder %s23, 1
      %s362 = scalar_select %p361, %s23, 1
      %s363 = smul.addr %s362, 8
      %s364 = scalar_lea.vmem %s7, %s363
      %s365 = smul.u32 16, %s24
      %p366 = scmp.lt.s32.totalorder %s23, 1
      %s367 = scalar_select %p366, %s23, 1
      %p368 = scmp.lt.s32.totalorder %s365, 15
      %s369 = scalar_select %p368, %s365, 15
      %s370 = smul.addr %s367, 16
      %s371 = sadd.s32 %s369, %s370
      %s372 = smul.addr %s371, 4
      %s373 = scalar_lea.vmem %s0, %s372
      %s374 = smul.u32 16, %s24
      %s375 = smul.u32 16, %s24
      %p376 = scmp.lt.s32.totalorder %s23, 1
      %s377 = scalar_select %p376, %s23, 1
      %p378 = scmp.lt.s32.totalorder %s375, 15
      %s379 = scalar_select %p378, %s375, 15
      %s380 = smul.addr %s377, 16
      %s381 = sadd.s32 %s379, %s380
      %s382 = smul.addr %s381, 8
      %s383 = scalar_lea.vmem %s1, %s382
      %s384 = smul.u32 16, %s24
      %s385 = smul.u32 16, %s24
      %p386 = scmp.lt.s32.totalorder %s23, 1
      %s387 = scalar_select %p386, %s23, 1
      %p388 = scmp.lt.s32.totalorder %s385, 15
      %s389 = scalar_select %p388, %s385, 15
      %s390 = smul.addr %s387, 16
      %s391 = sadd.s32 %s389, %s390
      %s392 = scalar_lea.vmem %s2, %s391
      %s393 = smul.u32 16, %s24
      %p394 = scmp.lt.s32.totalorder %s23, 1
      %s395 = scalar_select %p394, %s23, 1
      %s396 = smul.addr %s395, 4
      %s397 = scalar_lea.vmem %s3, %s396
      %p398 = scmp.lt.s32.totalorder %s23, 1
      %s399 = scalar_select %p398, %s23, 1
      %s400 = smul.addr %s399, 4
      %s401 = scalar_lea.vmem %s4, %s400
      %p402 = scmp.lt.s32.totalorder %s23, 1
      %s403 = scalar_select %p402, %s23, 1
      %s404 = smul.addr %s403, 4
      %s405 = scalar_lea.vmem %s5, %s404
      %p406 = scmp.lt.s32.totalorder %s23, 1
      %s407 = scalar_select %p406, %s23, 1
      %s408 = scalar_lea.vmem %s6, %s407
      %p409 = scmp.lt.s32.totalorder %s23, 1
      %s410 = scalar_select %p409, %s23, 1
      %s411 = smul.addr %s410, 8
      %s412 = scalar_lea.vmem %s7, %s411
      %p413 = scmp.eq.s32.totalorder %s24, 0
      // Predicated region
      $region33: #{dc_and_ce_loss.2} parent=31 // pred_check
        %p414 = pneg %p413
      $region34: #{dc_and_ce_loss.2} parent=31 // pred_check_branch
        %416 = sbr.rel (%p414) target = $region36
      $region35: #{dc_and_ce_loss.2} parent=31 // pred_region
        %417 = vst [vmem:[#allocation2] sm:$0xff] 0.0
        %418 = vst [vmem:[#allocation2 + $0x8] sm:$0xff] 0.0
        %419 = vst [vmem:[#allocation2 + $0x10] sm:$0xff] 0.0
        %420 = vst [vmem:[#allocation2 + $0x18] sm:$0xff] 0.0
        %421 = vst [vmem:[#allocation2 + $0x20] sm:$0xff] 0.0
        %422 = vst [vmem:[#allocation2 + $0x28] sm:$0xff] 0.0
        %423 = vst [vmem:[#allocation2 + $0x30] sm:$0xff] 0.0
        %424 = vst [vmem:[#allocation2 + $0x38] sm:$0xff] 0.0
        %425 = vst [vmem:[#allocation3] sm:$0xff] 0.0
        %426 = vst [vmem:[#allocation3 + $0x8] sm:$0xff] 0.0
        %427 = vst [vmem:[#allocation3 + $0x10] sm:$0xff] 0.0
        %428 = vst [vmem:[#allocation3 + $0x18] sm:$0xff] 0.0
        %429 = vst [vmem:[#allocation3 + $0x20] sm:$0xff] 0.0
        %430 = vst [vmem:[#allocation3 + $0x28] sm:$0xff] 0.0
        %431 = vst [vmem:[#allocation3 + $0x30] sm:$0xff] 0.0
        %432 = vst [vmem:[#allocation3 + $0x38] sm:$0xff] 0.0
        %433 = vst [vmem:[#allocation4] sm:$0xff] 0.0
        %434 = vst [vmem:[#allocation4 + $0x8] sm:$0xff] 0.0
        %435 = vst [vmem:[#allocation4 + $0x10] sm:$0xff] 0.0
        %436 = vst [vmem:[#allocation4 + $0x18] sm:$0xff] 0.0
        %437 = vst [vmem:[#allocation4 + $0x20] sm:$0xff] 0.0
        %438 = vst [vmem:[#allocation4 + $0x28] sm:$0xff] 0.0
        %439 = vst [vmem:[#allocation4 + $0x30] sm:$0xff] 0.0
        %440 = vst [vmem:[#allocation4 + $0x38] sm:$0xff] 0.0
        %441 = vst [vmem:[#allocation5] sm:$0xff] 0.0
        %442 = vst [vmem:[#allocation5 + $0x8] sm:$0xff] 0.0
        %443 = vst [vmem:[#allocation6] sm:$0xff] 0.0
        %444 = vst [vmem:[#allocation6 + $0x8] sm:$0xff] 0.0
        %445 = vst [vmem:[#allocation6 + $0x10] sm:$0xff] 0.0
        %446 = vst [vmem:[#allocation6 + $0x18] sm:$0xff] 0.0
        %447 = vst [vmem:[#allocation6 + $0x20] sm:$0xff] 0.0
        %448 = vst [vmem:[#allocation6 + $0x28] sm:$0xff] 0.0
        %449 = vst [vmem:[#allocation6 + $0x30] sm:$0xff] 0.0
        %450 = vst [vmem:[#allocation6 + $0x38] sm:$0xff] 0.0
        %451 = vst [vmem:[#allocation6 + $0x40] sm:$0xff] 0.0
        %452 = vst [vmem:[#allocation6 + $0x48] sm:$0xff] 0.0
        %453 = vst [vmem:[#allocation6 + $0x50] sm:$0xff] 0.0
        %454 = vst [vmem:[#allocation6 + $0x58] sm:$0xff] 0.0
        %455 = vst [vmem:[#allocation6 + $0x60] sm:$0xff] 0.0
        %456 = vst [vmem:[#allocation6 + $0x68] sm:$0xff] 0.0
        %457 = vst [vmem:[#allocation6 + $0x70] sm:$0xff] 0.0
        %458 = vst [vmem:[#allocation6 + $0x78] sm:$0xff] 0.0
      $region36: #{dc_and_ce_loss.2} parent=31 // pred_fallthru
        _
      %v459 = vld [vmem:[%s373] sm:$0xff]
      %v460 = vld [vmem:[%s373 + $0x8] sm:$0xff]
      %v461 = vld [vmem:[%s373 + $0x10] sm:$0xff]
      %v462 = vld [vmem:[%s373 + $0x18] sm:$0xff]
      %v463 = vld [vmem:[%s373 + $0x20] sm:$0xff]
      %v464 = vld [vmem:[%s373 + $0x28] sm:$0xff]
      %v465 = vld [vmem:[%s373 + $0x30] sm:$0xff]
      %v466 = vld [vmem:[%s373 + $0x38] sm:$0xff]
      %v467 = vld [vmem:[%s383] sm:$0xff]
      %v468 = vld [vmem:[%s383 + $0x8] sm:$0xff]
      %v469 = vld [vmem:[%s383 + $0x10] sm:$0xff]
      %v470 = vld [vmem:[%s383 + $0x18] sm:$0xff]
      %v471 = vld [vmem:[%s383 + $0x20] sm:$0xff]
      %v472 = vld [vmem:[%s383 + $0x28] sm:$0xff]
      %v473 = vld [vmem:[%s383 + $0x30] sm:$0xff]
      %v474 = vld [vmem:[%s383 + $0x38] sm:$0xff]
      %v475 = vld [vmem:[%s383 + $0x40] sm:$0xff]
      %v476 = vld [vmem:[%s383 + $0x48] sm:$0xff]
      %v477 = vld [vmem:[%s383 + $0x50] sm:$0xff]
      %v478 = vld [vmem:[%s383 + $0x58] sm:$0xff]
      %v479 = vld [vmem:[%s383 + $0x60] sm:$0xff]
      %v480 = vld [vmem:[%s383 + $0x68] sm:$0xff]
      %v481 = vld [vmem:[%s383 + $0x70] sm:$0xff]
      %v482 = vld [vmem:[%s383 + $0x78] sm:$0xff]
      %v483 = vld [vmem:[%s392] sm:$0xff]
      %v484 = vld [vmem:[%s392 + $0x8] sm:$0xff]
      %v493 = vcombine.high %v459, %v459
      %v494 = vcombine.high %v460, %v460
      %v495 = vcombine.high %v461, %v461
      %v496 = vcombine.high %v462, %v462
      %v497 = vcombine.high %v463, %v463
      %v498 = vcombine.high %v464, %v464
      %v499 = vcombine.high %v465, %v465
      %v500 = vcombine.high %v466, %v466
      %vm509 = vcmask 1043456
      %v510 = vsel %vm509, %v459, -inf
      %v511 = vrot.slane %v510, 4
      %v512 = vmax.f32 %v510, %v511
      %v513 = vrot.slane %v512, 2
      %v514 = vmax.f32 %v512, %v513
      %v515 = vrot.slane %v514, 1
      %v516 = vmax.f32 %v514, %v515
      %v517 = vsel %vm509, %v493, -inf
      %v518 = vrot.slane %v517, 4
      %v519 = vmax.f32 %v517, %v518
      %v520 = vrot.slane %v519, 2
      %v521 = vmax.f32 %v519, %v520
      %v522 = vrot.slane %v521, 1
      %v523 = vmax.f32 %v521, %v522
      %v524 = vsel %vm509, %v460, -inf
      %v525 = vrot.slane %v524, 4
      %v526 = vmax.f32 %v524, %v525
      %v527 = vrot.slane %v526, 2
      %v528 = vmax.f32 %v526, %v527
      %v529 = vrot.slane %v528, 1
      %v530 = vmax.f32 %v528, %v529
      %v531 = vsel %vm509, %v494, -inf
      %v532 = vrot.slane %v531, 4
      %v533 = vmax.f32 %v531, %v532
      %v534 = vrot.slane %v533, 2
      %v535 = vmax.f32 %v533, %v534
      %v536 = vrot.slane %v535, 1
      %v537 = vmax.f32 %v535, %v536
      %v538 = vsel %vm509, %v461, -inf
      %v539 = vrot.slane %v538, 4
      %v540 = vmax.f32 %v538, %v539
      %v541 = vrot.slane %v540, 2
      %v542 = vmax.f32 %v540, %v541
      %v543 = vrot.slane %v542, 1
      %v544 = vmax.f32 %v542, %v543
      %v545 = vsel %vm509, %v495, -inf
      %v546 = vrot.slane %v545, 4
      %v547 = vmax.f32 %v545, %v546
      %v548 = vrot.slane %v547, 2
      %v549 = vmax.f32 %v547, %v548
      %v550 = vrot.slane %v549, 1
      %v551 = vmax.f32 %v549, %v550
      %v552 = vsel %vm509, %v462, -inf
      %v553 = vrot.slane %v552, 4
      %v554 = vmax.f32 %v552, %v553
      %v555 = vrot.slane %v554, 2
      %v556 = vmax.f32 %v554, %v555
      %v557 = vrot.slane %v556, 1
      %v558 = vmax.f32 %v556, %v557
      %v559 = vsel %vm509, %v496, -inf
      %v560 = vrot.slane %v559, 4
      %v561 = vmax.f32 %v559, %v560
      %v562 = vrot.slane %v561, 2
      %v563 = vmax.f32 %v561, %v562
      %v564 = vrot.slane %v563, 1
      %v565 = vmax.f32 %v563, %v564
      %v566 = vsel %vm509, %v463, -inf
      %v567 = vrot.slane %v566, 4
      %v568 = vmax.f32 %v566, %v567
      %v569 = vrot.slane %v568, 2
      %v570 = vmax.f32 %v568, %v569
      %v571 = vrot.slane %v570, 1
      %v572 = vmax.f32 %v570, %v571
      %v573 = vsel %vm509, %v497, -inf
      %v574 = vrot.slane %v573, 4
      %v575 = vmax.f32 %v573, %v574
      %v576 = vrot.slane %v575, 2
      %v577 = vmax.f32 %v575, %v576
      %v578 = vrot.slane %v577, 1
      %v579 = vmax.f32 %v577, %v578
      %v580 = vsel %vm509, %v464, -inf
      %v581 = vrot.slane %v580, 4
      %v582 = vmax.f32 %v580, %v581
      %v583 = vrot.slane %v582, 2
      %v584 = vmax.f32 %v582, %v583
      %v585 = vrot.slane %v584, 1
      %v586 = vmax.f32 %v584, %v585
      %v587 = vsel %vm509, %v498, -inf
      %v588 = vrot.slane %v587, 4
      %v589 = vmax.f32 %v587, %v588
      %v590 = vrot.slane %v589, 2
      %v591 = vmax.f32 %v589, %v590
      %v592 = vrot.slane %v591, 1
      %v593 = vmax.f32 %v591, %v592
      %v594 = vsel %vm509, %v465, -inf
      %v595 = vrot.slane %v594, 4
      %v596 = vmax.f32 %v594, %v595
      %v597 = vrot.slane %v596, 2
      %v598 = vmax.f32 %v596, %v597
      %v599 = vrot.slane %v598, 1
      %v600 = vmax.f32 %v598, %v599
      %v601 = vsel %vm509, %v499, -inf
      %v602 = vrot.slane %v601, 4
      %v603 = vmax.f32 %v601, %v602
      %v604 = vrot.slane %v603, 2
      %v605 = vmax.f32 %v603, %v604
      %v606 = vrot.slane %v605, 1
      %v607 = vmax.f32 %v605, %v606
      %v608 = vsel %vm509, %v466, -inf
      %v609 = vrot.slane %v608, 4
      %v610 = vmax.f32 %v608, %v609
      %v611 = vrot.slane %v610, 2
      %v612 = vmax.f32 %v610, %v611
      %v613 = vrot.slane %v612, 1
      %v614 = vmax.f32 %v612, %v613
      %v615 = vsel %vm509, %v500, -inf
      %v616 = vrot.slane %v615, 4
      %v617 = vmax.f32 %v615, %v616
      %v618 = vrot.slane %v617, 2
      %v619 = vmax.f32 %v617, %v618
      %v620 = vrot.slane %v619, 1
      %v621 = vmax.f32 %v619, %v620
      %v638 = vcombine.low %v516, %v523
      %v639 = vcombine.low %v530, %v537
      %v640 = vcombine.low %v544, %v551
      %v641 = vcombine.low %v558, %v565
      %v642 = vcombine.low %v572, %v579
      %v643 = vcombine.low %v586, %v593
      %v644 = vcombine.low %v600, %v607
      %v645 = vcombine.low %v614, %v621
      %v654 = vsub.f32 %v459, %v638
      %v655 = vsub.f32 %v460, %v639
      %v656 = vsub.f32 %v461, %v640
      %v657 = vsub.f32 %v462, %v641
      %v658 = vsub.f32 %v463, %v642
      %v659 = vsub.f32 %v464, %v643
      %v660 = vsub.f32 %v465, %v644
      %v661 = vsub.f32 %v466, %v645
      %v662 = vmul.f32 %v654, 1.442695
      %v663 = vpow.pop %v662
      %v664 = vmul.f32 %v655, 1.442695
      %v665 = vpow.pop %v664
      %v666 = vmul.f32 %v656, 1.442695
      %v667 = vpow.pop %v666
      %v668 = vmul.f32 %v657, 1.442695
      %v669 = vpow.pop %v668
      %v670 = vmul.f32 %v658, 1.442695
      %v671 = vpow.pop %v670
      %v672 = vmul.f32 %v659, 1.442695
      %v673 = vpow.pop %v672
      %v674 = vmul.f32 %v660, 1.442695
      %v675 = vpow.pop %v674
      %v676 = vmul.f32 %v661, 1.442695
      %v677 = vpow.pop %v676
      %v686 = vcombine.high %v663, %v663
      %v687 = vcombine.high %v665, %v665
      %v688 = vcombine.high %v667, %v667
      %v689 = vcombine.high %v669, %v669
      %v690 = vcombine.high %v671, %v671
      %v691 = vcombine.high %v673, %v673
      %v692 = vcombine.high %v675, %v675
      %v693 = vcombine.high %v677, %v677
      %v702 = vsel %vm509, %v663, 0.0
      %v703 = vrot.slane %v702, 4
      %v704 = vadd.f32 %v702, %v703
      %v705 = vrot.slane %v704, 2
      %v706 = vadd.f32 %v704, %v705
      %v707 = vrot.slane %v706, 1
      %v708 = vadd.f32 %v706, %v707
      %v709 = vsel %vm509, %v686, 0.0
      %v710 = vrot.slane %v709, 4
      %v711 = vadd.f32 %v709, %v710
      %v712 = vrot.slane %v711, 2
      %v713 = vadd.f32 %v711, %v712
      %v714 = vrot.slane %v713, 1
      %v715 = vadd.f32 %v713, %v714
      %v716 = vsel %vm509, %v665, 0.0
      %v717 = vrot.slane %v716, 4
      %v718 = vadd.f32 %v716, %v717
      %v719 = vrot.slane %v718, 2
      %v720 = vadd.f32 %v718, %v719
      %v721 = vrot.slane %v720, 1
      %v722 = vadd.f32 %v720, %v721
      %v723 = vsel %vm509, %v687, 0.0
      %v724 = vrot.slane %v723, 4
      %v725 = vadd.f32 %v723, %v724
      %v726 = vrot.slane %v725, 2
      %v727 = vadd.f32 %v725, %v726
      %v728 = vrot.slane %v727, 1
      %v729 = vadd.f32 %v727, %v728
      %v730 = vsel %vm509, %v667, 0.0
      %v731 = vrot.slane %v730, 4
      %v732 = vadd.f32 %v730, %v731
      %v733 = vrot.slane %v732, 2
      %v734 = vadd.f32 %v732, %v733
      %v735 = vrot.slane %v734, 1
      %v736 = vadd.f32 %v734, %v735
      %v737 = vsel %vm509, %v688, 0.0
      %v738 = vrot.slane %v737, 4
      %v739 = vadd.f32 %v737, %v738
      %v740 = vrot.slane %v739, 2
      %v741 = vadd.f32 %v739, %v740
      %v742 = vrot.slane %v741, 1
      %v743 = vadd.f32 %v741, %v742
      %v744 = vsel %vm509, %v669, 0.0
      %v745 = vrot.slane %v744, 4
      %v746 = vadd.f32 %v744, %v745
      %v747 = vrot.slane %v746, 2
      %v748 = vadd.f32 %v746, %v747
      %v749 = vrot.slane %v748, 1
      %v750 = vadd.f32 %v748, %v749
      %v751 = vsel %vm509, %v689, 0.0
      %v752 = vrot.slane %v751, 4
      %v753 = vadd.f32 %v751, %v752
      %v754 = vrot.slane %v753, 2
      %v755 = vadd.f32 %v753, %v754
      %v756 = vrot.slane %v755, 1
      %v757 = vadd.f32 %v755, %v756
      %v758 = vsel %vm509, %v671, 0.0
      %v759 = vrot.slane %v758, 4
      %v760 = vadd.f32 %v758, %v759
      %v761 = vrot.slane %v760, 2
      %v762 = vadd.f32 %v760, %v761
      %v763 = vrot.slane %v762, 1
      %v764 = vadd.f32 %v762, %v763
      %v765 = vsel %vm509, %v690, 0.0
      %v766 = vrot.slane %v765, 4
      %v767 = vadd.f32 %v765, %v766
      %v768 = vrot.slane %v767, 2
      %v769 = vadd.f32 %v767, %v768
      %v770 = vrot.slane %v769, 1
      %v771 = vadd.f32 %v769, %v770
      %v772 = vsel %vm509, %v673, 0.0
      %v773 = vrot.slane %v772, 4
      %v774 = vadd.f32 %v772, %v773
      %v775 = vrot.slane %v774, 2
      %v776 = vadd.f32 %v774, %v775
      %v777 = vrot.slane %v776, 1
      %v778 = vadd.f32 %v776, %v777
      %v779 = vsel %vm509, %v691, 0.0
      %v780 = vrot.slane %v779, 4
      %v781 = vadd.f32 %v779, %v780
      %v782 = vrot.slane %v781, 2
      %v783 = vadd.f32 %v781, %v782
      %v784 = vrot.slane %v783, 1
      %v785 = vadd.f32 %v783, %v784
      %v786 = vsel %vm509, %v675, 0.0
      %v787 = vrot.slane %v786, 4
      %v788 = vadd.f32 %v786, %v787
      %v789 = vrot.slane %v788, 2
      %v790 = vadd.f32 %v788, %v789
      %v791 = vrot.slane %v790, 1
      %v792 = vadd.f32 %v790, %v791
      %v793 = vsel %vm509, %v692, 0.0
      %v794 = vrot.slane %v793, 4
      %v795 = vadd.f32 %v793, %v794
      %v796 = vrot.slane %v795, 2
      %v797 = vadd.f32 %v795, %v796
      %v798 = vrot.slane %v797, 1
      %v799 = vadd.f32 %v797, %v798
      %v800 = vsel %vm509, %v677, 0.0
      %v801 = vrot.slane %v800, 4
      %v802 = vadd.f32 %v800, %v801
      %v803 = vrot.slane %v802, 2
      %v804 = vadd.f32 %v802, %v803
      %v805 = vrot.slane %v804, 1
      %v806 = vadd.f32 %v804, %v805
      %v807 = vsel %vm509, %v693, 0.0
      %v808 = vrot.slane %v807, 4
      %v809 = vadd.f32 %v807, %v808
      %v810 = vrot.slane %v809, 2
      %v811 = vadd.f32 %v809, %v810
      %v812 = vrot.slane %v811, 1
      %v813 = vadd.f32 %v811, %v812
      %v814 = vrcp.pop %v708
      %v815 = vrcp.pop %v715
      %v816 = vrcp.pop %v722
      %v817 = vrcp.pop %v729
      %v818 = vrcp.pop %v736
      %v819 = vrcp.pop %v743
      %v820 = vrcp.pop %v750
      %v821 = vrcp.pop %v757
      %v822 = vrcp.pop %v764
      %v823 = vrcp.pop %v771
      %v824 = vrcp.pop %v778
      %v825 = vrcp.pop %v785
      %v826 = vrcp.pop %v792
      %v827 = vrcp.pop %v799
      %v828 = vrcp.pop %v806
      %v829 = vrcp.pop %v813
      %v846 = vcombine.low %v814, %v815
      %v847 = vcombine.low %v816, %v817
      %v848 = vcombine.low %v818, %v819
      %v849 = vcombine.low %v820, %v821
      %v850 = vcombine.low %v822, %v823
      %v851 = vcombine.low %v824, %v825
      %v852 = vcombine.low %v826, %v827
      %v853 = vcombine.low %v828, %v829
      %v862 = vmul.f32 %v663, %v846
      %v863 = vmul.f32 %v665, %v847
      %v864 = vmul.f32 %v667, %v848
      %v865 = vmul.f32 %v669, %v849
      %v866 = vmul.f32 %v671, %v850
      %v867 = vmul.f32 %v673, %v851
      %v868 = vmul.f32 %v675, %v852
      %v869 = vmul.f32 %v677, %v853
      %v870 = vlog2.pop %v708
      %v871 = vmul.f32 %v870, 0.6931472
      %v872 = vlog2.pop %v715
      %v873 = vmul.f32 %v872, 0.6931472
      %v874 = vlog2.pop %v722
      %v875 = vmul.f32 %v874, 0.6931472
      %v876 = vlog2.pop %v729
      %v877 = vmul.f32 %v876, 0.6931472
      %v878 = vlog2.pop %v736
      %v879 = vmul.f32 %v878, 0.6931472
      %v880 = vlog2.pop %v743
      %v881 = vmul.f32 %v880, 0.6931472
      %v882 = vlog2.pop %v750
      %v883 = vmul.f32 %v882, 0.6931472
      %v884 = vlog2.pop %v757
      %v885 = vmul.f32 %v884, 0.6931472
      %v886 = vlog2.pop %v764
      %v887 = vmul.f32 %v886, 0.6931472
      %v888 = vlog2.pop %v771
      %v889 = vmul.f32 %v888, 0.6931472
      %v890 = vlog2.pop %v778
      %v891 = vmul.f32 %v890, 0.6931472
      %v892 = vlog2.pop %v785
      %v893 = vmul.f32 %v892, 0.6931472
      %v894 = vlog2.pop %v792
      %v895 = vmul.f32 %v894, 0.6931472
      %v896 = vlog2.pop %v799
      %v897 = vmul.f32 %v896, 0.6931472
      %v898 = vlog2.pop %v806
      %v899 = vmul.f32 %v898, 0.6931472
      %v900 = vlog2.pop %v813
      %v901 = vmul.f32 %v900, 0.6931472
      %v902 = vlaneseq
      %v903 = vshrl.u32 %v902, 7
      %v904 = vlaneseq
      %v905 = vshrl.u32 %v904, 7
      %v906 = vsub.s32 0, %v905
      %v907 = vrot.slane %v483, %v906
      %v908 = vlaneseq
      %v909 = vshrl.u32 %v908, 7
      %v910 = vsub.s32 1, %v909
      %v911 = vrot.slane %v483, %v910
      %v912 = vlaneseq
      %v913 = vshrl.u32 %v912, 7
      %v914 = vsub.s32 2, %v913
      %v915 = vrot.slane %v483, %v914
      %v916 = vlaneseq
      %v917 = vshrl.u32 %v916, 7
      %v918 = vsub.s32 3, %v917
      %v919 = vrot.slane %v483, %v918
      %v920 = vlaneseq
      %v921 = vshrl.u32 %v920, 7
      %v922 = vsub.s32 4, %v921
      %v923 = vrot.slane %v483, %v922
      %v924 = vlaneseq
      %v925 = vshrl.u32 %v924, 7
      %v926 = vsub.s32 5, %v925
      %v927 = vrot.slane %v483, %v926
      %v928 = vlaneseq
      %v929 = vshrl.u32 %v928, 7
      %v930 = vsub.s32 6, %v929
      %v931 = vrot.slane %v483, %v930
      %v932 = vlaneseq
      %v933 = vshrl.u32 %v932, 7
      %v934 = vsub.s32 7, %v933
      %v935 = vrot.slane %v483, %v934
      %v936 = vlaneseq
      %v937 = vshrl.u32 %v936, 7
      %v938 = vsub.s32 0, %v937
      %v939 = vrot.slane %v484, %v938
      %v940 = vlaneseq
      %v941 = vshrl.u32 %v940, 7
      %v942 = vsub.s32 1, %v941
      %v943 = vrot.slane %v484, %v942
      %v944 = vlaneseq
      %v945 = vshrl.u32 %v944, 7
      %v946 = vsub.s32 2, %v945
      %v947 = vrot.slane %v484, %v946
      %v948 = vlaneseq
      %v949 = vshrl.u32 %v948, 7
      %v950 = vsub.s32 3, %v949
      %v951 = vrot.slane %v484, %v950
      %v952 = vlaneseq
      %v953 = vshrl.u32 %v952, 7
      %v954 = vsub.s32 4, %v953
      %v955 = vrot.slane %v484, %v954
      %v956 = vlaneseq
      %v957 = vshrl.u32 %v956, 7
      %v958 = vsub.s32 5, %v957
      %v959 = vrot.slane %v484, %v958
      %v960 = vlaneseq
      %v961 = vshrl.u32 %v960, 7
      %v962 = vsub.s32 6, %v961
      %v963 = vrot.slane %v484, %v962
      %v964 = vlaneseq
      %v965 = vshrl.u32 %v964, 7
      %v966 = vsub.s32 7, %v965
      %v967 = vrot.slane %v484, %v966
      %vm968 = vcmp.eq.s32.totalorder %v903, %v907
      %vm969 = vcmp.eq.s32.totalorder %v903, %v911
      %vm970 = vcmp.eq.s32.totalorder %v903, %v915
      %vm971 = vcmp.eq.s32.totalorder %v903, %v919
      %vm972 = vcmp.eq.s32.totalorder %v903, %v923
      %vm973 = vcmp.eq.s32.totalorder %v903, %v927
      %vm974 = vcmp.eq.s32.totalorder %v903, %v931
      %vm975 = vcmp.eq.s32.totalorder %v903, %v935
      %vm976 = vcmp.eq.s32.totalorder %v903, %v939
      %vm977 = vcmp.eq.s32.totalorder %v903, %v943
      %vm978 = vcmp.eq.s32.totalorder %v903, %v947
      %vm979 = vcmp.eq.s32.totalorder %v903, %v951
      %vm980 = vcmp.eq.s32.totalorder %v903, %v955
      %vm981 = vcmp.eq.s32.totalorder %v903, %v959
      %vm982 = vcmp.eq.s32.totalorder %v903, %v963
      %vm983 = vcmp.eq.s32.totalorder %v903, %v967
      %v984 = vsel %vm968, 1, 0
      %v985 = vsel %vm969, 1, 0
      %v986 = vsel %vm970, 1, 0
      %v987 = vsel %vm971, 1, 0
      %v988 = vsel %vm972, 1, 0
      %v989 = vsel %vm973, 1, 0
      %v990 = vsel %vm974, 1, 0
      %v991 = vsel %vm975, 1, 0
      %v992 = vsel %vm976, 1, 0
      %v993 = vsel %vm977, 1, 0
      %v994 = vsel %vm978, 1, 0
      %v995 = vsel %vm979, 1, 0
      %v996 = vsel %vm980, 1, 0
      %v997 = vsel %vm981, 1, 0
      %v998 = vsel %vm982, 1, 0
      %v999 = vsel %vm983, 1, 0
      %v1000 = vcvt.s32.f32 %v984
      %v1001 = vcvt.s32.f32 %v985
      %v1002 = vcvt.s32.f32 %v986
      %v1003 = vcvt.s32.f32 %v987
      %v1004 = vcvt.s32.f32 %v988
      %v1005 = vcvt.s32.f32 %v989
      %v1006 = vcvt.s32.f32 %v990
      %v1007 = vcvt.s32.f32 %v991
      %v1008 = vcvt.s32.f32 %v992
      %v1009 = vcvt.s32.f32 %v993
      %v1010 = vcvt.s32.f32 %v994
      %v1011 = vcvt.s32.f32 %v995
      %v1012 = vcvt.s32.f32 %v996
      %v1013 = vcvt.s32.f32 %v997
      %v1014 = vcvt.s32.f32 %v998
      %v1015 = vcvt.s32.f32 %v999
      %v1032 = vcombine.low %v1000, %v1001
      %v1033 = vcombine.low %v1002, %v1003
      %v1034 = vcombine.low %v1004, %v1005
      %v1035 = vcombine.low %v1006, %v1007
      %v1036 = vcombine.low %v1008, %v1009
      %v1037 = vcombine.low %v1010, %v1011
      %v1038 = vcombine.low %v1012, %v1013
      %v1039 = vcombine.low %v1014, %v1015
      %v1048 = vmul.f32 %v654, %v1032
      %v1049 = vmul.f32 %v655, %v1033
      %v1050 = vmul.f32 %v656, %v1034
      %v1051 = vmul.f32 %v657, %v1035
      %v1052 = vmul.f32 %v658, %v1036
      %v1053 = vmul.f32 %v659, %v1037
      %v1054 = vmul.f32 %v660, %v1038
      %v1055 = vmul.f32 %v661, %v1039
      %v1064 = vcombine.high %v1048, %v1048
      %v1065 = vcombine.high %v1049, %v1049
      %v1066 = vcombine.high %v1050, %v1050
      %v1067 = vcombine.high %v1051, %v1051
      %v1068 = vcombine.high %v1052, %v1052
      %v1069 = vcombine.high %v1053, %v1053
      %v1070 = vcombine.high %v1054, %v1054
      %v1071 = vcombine.high %v1055, %v1055
      %v1080 = vsel %vm509, %v1048, 0.0
      %v1081 = vrot.slane %v1080, 4
      %v1082 = vadd.f32 %v1080, %v1081
      %v1083 = vrot.slane %v1082, 2
      %v1084 = vadd.f32 %v1082, %v1083
      %v1085 = vrot.slane %v1084, 1
      %v1086 = vadd.f32 %v1084, %v1085
      %v1087 = vsel %vm509, %v1064, 0.0
      %v1088 = vrot.slane %v1087, 4
      %v1089 = vadd.f32 %v1087, %v1088
      %v1090 = vrot.slane %v1089, 2
      %v1091 = vadd.f32 %v1089, %v1090
      %v1092 = vrot.slane %v1091, 1
      %v1093 = vadd.f32 %v1091, %v1092
      %v1094 = vsel %vm509, %v1049, 0.0
      %v1095 = vrot.slane %v1094, 4
      %v1096 = vadd.f32 %v1094, %v1095
      %v1097 = vrot.slane %v1096, 2
      %v1098 = vadd.f32 %v1096, %v1097
      %v1099 = vrot.slane %v1098, 1
      %v1100 = vadd.f32 %v1098, %v1099
      %v1101 = vsel %vm509, %v1065, 0.0
      %v1102 = vrot.slane %v1101, 4
      %v1103 = vadd.f32 %v1101, %v1102
      %v1104 = vrot.slane %v1103, 2
      %v1105 = vadd.f32 %v1103, %v1104
      %v1106 = vrot.slane %v1105, 1
      %v1107 = vadd.f32 %v1105, %v1106
      %v1108 = vsel %vm509, %v1050, 0.0
      %v1109 = vrot.slane %v1108, 4
      %v1110 = vadd.f32 %v1108, %v1109
      %v1111 = vrot.slane %v1110, 2
      %v1112 = vadd.f32 %v1110, %v1111
      %v1113 = vrot.slane %v1112, 1
      %v1114 = vadd.f32 %v1112, %v1113
      %v1115 = vsel %vm509, %v1066, 0.0
      %v1116 = vrot.slane %v1115, 4
      %v1117 = vadd.f32 %v1115, %v1116
      %v1118 = vrot.slane %v1117, 2
      %v1119 = vadd.f32 %v1117, %v1118
      %v1120 = vrot.slane %v1119, 1
      %v1121 = vadd.f32 %v1119, %v1120
      %v1122 = vsel %vm509, %v1051, 0.0
      %v1123 = vrot.slane %v1122, 4
      %v1124 = vadd.f32 %v1122, %v1123
      %v1125 = vrot.slane %v1124, 2
      %v1126 = vadd.f32 %v1124, %v1125
      %v1127 = vrot.slane %v1126, 1
      %v1128 = vadd.f32 %v1126, %v1127
      %v1129 = vsel %vm509, %v1067, 0.0
      %v1130 = vrot.slane %v1129, 4
      %v1131 = vadd.f32 %v1129, %v1130
      %v1132 = vrot.slane %v1131, 2
      %v1133 = vadd.f32 %v1131, %v1132
      %v1134 = vrot.slane %v1133, 1
      %v1135 = vadd.f32 %v1133, %v1134
      %v1136 = vsel %vm509, %v1052, 0.0
      %v1137 = vrot.slane %v1136, 4
      %v1138 = vadd.f32 %v1136, %v1137
      %v1139 = vrot.slane %v1138, 2
      %v1140 = vadd.f32 %v1138, %v1139
      %v1141 = vrot.slane %v1140, 1
      %v1142 = vadd.f32 %v1140, %v1141
      %v1143 = vsel %vm509, %v1068, 0.0
      %v1144 = vrot.slane %v1143, 4
      %v1145 = vadd.f32 %v1143, %v1144
      %v1146 = vrot.slane %v1145, 2
      %v1147 = vadd.f32 %v1145, %v1146
      %v1148 = vrot.slane %v1147, 1
      %v1149 = vadd.f32 %v1147, %v1148
      %v1150 = vsel %vm509, %v1053, 0.0
      %v1151 = vrot.slane %v1150, 4
      %v1152 = vadd.f32 %v1150, %v1151
      %v1153 = vrot.slane %v1152, 2
      %v1154 = vadd.f32 %v1152, %v1153
      %v1155 = vrot.slane %v1154, 1
      %v1156 = vadd.f32 %v1154, %v1155
      %v1157 = vsel %vm509, %v1069, 0.0
      %v1158 = vrot.slane %v1157, 4
      %v1159 = vadd.f32 %v1157, %v1158
      %v1160 = vrot.slane %v1159, 2
      %v1161 = vadd.f32 %v1159, %v1160
      %v1162 = vrot.slane %v1161, 1
      %v1163 = vadd.f32 %v1161, %v1162
      %v1164 = vsel %vm509, %v1054, 0.0
      %v1165 = vrot.slane %v1164, 4
      %v1166 = vadd.f32 %v1164, %v1165
      %v1167 = vrot.slane %v1166, 2
      %v1168 = vadd.f32 %v1166, %v1167
      %v1169 = vrot.slane %v1168, 1
      %v1170 = vadd.f32 %v1168, %v1169
      %v1171 = vsel %vm509, %v1070, 0.0
      %v1172 = vrot.slane %v1171, 4
      %v1173 = vadd.f32 %v1171, %v1172
      %v1174 = vrot.slane %v1173, 2
      %v1175 = vadd.f32 %v1173, %v1174
      %v1176 = vrot.slane %v1175, 1
      %v1177 = vadd.f32 %v1175, %v1176
      %v1178 = vsel %vm509, %v1055, 0.0
      %v1179 = vrot.slane %v1178, 4
      %v1180 = vadd.f32 %v1178, %v1179
      %v1181 = vrot.slane %v1180, 2
      %v1182 = vadd.f32 %v1180, %v1181
      %v1183 = vrot.slane %v1182, 1
      %v1184 = vadd.f32 %v1182, %v1183
      %v1185 = vsel %vm509, %v1071, 0.0
      %v1186 = vrot.slane %v1185, 4
      %v1187 = vadd.f32 %v1185, %v1186
      %v1188 = vrot.slane %v1187, 2
      %v1189 = vadd.f32 %v1187, %v1188
      %v1190 = vrot.slane %v1189, 1
      %v1191 = vadd.f32 %v1189, %v1190
      %v1192 = vld [vmem:[#allocation2] sm:$0xff]
      %v1193 = vld [vmem:[#allocation2 + $0x8] sm:$0xff]
      %v1194 = vld [vmem:[#allocation2 + $0x10] sm:$0xff]
      %v1195 = vld [vmem:[#allocation2 + $0x18] sm:$0xff]
      %v1196 = vld [vmem:[#allocation2 + $0x20] sm:$0xff]
      %v1197 = vld [vmem:[#allocation2 + $0x28] sm:$0xff]
      %v1198 = vld [vmem:[#allocation2 + $0x30] sm:$0xff]
      %v1199 = vld [vmem:[#allocation2 + $0x38] sm:$0xff]
      %v1200 = vmul.f32 %v862, %v1032
      %v1201 = vmul.f32 %v863, %v1033
      %v1202 = vmul.f32 %v864, %v1034
      %v1203 = vmul.f32 %v865, %v1035
      %v1204 = vmul.f32 %v866, %v1036
      %v1205 = vmul.f32 %v867, %v1037
      %v1206 = vmul.f32 %v868, %v1038
      %v1207 = vmul.f32 %v869, %v1039
      %v1208 = vadd.f32 %v1192, %v1200
      %v1209 = vadd.f32 %v1193, %v1201
      %v1210 = vadd.f32 %v1194, %v1202
      %v1211 = vadd.f32 %v1195, %v1203
      %v1212 = vadd.f32 %v1196, %v1204
      %v1213 = vadd.f32 %v1197, %v1205
      %v1214 = vadd.f32 %v1198, %v1206
      %v1215 = vadd.f32 %v1199, %v1207
      %1216 = vst [vmem:[#allocation2] sm:$0xff] %v1208
      %1217 = vst [vmem:[#allocation2 + $0x8] sm:$0xff] %v1209
      %1218 = vst [vmem:[#allocation2 + $0x10] sm:$0xff] %v1210
      %1219 = vst [vmem:[#allocation2 + $0x18] sm:$0xff] %v1211
      %1220 = vst [vmem:[#allocation2 + $0x20] sm:$0xff] %v1212
      %1221 = vst [vmem:[#allocation2 + $0x28] sm:$0xff] %v1213
      %1222 = vst [vmem:[#allocation2 + $0x30] sm:$0xff] %v1214
      %1223 = vst [vmem:[#allocation2 + $0x38] sm:$0xff] %v1215
      %v1224 = vld [vmem:[#allocation4] sm:$0xff]
      %v1225 = vld [vmem:[#allocation4 + $0x8] sm:$0xff]
      %v1226 = vld [vmem:[#allocation4 + $0x10] sm:$0xff]
      %v1227 = vld [vmem:[#allocation4 + $0x18] sm:$0xff]
      %v1228 = vld [vmem:[#allocation4 + $0x20] sm:$0xff]
      %v1229 = vld [vmem:[#allocation4 + $0x28] sm:$0xff]
      %v1230 = vld [vmem:[#allocation4 + $0x30] sm:$0xff]
      %v1231 = vld [vmem:[#allocation4 + $0x38] sm:$0xff]
      %v1232 = vadd.f32 %v1224, %v1032
      %v1233 = vadd.f32 %v1225, %v1033
      %v1234 = vadd.f32 %v1226, %v1034
      %v1235 = vadd.f32 %v1227, %v1035
      %v1236 = vadd.f32 %v1228, %v1036
      %v1237 = vadd.f32 %v1229, %v1037
      %v1238 = vadd.f32 %v1230, %v1038
      %v1239 = vadd.f32 %v1231, %v1039
      %1240 = vst [vmem:[#allocation4] sm:$0xff] %v1232
      %1241 = vst [vmem:[#allocation4 + $0x8] sm:$0xff] %v1233
      %1242 = vst [vmem:[#allocation4 + $0x10] sm:$0xff] %v1234
      %1243 = vst [vmem:[#allocation4 + $0x18] sm:$0xff] %v1235
      %1244 = vst [vmem:[#allocation4 + $0x20] sm:$0xff] %v1236
      %1245 = vst [vmem:[#allocation4 + $0x28] sm:$0xff] %v1237
      %1246 = vst [vmem:[#allocation4 + $0x30] sm:$0xff] %v1238
      %1247 = vst [vmem:[#allocation4 + $0x38] sm:$0xff] %v1239
      %v1248 = vld [vmem:[#allocation6] sm:$0xff]
      %v1249 = vld [vmem:[#allocation6 + $0x8] sm:$0xff]
      %v1250 = vld [vmem:[#allocation6 + $0x10] sm:$0xff]
      %v1251 = vld [vmem:[#allocation6 + $0x18] sm:$0xff]
      %v1252 = vld [vmem:[#allocation6 + $0x20] sm:$0xff]
      %v1253 = vld [vmem:[#allocation6 + $0x28] sm:$0xff]
      %v1254 = vld [vmem:[#allocation6 + $0x30] sm:$0xff]
      %v1255 = vld [vmem:[#allocation6 + $0x38] sm:$0xff]
      %v1256 = vld [vmem:[#allocation6 + $0x40] sm:$0xff]
      %v1257 = vld [vmem:[#allocation6 + $0x48] sm:$0xff]
      %v1258 = vld [vmem:[#allocation6 + $0x50] sm:$0xff]
      %v1259 = vld [vmem:[#allocation6 + $0x58] sm:$0xff]
      %v1260 = vld [vmem:[#allocation6 + $0x60] sm:$0xff]
      %v1261 = vld [vmem:[#allocation6 + $0x68] sm:$0xff]
      %v1262 = vld [vmem:[#allocation6 + $0x70] sm:$0xff]
      %v1263 = vld [vmem:[#allocation6 + $0x78] sm:$0xff]
      %v1264 = vlaneseq
      %v1265 = vshrl.u32 %v1264, 7
      %v1266 = vsub.s32 1, %v1265
      %v1267 = vrot.slane %v1000, %v1266
      %v1268 = vlaneseq
      %v1269 = vshrl.u32 %v1268, 7
      %v1270 = vsub.s32 1, %v1269
      %v1271 = vrot.slane %v1001, %v1270
      %v1272 = vlaneseq
      %v1273 = vshrl.u32 %v1272, 7
      %v1274 = vsub.s32 1, %v1273
      %v1275 = vrot.slane %v1002, %v1274
      %v1276 = vlaneseq
      %v1277 = vshrl.u32 %v1276, 7
      %v1278 = vsub.s32 1, %v1277
      %v1279 = vrot.slane %v1003, %v1278
      %v1280 = vlaneseq
      %v1281 = vshrl.u32 %v1280, 7
      %v1282 = vsub.s32 1, %v1281
      %v1283 = vrot.slane %v1004, %v1282
      %v1284 = vlaneseq
      %v1285 = vshrl.u32 %v1284, 7
      %v1286 = vsub.s32 1, %v1285
      %v1287 = vrot.slane %v1005, %v1286
      %v1288 = vlaneseq
      %v1289 = vshrl.u32 %v1288, 7
      %v1290 = vsub.s32 1, %v1289
      %v1291 = vrot.slane %v1006, %v1290
      %v1292 = vlaneseq
      %v1293 = vshrl.u32 %v1292, 7
      %v1294 = vsub.s32 1, %v1293
      %v1295 = vrot.slane %v1007, %v1294
      %v1296 = vlaneseq
      %v1297 = vshrl.u32 %v1296, 7
      %v1298 = vsub.s32 1, %v1297
      %v1299 = vrot.slane %v1008, %v1298
      %v1300 = vlaneseq
      %v1301 = vshrl.u32 %v1300, 7
      %v1302 = vsub.s32 1, %v1301
      %v1303 = vrot.slane %v1009, %v1302
      %v1304 = vlaneseq
      %v1305 = vshrl.u32 %v1304, 7
      %v1306 = vsub.s32 1, %v1305
      %v1307 = vrot.slane %v1010, %v1306
      %v1308 = vlaneseq
      %v1309 = vshrl.u32 %v1308, 7
      %v1310 = vsub.s32 1, %v1309
      %v1311 = vrot.slane %v1011, %v1310
      %v1312 = vlaneseq
      %v1313 = vshrl.u32 %v1312, 7
      %v1314 = vsub.s32 1, %v1313
      %v1315 = vrot.slane %v1012, %v1314
      %v1316 = vlaneseq
      %v1317 = vshrl.u32 %v1316, 7
      %v1318 = vsub.s32 1, %v1317
      %v1319 = vrot.slane %v1013, %v1318
      %v1320 = vlaneseq
      %v1321 = vshrl.u32 %v1320, 7
      %v1322 = vsub.s32 1, %v1321
      %v1323 = vrot.slane %v1014, %v1322
      %v1324 = vlaneseq
      %v1325 = vshrl.u32 %v1324, 7
      %v1326 = vsub.s32 1, %v1325
      %v1327 = vrot.slane %v1015, %v1326
      %v1328 = vmul.f32 %v467, %v1267
      %v1329 = vmul.f32 %v468, %v1271
      %v1330 = vmul.f32 %v469, %v1275
      %v1331 = vmul.f32 %v470, %v1279
      %v1332 = vmul.f32 %v471, %v1283
      %v1333 = vmul.f32 %v472, %v1287
      %v1334 = vmul.f32 %v473, %v1291
      %v1335 = vmul.f32 %v474, %v1295
      %v1336 = vmul.f32 %v475, %v1299
      %v1337 = vmul.f32 %v476, %v1303
      %v1338 = vmul.f32 %v477, %v1307
      %v1339 = vmul.f32 %v478, %v1311
      %v1340 = vmul.f32 %v479, %v1315
      %v1341 = vmul.f32 %v480, %v1319
      %v1342 = vmul.f32 %v481, %v1323
      %v1343 = vmul.f32 %v482, %v1327
      %v1344 = vadd.f32 %v1248, %v1328
      %v1345 = vadd.f32 %v1249, %v1329
      %v1346 = vadd.f32 %v1250, %v1330
      %v1347 = vadd.f32 %v1251, %v1331
      %v1348 = vadd.f32 %v1252, %v1332
      %v1349 = vadd.f32 %v1253, %v1333
      %v1350 = vadd.f32 %v1254, %v1334
      %v1351 = vadd.f32 %v1255, %v1335
      %v1352 = vadd.f32 %v1256, %v1336
      %v1353 = vadd.f32 %v1257, %v1337
      %v1354 = vadd.f32 %v1258, %v1338
      %v1355 = vadd.f32 %v1259, %v1339
      %v1356 = vadd.f32 %v1260, %v1340
      %v1357 = vadd.f32 %v1261, %v1341
      %v1358 = vadd.f32 %v1262, %v1342
      %v1359 = vadd.f32 %v1263, %v1343
      %1360 = vst [vmem:[#allocation6] sm:$0xff] %v1344
      %1361 = vst [vmem:[#allocation6 + $0x8] sm:$0xff] %v1345
      %1362 = vst [vmem:[#allocation6 + $0x10] sm:$0xff] %v1346
      %1363 = vst [vmem:[#allocation6 + $0x18] sm:$0xff] %v1347
      %1364 = vst [vmem:[#allocation6 + $0x20] sm:$0xff] %v1348
      %1365 = vst [vmem:[#allocation6 + $0x28] sm:$0xff] %v1349
      %1366 = vst [vmem:[#allocation6 + $0x30] sm:$0xff] %v1350
      %1367 = vst [vmem:[#allocation6 + $0x38] sm:$0xff] %v1351
      %1368 = vst [vmem:[#allocation6 + $0x40] sm:$0xff] %v1352
      %1369 = vst [vmem:[#allocation6 + $0x48] sm:$0xff] %v1353
      %1370 = vst [vmem:[#allocation6 + $0x50] sm:$0xff] %v1354
      %1371 = vst [vmem:[#allocation6 + $0x58] sm:$0xff] %v1355
      %1372 = vst [vmem:[#allocation6 + $0x60] sm:$0xff] %v1356
      %1373 = vst [vmem:[#allocation6 + $0x68] sm:$0xff] %v1357
      %1374 = vst [vmem:[#allocation6 + $0x70] sm:$0xff] %v1358
      %1375 = vst [vmem:[#allocation6 + $0x78] sm:$0xff] %v1359
      %v1376 = vld [vmem:[#allocation3] sm:$0xff]
      %v1377 = vld [vmem:[#allocation3 + $0x8] sm:$0xff]
      %v1378 = vld [vmem:[#allocation3 + $0x10] sm:$0xff]
      %v1379 = vld [vmem:[#allocation3 + $0x18] sm:$0xff]
      %v1380 = vld [vmem:[#allocation3 + $0x20] sm:$0xff]
      %v1381 = vld [vmem:[#allocation3 + $0x28] sm:$0xff]
      %v1382 = vld [vmem:[#allocation3 + $0x30] sm:$0xff]
      %v1383 = vld [vmem:[#allocation3 + $0x38] sm:$0xff]
      %v1384 = vadd.f32 %v1376, %v862
      %v1385 = vadd.f32 %v1377, %v863
      %v1386 = vadd.f32 %v1378, %v864
      %v1387 = vadd.f32 %v1379, %v865
      %v1388 = vadd.f32 %v1380, %v866
      %v1389 = vadd.f32 %v1381, %v867
      %v1390 = vadd.f32 %v1382, %v868
      %v1391 = vadd.f32 %v1383, %v869
      %1392 = vst [vmem:[#allocation3] sm:$0xff] %v1384
      %1393 = vst [vmem:[#allocation3 + $0x8] sm:$0xff] %v1385
      %1394 = vst [vmem:[#allocation3 + $0x10] sm:$0xff] %v1386
      %1395 = vst [vmem:[#allocation3 + $0x18] sm:$0xff] %v1387
      %1396 = vst [vmem:[#allocation3 + $0x20] sm:$0xff] %v1388
      %1397 = vst [vmem:[#allocation3 + $0x28] sm:$0xff] %v1389
      %1398 = vst [vmem:[#allocation3 + $0x30] sm:$0xff] %v1390
      %1399 = vst [vmem:[#allocation3 + $0x38] sm:$0xff] %v1391
      %v1400 = vld [vmem:[#allocation5] sm:$0xff]
      %v1401 = vld [vmem:[#allocation5 + $0x8] sm:$0xff]
      %v1402 = vsub.f32 %v1086, %v871
      %v1403 = vsub.f32 %v1093, %v873
      %v1404 = vsub.f32 %v1100, %v875
      %v1405 = vsub.f32 %v1107, %v877
      %v1406 = vsub.f32 %v1114, %v879
      %v1407 = vsub.f32 %v1121, %v881
      %v1408 = vsub.f32 %v1128, %v883
      %v1409 = vsub.f32 %v1135, %v885
      %v1410 = vsub.f32 %v1142, %v887
      %v1411 = vsub.f32 %v1149, %v889
      %v1412 = vsub.f32 %v1156, %v891
      %v1413 = vsub.f32 %v1163, %v893
      %v1414 = vsub.f32 %v1170, %v895
      %v1415 = vsub.f32 %v1177, %v897
      %v1416 = vsub.f32 %v1184, %v899
      %v1417 = vsub.f32 %v1191, %v901
      %v1434 = vcombine.low %v1402, %v1403
      %v1435 = vcombine.low %v1404, %v1405
      %v1436 = vcombine.low %v1406, %v1407
      %v1437 = vcombine.low %v1408, %v1409
      %v1439 = vunpack.c.l.s4 1966171168
      %v1440 = vunpack.c.0.s8 %v1439
      %v1441 = vlaneseq
      %v1442 = vshrl.u32 %v1441, 7
      %v1443 = vsub.s32 %v1440, %v1442
      %v1444 = vrot.slane %v1434, %v1443
      %v1446 = vunpack.c.l.s4 1966171168
      %v1447 = vunpack.c.0.s8 %v1446
      %v1448 = vlaneseq
      %v1449 = vshrl.u32 %v1448, 7
      %v1450 = vsub.s32 %v1447, %v1449
      %v1451 = vrot.slane %v1435, %v1450
      %v1453 = vunpack.c.l.s4 1966171168
      %v1454 = vunpack.c.0.s8 %v1453
      %v1455 = vlaneseq
      %v1456 = vshrl.u32 %v1455, 7
      %v1457 = vsub.s32 %v1454, %v1456
      %v1458 = vrot.slane %v1436, %v1457
      %v1460 = vunpack.c.l.s4 1966171168
      %v1461 = vunpack.c.0.s8 %v1460
      %v1462 = vlaneseq
      %v1463 = vshrl.u32 %v1462, 7
      %v1464 = vsub.s32 %v1461, %v1463
      %v1465 = vrot.slane %v1437, %v1464
      %v1466 = vcombine.low %v1444, %v1451
      %v1467 = vcombine.low %v1458, %v1465
      %v1469 = vunpack.c.l.s4 1966171168
      %v1470 = vunpack.c.0.s8 %v1469
      %v1471 = vlaneseq
      %v1472 = vshrl.u32 %v1471, 7
      %v1473 = vsub.s32 %v1470, %v1472
      %v1474 = vrot.slane %v1466, %v1473
      %v1476 = vunpack.c.l.s4 1966171168
      %v1477 = vunpack.c.0.s8 %v1476
      %v1478 = vlaneseq
      %v1479 = vshrl.u32 %v1478, 7
      %v1480 = vsub.s32 %v1477, %v1479
      %v1481 = vrot.slane %v1467, %v1480
      %v1482 = vcombine.low %v1474, %v1481
      %v1483 = vcombine.low %v1410, %v1411
      %v1484 = vcombine.low %v1412, %v1413
      %v1485 = vcombine.low %v1414, %v1415
      %v1486 = vcombine.low %v1416, %v1417
      %v1488 = vunpack.c.l.s4 1966171168
      %v1489 = vunpack.c.0.s8 %v1488
      %v1490 = vlaneseq
      %v1491 = vshrl.u32 %v1490, 7
      %v1492 = vsub.s32 %v1489, %v1491
      %v1493 = vrot.slane %v1483, %v1492
      %v1495 = vunpack.c.l.s4 1966171168
      %v1496 = vunpack.c.0.s8 %v1495
      %v1497 = vlaneseq
      %v1498 = vshrl.u32 %v1497, 7
      %v1499 = vsub.s32 %v1496, %v1498
      %v1500 = vrot.slane %v1484, %v1499
      %v1502 = vunpack.c.l.s4 1966171168
      %v1503 = vunpack.c.0.s8 %v1502
      %v1504 = vlaneseq
      %v1505 = vshrl.u32 %v1504, 7
      %v1506 = vsub.s32 %v1503, %v1505
      %v1507 = vrot.slane %v1485, %v1506
      %v1509 = vunpack.c.l.s4 1966171168
      %v1510 = vunpack.c.0.s8 %v1509
      %v1511 = vlaneseq
      %v1512 = vshrl.u32 %v1511, 7
      %v1513 = vsub.s32 %v1510, %v1512
      %v1514 = vrot.slane %v1486, %v1513
      %v1515 = vcombine.low %v1493, %v1500
      %v1516 = vcombine.low %v1507, %v1514
      %v1518 = vunpack.c.l.s4 1966171168
      %v1519 = vunpack.c.0.s8 %v1518
      %v1520 = vlaneseq
      %v1521 = vshrl.u32 %v1520, 7
      %v1522 = vsub.s32 %v1519, %v1521
      %v1523 = vrot.slane %v1515, %v1522
      %v1525 = vunpack.c.l.s4 1966171168
      %v1526 = vunpack.c.0.s8 %v1525
      %v1527 = vlaneseq
      %v1528 = vshrl.u32 %v1527, 7
      %v1529 = vsub.s32 %v1526, %v1528
      %v1530 = vrot.slane %v1516, %v1529
      %v1531 = vcombine.low %v1523, %v1530
      %v1534 = vadd.f32 %v1400, %v1482
      %v1535 = vadd.f32 %v1401, %v1531
      %1536 = vst [vmem:[#allocation5] sm:$0xff] %v1534
      %1537 = vst [vmem:[#allocation5 + $0x8] sm:$0xff] %v1535
      // Predicated region
      $region37: #{dc_and_ce_loss.2} parent=31 // pred_check
        %p1538 = pneg %p413
      $region38: #{dc_and_ce_loss.2} parent=31 // pred_check_branch
        %1540 = sbr.rel (%p1538) target = $region40
      $region39: #{dc_and_ce_loss.2} parent=31 // pred_region
        %v1541 = vld [vmem:[#allocation2] sm:$0xff]
        %v1542 = vld [vmem:[#allocation2 + $0x8] sm:$0xff]
        %v1543 = vld [vmem:[#allocation2 + $0x10] sm:$0xff]
        %v1544 = vld [vmem:[#allocation2 + $0x18] sm:$0xff]
        %v1545 = vld [vmem:[#allocation2 + $0x20] sm:$0xff]
        %v1546 = vld [vmem:[#allocation2 + $0x28] sm:$0xff]
        %v1547 = vld [vmem:[#allocation2 + $0x30] sm:$0xff]
        %v1548 = vld [vmem:[#allocation2 + $0x38] sm:$0xff]
        %v1557 = vcombine.high %v1541, %v1541
        %v1558 = vcombine.high %v1542, %v1542
        %v1559 = vcombine.high %v1543, %v1543
        %v1560 = vcombine.high %v1544, %v1544
        %v1561 = vcombine.high %v1545, %v1545
        %v1562 = vcombine.high %v1546, %v1546
        %v1563 = vcombine.high %v1547, %v1547
        %v1564 = vcombine.high %v1548, %v1548
        %v1573 = vsel %vm509, %v1541, 0.0
        %v1574 = vsel %vm509, %v1557, 0.0
        %v1575 = vadd.f32 %v1573, %v1574
        %v1576 = vsel %vm509, %v1542, 0.0
        %v1577 = vadd.f32 %v1575, %v1576
        %v1578 = vsel %vm509, %v1558, 0.0
        %v1579 = vadd.f32 %v1577, %v1578
        %v1580 = vsel %vm509, %v1543, 0.0
        %v1581 = vadd.f32 %v1579, %v1580
        %v1582 = vsel %vm509, %v1559, 0.0
        %v1583 = vadd.f32 %v1581, %v1582
        %v1584 = vsel %vm509, %v1544, 0.0
        %v1585 = vadd.f32 %v1583, %v1584
        %v1586 = vsel %vm509, %v1560, 0.0
        %v1587 = vadd.f32 %v1585, %v1586
        %v1588 = vsel %vm509, %v1545, 0.0
        %v1589 = vadd.f32 %v1587, %v1588
        %v1590 = vsel %vm509, %v1561, 0.0
        %v1591 = vadd.f32 %v1589, %v1590
        %v1592 = vsel %vm509, %v1546, 0.0
        %v1593 = vadd.f32 %v1591, %v1592
        %v1594 = vsel %vm509, %v1562, 0.0
        %v1595 = vadd.f32 %v1593, %v1594
        %v1596 = vsel %vm509, %v1547, 0.0
        %v1597 = vadd.f32 %v1595, %v1596
        %v1598 = vsel %vm509, %v1563, 0.0
        %v1599 = vadd.f32 %v1597, %v1598
        %v1600 = vsel %vm509, %v1548, 0.0
        %v1601 = vadd.f32 %v1599, %v1600
        %v1602 = vsel %vm509, %v1564, 0.0
        %v1603 = vadd.f32 %v1601, %v1602
        %1604 = vadd.xlane.f32.xlu0 %v1603
        %v1605 = vpop.xlane.xlu0 %1604
        %vm1606 = vcmask 3072
        %1607 = vst.msk [vmem:[%s397] sm:$0xf] %vm1606, %v1605
        %v1608 = vld [vmem:[#allocation3] sm:$0xff]
        %v1609 = vld [vmem:[#allocation3 + $0x8] sm:$0xff]
        %v1610 = vld [vmem:[#allocation3 + $0x10] sm:$0xff]
        %v1611 = vld [vmem:[#allocation3 + $0x18] sm:$0xff]
        %v1612 = vld [vmem:[#allocation3 + $0x20] sm:$0xff]
        %v1613 = vld [vmem:[#allocation3 + $0x28] sm:$0xff]
        %v1614 = vld [vmem:[#allocation3 + $0x30] sm:$0xff]
        %v1615 = vld [vmem:[#allocation3 + $0x38] sm:$0xff]
        %v1624 = vcombine.high %v1608, %v1608
        %v1625 = vcombine.high %v1609, %v1609
        %v1626 = vcombine.high %v1610, %v1610
        %v1627 = vcombine.high %v1611, %v1611
        %v1628 = vcombine.high %v1612, %v1612
        %v1629 = vcombine.high %v1613, %v1613
        %v1630 = vcombine.high %v1614, %v1614
        %v1631 = vcombine.high %v1615, %v1615
        %v1640 = vsel %vm509, %v1608, 0.0
        %v1641 = vsel %vm509, %v1624, 0.0
        %v1642 = vadd.f32 %v1640, %v1641
        %v1643 = vsel %vm509, %v1609, 0.0
        %v1644 = vadd.f32 %v1642, %v1643
        %v1645 = vsel %vm509, %v1625, 0.0
        %v1646 = vadd.f32 %v1644, %v1645
        %v1647 = vsel %vm509, %v1610, 0.0
        %v1648 = vadd.f32 %v1646, %v1647
        %v1649 = vsel %vm509, %v1626, 0.0
        %v1650 = vadd.f32 %v1648, %v1649
        %v1651 = vsel %vm509, %v1611, 0.0
        %v1652 = vadd.f32 %v1650, %v1651
        %v1653 = vsel %vm509, %v1627, 0.0
        %v1654 = vadd.f32 %v1652, %v1653
        %v1655 = vsel %vm509, %v1612, 0.0
        %v1656 = vadd.f32 %v1654, %v1655
        %v1657 = vsel %vm509, %v1628, 0.0
        %v1658 = vadd.f32 %v1656, %v1657
        %v1659 = vsel %vm509, %v1613, 0.0
        %v1660 = vadd.f32 %v1658, %v1659
        %v1661 = vsel %vm509, %v1629, 0.0
        %v1662 = vadd.f32 %v1660, %v1661
        %v1663 = vsel %vm509, %v1614, 0.0
        %v1664 = vadd.f32 %v1662, %v1663
        %v1665 = vsel %vm509, %v1630, 0.0
        %v1666 = vadd.f32 %v1664, %v1665
        %v1667 = vsel %vm509, %v1615, 0.0
        %v1668 = vadd.f32 %v1666, %v1667
        %v1669 = vsel %vm509, %v1631, 0.0
        %v1670 = vadd.f32 %v1668, %v1669
        %1671 = vadd.xlane.f32.xlu0 %v1670
        %v1672 = vpop.xlane.xlu0 %1671
        %1673 = vst.msk [vmem:[%s401] sm:$0xf] %vm1606, %v1672
        %v1674 = vld [vmem:[#allocation4] sm:$0xff]
        %v1675 = vld [vmem:[#allocation4 + $0x8] sm:$0xff]
        %v1676 = vld [vmem:[#allocation4 + $0x10] sm:$0xff]
        %v1677 = vld [vmem:[#allocation4 + $0x18] sm:$0xff]
        %v1678 = vld [vmem:[#allocation4 + $0x20] sm:$0xff]
        %v1679 = vld [vmem:[#allocation4 + $0x28] sm:$0xff]
        %v1680 = vld [vmem:[#allocation4 + $0x30] sm:$0xff]
        %v1681 = vld [vmem:[#allocation4 + $0x38] sm:$0xff]
        %v1690 = vcombine.high %v1674, %v1674
        %v1691 = vcombine.high %v1675, %v1675
        %v1692 = vcombine.high %v1676, %v1676
        %v1693 = vcombine.high %v1677, %v1677
        %v1694 = vcombine.high %v1678, %v1678
        %v1695 = vcombine.high %v1679, %v1679
        %v1696 = vcombine.high %v1680, %v1680
        %v1697 = vcombine.high %v1681, %v1681
        %v1706 = vsel %vm509, %v1674, 0.0
        %v1707 = vsel %vm509, %v1690, 0.0
        %v1708 = vadd.f32 %v1706, %v1707
        %v1709 = vsel %vm509, %v1675, 0.0
        %v1710 = vadd.f32 %v1708, %v1709
        %v1711 = vsel %vm509, %v1691, 0.0
        %v1712 = vadd.f32 %v1710, %v1711
        %v1713 = vsel %vm509, %v1676, 0.0
        %v1714 = vadd.f32 %v1712, %v1713
        %v1715 = vsel %vm509, %v1692, 0.0
        %v1716 = vadd.f32 %v1714, %v1715
        %v1717 = vsel %vm509, %v1677, 0.0
        %v1718 = vadd.f32 %v1716, %v1717
        %v1719 = vsel %vm509, %v1693, 0.0
        %v1720 = vadd.f32 %v1718, %v1719
        %v1721 = vsel %vm509, %v1678, 0.0
        %v1722 = vadd.f32 %v1720, %v1721
        %v1723 = vsel %vm509, %v1694, 0.0
        %v1724 = vadd.f32 %v1722, %v1723
        %v1725 = vsel %vm509, %v1679, 0.0
        %v1726 = vadd.f32 %v1724, %v1725
        %v1727 = vsel %vm509, %v1695, 0.0
        %v1728 = vadd.f32 %v1726, %v1727
        %v1729 = vsel %vm509, %v1680, 0.0
        %v1730 = vadd.f32 %v1728, %v1729
        %v1731 = vsel %vm509, %v1696, 0.0
        %v1732 = vadd.f32 %v1730, %v1731
        %v1733 = vsel %vm509, %v1681, 0.0
        %v1734 = vadd.f32 %v1732, %v1733
        %v1735 = vsel %vm509, %v1697, 0.0
        %v1736 = vadd.f32 %v1734, %v1735
        %1737 = vadd.xlane.f32.xlu0 %v1736
        %v1738 = vpop.xlane.xlu0 %1737
        %1739 = vst.msk [vmem:[%s405] sm:$0xf] %vm1606, %v1738
        %v1740 = vld [vmem:[#allocation5] sm:$0xff]
        %v1741 = vld [vmem:[#allocation5 + $0x8] sm:$0xff]
        %v1744 = vlaneseq
        %v1745 = vshrl.u32 %v1744, 7
        %v1746 = vsub.s32 0, %v1745
        %v1747 = vrot.slane %v1740, %v1746
        %v1748 = vlaneseq
        %v1749 = vshrl.u32 %v1748, 7
        %v1750 = vsub.s32 1, %v1749
        %v1751 = vrot.slane %v1740, %v1750
        %v1752 = vlaneseq
        %v1753 = vshrl.u32 %v1752, 7
        %v1754 = vsub.s32 2, %v1753
        %v1755 = vrot.slane %v1740, %v1754
        %v1756 = vlaneseq
        %v1757 = vshrl.u32 %v1756, 7
        %v1758 = vsub.s32 3, %v1757
        %v1759 = vrot.slane %v1740, %v1758
        %v1760 = vlaneseq
        %v1761 = vshrl.u32 %v1760, 7
        %v1762 = vsub.s32 4, %v1761
        %v1763 = vrot.slane %v1740, %v1762
        %v1764 = vlaneseq
        %v1765 = vshrl.u32 %v1764, 7
        %v1766 = vsub.s32 5, %v1765
        %v1767 = vrot.slane %v1740, %v1766
        %v1768 = vlaneseq
        %v1769 = vshrl.u32 %v1768, 7
        %v1770 = vsub.s32 6, %v1769
        %v1771 = vrot.slane %v1740, %v1770
        %v1772 = vlaneseq
        %v1773 = vshrl.u32 %v1772, 7
        %v1774 = vsub.s32 7, %v1773
        %v1775 = vrot.slane %v1740, %v1774
        %v1776 = vlaneseq
        %v1777 = vshrl.u32 %v1776, 7
        %v1778 = vsub.s32 0, %v1777
        %v1779 = vrot.slane %v1741, %v1778
        %v1780 = vlaneseq
        %v1781 = vshrl.u32 %v1780, 7
        %v1782 = vsub.s32 1, %v1781
        %v1783 = vrot.slane %v1741, %v1782
        %v1784 = vlaneseq
        %v1785 = vshrl.u32 %v1784, 7
        %v1786 = vsub.s32 2, %v1785
        %v1787 = vrot.slane %v1741, %v1786
        %v1788 = vlaneseq
        %v1789 = vshrl.u32 %v1788, 7
        %v1790 = vsub.s32 3, %v1789
        %v1791 = vrot.slane %v1741, %v1790
        %v1792 = vlaneseq
        %v1793 = vshrl.u32 %v1792, 7
        %v1794 = vsub.s32 4, %v1793
        %v1795 = vrot.slane %v1741, %v1794
        %v1796 = vlaneseq
        %v1797 = vshrl.u32 %v1796, 7
        %v1798 = vsub.s32 5, %v1797
        %v1799 = vrot.slane %v1741, %v1798
        %v1800 = vlaneseq
        %v1801 = vshrl.u32 %v1800, 7
        %v1802 = vsub.s32 6, %v1801
        %v1803 = vrot.slane %v1741, %v1802
        %v1804 = vlaneseq
        %v1805 = vshrl.u32 %v1804, 7
        %v1806 = vsub.s32 7, %v1805
        %v1807 = vrot.slane %v1741, %v1806
        %vm1824 = vcmask 1040384
        %v1825 = vsel %vm1824, %v1747, 0.0
        %v1826 = vsel %vm1824, %v1751, 0.0
        %v1827 = vadd.f32 %v1825, %v1826
        %v1828 = vsel %vm1824, %v1755, 0.0
        %v1829 = vadd.f32 %v1827, %v1828
        %v1830 = vsel %vm1824, %v1759, 0.0
        %v1831 = vadd.f32 %v1829, %v1830
        %v1832 = vsel %vm1824, %v1763, 0.0
        %v1833 = vadd.f32 %v1831, %v1832
        %v1834 = vsel %vm1824, %v1767, 0.0
        %v1835 = vadd.f32 %v1833, %v1834
        %v1836 = vsel %vm1824, %v1771, 0.0
        %v1837 = vadd.f32 %v1835, %v1836
        %v1838 = vsel %vm1824, %v1775, 0.0
        %v1839 = vadd.f32 %v1837, %v1838
        %v1840 = vsel %vm1824, %v1779, 0.0
        %v1841 = vadd.f32 %v1839, %v1840
        %v1842 = vsel %vm1824, %v1783, 0.0
        %v1843 = vadd.f32 %v1841, %v1842
        %v1844 = vsel %vm1824, %v1787, 0.0
        %v1845 = vadd.f32 %v1843, %v1844
        %v1846 = vsel %vm1824, %v1791, 0.0
        %v1847 = vadd.f32 %v1845, %v1846
        %v1848 = vsel %vm1824, %v1795, 0.0
        %v1849 = vadd.f32 %v1847, %v1848
        %v1850 = vsel %vm1824, %v1799, 0.0
        %v1851 = vadd.f32 %v1849, %v1850
        %v1852 = vsel %vm1824, %v1803, 0.0
        %v1853 = vadd.f32 %v1851, %v1852
        %v1854 = vsel %vm1824, %v1807, 0.0
        %v1855 = vadd.f32 %v1853, %v1854
        %1856 = vadd.xlane.f32.xlu0 %v1855
        %v1857 = vpop.xlane.xlu0 %1856
        %vm1858 = vcmask 0
        %1859 = vst.msk [vmem:[%s408] sm:$0x1] %vm1858, %v1857
        %v1860 = vld [vmem:[#allocation6] sm:$0xff]
        %v1861 = vld [vmem:[#allocation6 + $0x8] sm:$0xff]
        %v1862 = vld [vmem:[#allocation6 + $0x10] sm:$0xff]
        %v1863 = vld [vmem:[#allocation6 + $0x18] sm:$0xff]
        %v1864 = vld [vmem:[#allocation6 + $0x20] sm:$0xff]
        %v1865 = vld [vmem:[#allocation6 + $0x28] sm:$0xff]
        %v1866 = vld [vmem:[#allocation6 + $0x30] sm:$0xff]
        %v1867 = vld [vmem:[#allocation6 + $0x38] sm:$0xff]
        %v1868 = vld [vmem:[#allocation6 + $0x40] sm:$0xff]
        %v1869 = vld [vmem:[#allocation6 + $0x48] sm:$0xff]
        %v1870 = vld [vmem:[#allocation6 + $0x50] sm:$0xff]
        %v1871 = vld [vmem:[#allocation6 + $0x58] sm:$0xff]
        %v1872 = vld [vmem:[#allocation6 + $0x60] sm:$0xff]
        %v1873 = vld [vmem:[#allocation6 + $0x68] sm:$0xff]
        %v1874 = vld [vmem:[#allocation6 + $0x70] sm:$0xff]
        %v1875 = vld [vmem:[#allocation6 + $0x78] sm:$0xff]
        %v1876 = vadd.f32 %v1860, %v1861
        %v1877 = vadd.f32 %v1876, %v1862
        %v1878 = vadd.f32 %v1877, %v1863
        %v1879 = vadd.f32 %v1878, %v1864
        %v1880 = vadd.f32 %v1879, %v1865
        %v1881 = vadd.f32 %v1880, %v1866
        %v1882 = vadd.f32 %v1881, %v1867
        %v1883 = vadd.f32 %v1882, %v1868
        %v1884 = vadd.f32 %v1883, %v1869
        %v1885 = vadd.f32 %v1884, %v1870
        %v1886 = vadd.f32 %v1885, %v1871
        %v1887 = vadd.f32 %v1886, %v1872
        %v1888 = vadd.f32 %v1887, %v1873
        %v1889 = vadd.f32 %v1888, %v1874
        %v1890 = vadd.f32 %v1889, %v1875
        %1891 = vadd.xlane.f32.xlu0 %v1890
        %v1892 = vpop.xlane.xlu0 %1891
        %vm1893 = vcmask 7168
        %1894 = vst.msk [vmem:[%s412] sm:$0xff] %vm1893, %v1892
      $region40: #{dc_and_ce_loss.2} parent=31 // pred_fallthru
        _
      %p1895 = scmp.lt.s32.totalorder %s23, 1
      %s1896 = scalar_select %p1895, %s23, 1
      %s1897 = smul.addr %s1896, 4
      %s1898 = scalar_lea.vmem %s3, %s1897
      %p1899 = scmp.lt.s32.totalorder %s23, 1
      %s1900 = scalar_select %p1899, %s23, 1
      %s1901 = smul.addr %s1900, 4
      %s1902 = scalar_lea.vmem %s4, %s1901
      %p1903 = scmp.lt.s32.totalorder %s23, 1
      %s1904 = scalar_select %p1903, %s23, 1
      %s1905 = smul.addr %s1904, 4
      %s1906 = scalar_lea.vmem %s5, %s1905
      %p1907 = scmp.lt.s32.totalorder %s23, 1
      %s1908 = scalar_select %p1907, %s23, 1
      %s1909 = scalar_lea.vmem %s6, %s1908
      %p1910 = scmp.lt.s32.totalorder %s23, 1
      %s1911 = scalar_select %p1910, %s23, 1
      %s1912 = smul.addr %s1911, 8
      %s1913 = scalar_lea.vmem %s7, %s1912
      // Predicated region
      $region41: #{dc_and_ce_loss.2} parent=31 // pred_check
        %p1914 = pneg %p133
      $region42: #{dc_and_ce_loss.2} parent=31 // pred_check_branch
        %1916 = sbr.rel (%p1914) target = $region44
      $region43: #{dc_and_ce_loss.2} parent=31 // pred_region
        _
      $region44: #{dc_and_ce_loss.2} parent=31 // pred_fallthru
        _
      // Predicated region
      $region45: #{dc_and_ce_loss.2} parent=31 // pred_check
        %p1917 = pneg %p159
      $region46: #{dc_and_ce_loss.2} parent=31 // pred_check_branch
        %1919 = sbr.rel (%p1917) target = $region48
      $region47: #{dc_and_ce_loss.2} parent=31 // pred_region
        _
      $region48: #{dc_and_ce_loss.2} parent=31 // pred_fallthru
        _
      // Predicated region
      $region49: #{dc_and_ce_loss.2} parent=31 // pred_check
        %p1920 = pneg %p185
      $region50: #{dc_and_ce_loss.2} parent=31 // pred_check_branch
        %1922 = sbr.rel (%p1920) target = $region52
      $region51: #{dc_and_ce_loss.2} parent=31 // pred_region
        _
      $region52: #{dc_and_ce_loss.2} parent=31 // pred_fallthru
        _
      // Predicated region
      $region53: #{dc_and_ce_loss.2} parent=31 // pred_check
        %p1923 = pneg %p211
      $region54: #{dc_and_ce_loss.2} parent=31 // pred_check_branch
        %1925 = sbr.rel (%p1923) target = $region56
      $region55: #{dc_and_ce_loss.2} parent=31 // pred_region
        _
      $region56: #{dc_and_ce_loss.2} parent=31 // pred_fallthru
        _
      // Predicated region
      $region57: #{dc_and_ce_loss.2} parent=31 // pred_check
        %p1926 = pneg %p237
      $region58: #{dc_and_ce_loss.2} parent=31 // pred_check_branch
        %1928 = sbr.rel (%p1926) target = $region60
      $region59: #{dc_and_ce_loss.2} parent=31 // pred_region
        _
      $region60: #{dc_and_ce_loss.2} parent=31 // pred_fallthru
        _
    $region32: #{dc_and_ce_loss.2} parent=5 // pred_fallthru
      _
    %p1929 = scmp.le.s32.totalorder 2, %s14
    // Predicated region
    $region61: #{dc_and_ce_loss.2} parent=5 // pred_check
      %p1930 = pneg %p1929
    $region62: #{dc_and_ce_loss.2} parent=5 // pred_check_branch
      %1932 = sbr.rel (%p1930) target = $region64
    $region63: #{dc_and_ce_loss.2} parent=5 // pred_region
      %s1933 = ssub.s32 %s14, 2
      // Predicated region
      $region65: #{dc_and_ce_loss.2} parent=63 // pred_check
        %p1934 = pneg %p139
      $region66: #{dc_and_ce_loss.2} parent=63 // pred_check_branch
        %1936 = sbr.rel (%p1934) target = $region68
      $region67: #{dc_and_ce_loss.2} parent=63 // pred_region
        %p1937 = scmp.lt.s32.totalorder %s25, 1
        %s1938 = scalar_select %p1937, %s25, 1
        %s1939 = smul.addr %s1938, 4
        %s1940 = scalar_lea.vmem %s3, %s1939
      $region68: #{dc_and_ce_loss.2} parent=63 // pred_fallthru
        _
      // Predicated region
      $region69: #{dc_and_ce_loss.2} parent=63 // pred_check
        %p1941 = pneg %p165
      $region70: #{dc_and_ce_loss.2} parent=63 // pred_check_branch
        %1943 = sbr.rel (%p1941) target = $region72
      $region71: #{dc_and_ce_loss.2} parent=63 // pred_region
        %p1944 = scmp.lt.s32.totalorder %s25, 1
        %s1945 = scalar_select %p1944, %s25, 1
        %s1946 = smul.addr %s1945, 4
        %s1947 = scalar_lea.vmem %s4, %s1946
      $region72: #{dc_and_ce_loss.2} parent=63 // pred_fallthru
        _
      // Predicated region
      $region73: #{dc_and_ce_loss.2} parent=63 // pred_check
        %p1948 = pneg %p191
      $region74: #{dc_and_ce_loss.2} parent=63 // pred_check_branch
        %1950 = sbr.rel (%p1948) target = $region76
      $region75: #{dc_and_ce_loss.2} parent=63 // pred_region
        %p1951 = scmp.lt.s32.totalorder %s25, 1
        %s1952 = scalar_select %p1951, %s25, 1
        %s1953 = smul.addr %s1952, 4
        %s1954 = scalar_lea.vmem %s5, %s1953
      $region76: #{dc_and_ce_loss.2} parent=63 // pred_fallthru
        _
      // Predicated region
      $region77: #{dc_and_ce_loss.2} parent=63 // pred_check
        %p1955 = pneg %p217
      $region78: #{dc_and_ce_loss.2} parent=63 // pred_check_branch
        %1957 = sbr.rel (%p1955) target = $region80
      $region79: #{dc_and_ce_loss.2} parent=63 // pred_region
        %p1958 = scmp.lt.s32.totalorder %s25, 1
        %s1959 = scalar_select %p1958, %s25, 1
        %s1960 = scalar_lea.vmem %s6, %s1959
      $region80: #{dc_and_ce_loss.2} parent=63 // pred_fallthru
        _
      // Predicated region
      $region81: #{dc_and_ce_loss.2} parent=63 // pred_check
        %p1961 = pneg %p243
      $region82: #{dc_and_ce_loss.2} parent=63 // pred_check_branch
        %1963 = sbr.rel (%p1961) target = $region84
      $region83: #{dc_and_ce_loss.2} parent=63 // pred_region
        %p1964 = scmp.lt.s32.totalorder %s25, 1
        %s1965 = scalar_select %p1964, %s25, 1
        %s1966 = smul.addr %s1965, 8
        %s1967 = scalar_lea.vmem %s7, %s1966
      $region84: #{dc_and_ce_loss.2} parent=63 // pred_fallthru
        _
    $region64: #{dc_and_ce_loss.2} parent=5 // pred_fallthru
      _
  $region6: #{dc_and_ce_loss.2} parent=0 // loop_footer
    %s18 = sadd.s32 1, %s14
  $region7: #{dc_and_ce_loss.2} parent=0 // loop_footer_branch
    %13 = sbr.rel target = $region3
  $region8: #{dc_and_ce_loss.2} parent=0 // loop_exit
    _

// kernel: dc_and_ce_loss.3
$region0: #{dc_and_ce_loss.3}
  #allocation0 [shape = 'u32[]', space=smem, size = 0x4, offset = 0x4, fixed_abs, tag = 'smem constant byte address 0x4 - core index']
  #allocation1 [shape = 'u32[144,128]{1,0:T(1,128)}', space=vmem, size = 0x12000, scoped, tag = 'internal scratch']
  #allocation2 [shape = 'f32[1,2048]{1,0:T(1,128)}', space=vmem, size = 0x2000, scoped, tag = 'scratch operand']
  #allocation3 [shape = 'f32[1,2048]{1,0:T(1,128)}', space=vmem, size = 0x2000, scoped, tag = 'scratch operand']
  %s0 = inlined_call_operand.vmem [shape: f32[2,8,2048], index: 0, kind: input, shape index: {}]
  %s1 = inlined_call_operand.vmem [shape: s8[2,1,2048], index: 1, kind: input, shape index: {}]
  %s2 = inlined_call_operand.vmem [shape: f32[8,1], index: 2, kind: input, shape index: {}]
  %s3 = inlined_call_operand.vmem [shape: f32[2,1,2048], index: 3, kind: output, shape index: {0}]
  %s4 = inlined_call_operand.vmem [shape: f32[2,1,1], index: 4, kind: output, shape index: {1}]
  %s5 = inlined_call_operand.vmem [shape: f32[2,1,1], index: 5, kind: output, shape index: {2}]
  %6 = xla_tuple %s3, %s4, %s5
  %s7 = sld [smem:[#allocation0]]
  $region69: #{dc_and_ce_loss.3} parent=0
    _
  %s9 = ssub.s32 1, %s7
  %s10 = scalar_select 0, %s9, %s7
  loop: start=0, step=1, limit=4
  $region2: #{dc_and_ce_loss.3} parent=0 // loop_pre_header
    _
  $region3: #{dc_and_ce_loss.3} parent=0 // loop_header
    %s12 = sphi 0, %s16
    %p13 = scmp.ge.s32.totalorder %s12, 4
    %s19 = sphi 0, %s31
    %s20 = sphi 0, %s27
    %s21 = sphi 0, %s19
    %s22 = sphi 0, %s20
    %s23 = sphi 0, %s21
    %s24 = sphi 0, %s22
    %s36 = sphi 0, %s38
    %s39 = sphi 0, %s36
    %s40 = sphi 0, %s39
    %s56 = sphi 0, %s40
    %s64 = sphi 0, %s66
    %s67 = sphi 0, %s64
    %s68 = sphi 0, %s67
    %s84 = sphi 0, %s68
    %s88 = sphi 0, %s88
    %s90 = sphi 0, %s88
    %s91 = sphi 0, %s90
    %s105 = sphi 0, %s91
    %s113 = sphi 0, %s115
    %s116 = sphi 0, %s113
    %s117 = sphi 0, %s116
    %s133 = sphi 0, %s117
    %s139 = sphi 0, %s141
    %s142 = sphi 0, %s139
    %s143 = sphi 0, %s142
    %s159 = sphi 0, %s143
    %s165 = sphi 0, %s167
    %s168 = sphi 0, %s165
    %s169 = sphi 0, %s168
    %s185 = sphi 0, %s169
  $region4: #{dc_and_ce_loss.3} parent=0 // loop_header_branch
    %15 = sbr.rel (%p13) target = $region8
  $region5: #{dc_and_ce_loss.3} parent=0 // loop_body
    %s17 = ssub.s32 %s12, 1
    %s18 = ssub.s32 %s12, 2
    %s25 = sadd.s32 1, %s20
    %p26 = scmp.ge.s32.totalorder %s25, 1
    %s27 = scalar_select %p26, 0, %s25
    %s28 = sadd.s32 1, %s19
    %s29 = scalar_select %p26, %s28, %s19
    %p30 = scmp.ge.s32.totalorder %s29, 2
    %s31 = scalar_select %p30, 0, %s29
    %s32 = ssub.s32 %s19, %s31
    %s33 = ssub.s32 %s20, %s27
    %s34 = sor.u32 %s32, %s33
    %p35 = scmp.eq.s32.totalorder %s34, 0
    %s37 = sadd.s32 %s36, 1
    %s38 = scalar_select %p35, %s36, %s37
    %p41 = pneg %p35
    %p42 = scmp.eq.s32.totalorder %s12, 1
    %p43 = por %p41, %p42
    %p44 = scmp.ne.s32.totalorder %s36, %s39
    %p45 = scmp.eq.s32.totalorder %s12, 0
    %p46 = por %p44, %p45
    %p47 = scmp.ne.s32.totalorder %s36, %s39
    %p48 = scmp.eq.s32.totalorder %s17, 1
    %p49 = por %p47, %p48
    %p50 = scmp.ne.s32.totalorder %s39, %s40
    %p51 = scmp.eq.s32.totalorder %s17, 0
    %p52 = por %p50, %p51
    %p53 = scmp.ne.s32.totalorder %s39, %s40
    %p54 = scmp.eq.s32.totalorder %s18, 1
    %p55 = por %p53, %p54
    %p57 = scmp.ne.s32.totalorder %s40, %s56
    %p58 = scmp.eq.s32.totalorder %s18, 0
    %p59 = por %p57, %p58
    %s60 = ssub.s32 %s19, %s31
    %s61 = ssub.s32 %s20, %s27
    %s62 = sor.u32 %s60, %s61
    %p63 = scmp.eq.s32.totalorder %s62, 0
    %s65 = sadd.s32 %s64, 1
    %s66 = scalar_select %p63, %s64, %s65
    %p69 = pneg %p63
    %p70 = scmp.eq.s32.totalorder %s12, 1
    %p71 = por %p69, %p70
    %p72 = scmp.ne.s32.totalorder %s64, %s67
    %p73 = scmp.eq.s32.totalorder %s12, 0
    %p74 = por %p72, %p73
    %p75 = scmp.ne.s32.totalorder %s64, %s67
    %p76 = scmp.eq.s32.totalorder %s17, 1
    %p77 = por %p75, %p76
    %p78 = scmp.ne.s32.totalorder %s67, %s68
    %p79 = scmp.eq.s32.totalorder %s17, 0
    %p80 = por %p78, %p79
    %p81 = scmp.ne.s32.totalorder %s67, %s68
    %p82 = scmp.eq.s32.totalorder %s18, 1
    %p83 = por %p81, %p82
    %p85 = scmp.ne.s32.totalorder %s68, %s84
    %p86 = scmp.eq.s32.totalorder %s18, 0
    %p87 = por %p85, %p86
    %s89 = sadd.s32 %s88, 1
    %p92 = scmp.eq.s32.totalorder %s12, 1
    %p93 = scmp.ne.s32.totalorder %s88, %s90
    %p94 = scmp.eq.s32.totalorder %s12, 0
    %p95 = por %p93, %p94
    %p96 = scmp.ne.s32.totalorder %s88, %s90
    %p97 = scmp.eq.s32.totalorder %s17, 1
    %p98 = por %p96, %p97
    %p99 = scmp.ne.s32.totalorder %s90, %s91
    %p100 = scmp.eq.s32.totalorder %s17, 0
    %p101 = por %p99, %p100
    %p102 = scmp.ne.s32.totalorder %s90, %s91
    %p103 = scmp.eq.s32.totalorder %s18, 1
    %p104 = por %p102, %p103
    %p106 = scmp.ne.s32.totalorder %s91, %s105
    %p107 = scmp.eq.s32.totalorder %s18, 0
    %p108 = por %p106, %p107
    %s109 = ssub.s32 %s19, %s31
    %s110 = ssub.s32 %s20, %s27
    %s111 = sor.u32 %s109, %s110
    %p112 = scmp.eq.s32.totalorder %s111, 0
    %s114 = sadd.s32 %s113, 1
    %s115 = scalar_select %p112, %s113, %s114
    %p118 = pneg %p112
    %p119 = scmp.eq.s32.totalorder %s12, 1
    %p120 = por %p118, %p119
    %p121 = scmp.ne.s32.totalorder %s113, %s116
    %p122 = scmp.eq.s32.totalorder %s12, 0
    %p123 = por %p121, %p122
    %p124 = scmp.ne.s32.totalorder %s113, %s116
    %p125 = scmp.eq.s32.totalorder %s17, 1
    %p126 = por %p124, %p125
    %p127 = scmp.ne.s32.totalorder %s116, %s117
    %p128 = scmp.eq.s32.totalorder %s17, 0
    %p129 = por %p127, %p128
    %p130 = scmp.ne.s32.totalorder %s116, %s117
    %p131 = scmp.eq.s32.totalorder %s18, 1
    %p132 = por %p130, %p131
    %p134 = scmp.ne.s32.totalorder %s117, %s133
    %p135 = scmp.eq.s32.totalorder %s18, 0
    %p136 = por %p134, %p135
    %s137 = ssub.s32 %s19, %s31
    %p138 = scmp.eq.s32.totalorder %s137, 0
    %s140 = sadd.s32 %s139, 1
    %s141 = scalar_select %p138, %s139, %s140
    %p144 = pneg %p138
    %p145 = scmp.eq.s32.totalorder %s12, 1
    %p146 = por %p144, %p145
    %p147 = scmp.ne.s32.totalorder %s139, %s142
    %p148 = scmp.eq.s32.totalorder %s12, 0
    %p149 = por %p147, %p148
    %p150 = scmp.ne.s32.totalorder %s139, %s142
    %p151 = scmp.eq.s32.totalorder %s17, 1
    %p152 = por %p150, %p151
    %p153 = scmp.ne.s32.totalorder %s142, %s143
    %p154 = scmp.eq.s32.totalorder %s17, 0
    %p155 = por %p153, %p154
    %p156 = scmp.ne.s32.totalorder %s142, %s143
    %p157 = scmp.eq.s32.totalorder %s18, 1
    %p158 = por %p156, %p157
    %p160 = scmp.ne.s32.totalorder %s143, %s159
    %p161 = scmp.eq.s32.totalorder %s18, 0
    %p162 = por %p160, %p161
    %s163 = ssub.s32 %s19, %s31
    %p164 = scmp.eq.s32.totalorder %s163, 0
    %s166 = sadd.s32 %s165, 1
    %s167 = scalar_select %p164, %s165, %s166
    %p170 = pneg %p164
    %p171 = scmp.eq.s32.totalorder %s12, 1
    %p172 = por %p170, %p171
    %p173 = scmp.ne.s32.totalorder %s165, %s168
    %p174 = scmp.eq.s32.totalorder %s12, 0
    %p175 = por %p173, %p174
    %p176 = scmp.ne.s32.totalorder %s165, %s168
    %p177 = scmp.eq.s32.totalorder %s17, 1
    %p178 = por %p176, %p177
    %p179 = scmp.ne.s32.totalorder %s168, %s169
    %p180 = scmp.eq.s32.totalorder %s17, 0
    %p181 = por %p179, %p180
    %p182 = scmp.ne.s32.totalorder %s168, %s169
    %p183 = scmp.eq.s32.totalorder %s18, 1
    %p184 = por %p182, %p183
    %p186 = scmp.ne.s32.totalorder %s169, %s185
    %p187 = scmp.eq.s32.totalorder %s18, 0
    %p188 = por %p186, %p187
    %p189 = scmp.le.s32.totalorder 1, %s12
    %p190 = scmp.lt.s32.totalorder %s12, 3
    %p191 = pnand %p189, %p190
    %p192 = pneg %p191
    // Predicated region
    $region9: #{dc_and_ce_loss.3} parent=5 // pred_check
      _
    $region10: #{dc_and_ce_loss.3} parent=5 // pred_check_branch
      %194 = sbr.rel (%p191) target = $region12
    $region11: #{dc_and_ce_loss.3} parent=5 // pred_region
      %s195 = ssub.s32 %s12, 1
      // Predicated region
      $region13: #{dc_and_ce_loss.3} parent=11 // pred_check
        %p196 = pneg %p101
      $region14: #{dc_and_ce_loss.3} parent=11 // pred_check_branch
        %198 = sbr.rel (%p196) target = $region16
      $region15: #{dc_and_ce_loss.3} parent=11 // pred_region
        _
      $region16: #{dc_and_ce_loss.3} parent=11 // pred_fallthru
        _
    $region12: #{dc_and_ce_loss.3} parent=5 // pred_fallthru
      _
    %p199 = scmp.lt.s32.totalorder %s12, 2
    // Predicated region
    $region17: #{dc_and_ce_loss.3} parent=5 // pred_check
      %p200 = pneg %p199
    $region18: #{dc_and_ce_loss.3} parent=5 // pred_check_branch
      %202 = sbr.rel (%p200) target = $region20
    $region19: #{dc_and_ce_loss.3} parent=5 // pred_region
      // Predicated region
      $region21: #{dc_and_ce_loss.3} parent=19 // pred_check
        %p203 = pneg %p46
      $region22: #{dc_and_ce_loss.3} parent=19 // pred_check_branch
        %205 = sbr.rel (%p203) target = $region24
      $region23: #{dc_and_ce_loss.3} parent=19 // pred_region
        %s206 = smul.u32 16, %s20
        %p207 = scmp.lt.s32.totalorder %s19, 1
        %s208 = scalar_select %p207, %s19, 1
        %p209 = scmp.lt.s32.totalorder %s206, 15
        %s210 = scalar_select %p209, %s206, 15
        %s211 = smul.addr %s208, 16
        %s212 = sadd.s32 %s210, %s211
        %s213 = smul.addr %s212, 8
        %s214 = scalar_lea.vmem %s0, %s213
        %s215 = smul.u32 16, %s20
      $region24: #{dc_and_ce_loss.3} parent=19 // pred_fallthru
        _
      // Predicated region
      $region25: #{dc_and_ce_loss.3} parent=19 // pred_check
        %p216 = pneg %p74
      $region26: #{dc_and_ce_loss.3} parent=19 // pred_check_branch
        %218 = sbr.rel (%p216) target = $region28
      $region27: #{dc_and_ce_loss.3} parent=19 // pred_region
        %s219 = smul.u32 16, %s20
        %p220 = scmp.lt.s32.totalorder %s19, 1
        %s221 = scalar_select %p220, %s19, 1
        %p222 = scmp.lt.s32.totalorder %s219, 15
        %s223 = scalar_select %p222, %s219, 15
        %s224 = smul.addr %s221, 16
        %s225 = sadd.s32 %s223, %s224
        %s226 = scalar_lea.vmem %s1, %s225
        %s227 = smul.u32 16, %s20
      $region28: #{dc_and_ce_loss.3} parent=19 // pred_fallthru
        _
    $region20: #{dc_and_ce_loss.3} parent=5 // pred_fallthru
      _
    %p228 = scmp.le.s32.totalorder 1, %s12
    %p229 = scmp.lt.s32.totalorder %s12, 3
    %p230 = pnand %p228, %p229
    %p231 = pneg %p230
    // Predicated region
    $region29: #{dc_and_ce_loss.3} parent=5 // pred_check
      _
    $region30: #{dc_and_ce_loss.3} parent=5 // pred_check_branch
      %233 = sbr.rel (%p230) target = $region32
    $region31: #{dc_and_ce_loss.3} parent=5 // pred_region
      %s234 = ssub.s32 %s12, 1
      %s235 = smul.u32 16, %s22
      %p236 = scmp.lt.s32.totalorder %s21, 1
      %s237 = scalar_select %p236, %s21, 1
      %p238 = scmp.lt.s32.totalorder %s235, 15
      %s239 = scalar_select %p238, %s235, 15
      %s240 = smul.addr %s237, 16
      %s241 = sadd.s32 %s239, %s240
      %s242 = smul.addr %s241, 8
      %s243 = scalar_lea.vmem %s0, %s242
      %p244 = pneg %p52
      %p245 = pneg %p49
      %s246 = smul.u32 16, %s22
      %p247 = scmp.lt.s32.totalorder %s21, 1
      %s248 = scalar_select %p247, %s21, 1
      %p249 = scmp.lt.s32.totalorder %s246, 15
      %s250 = scalar_select %p249, %s246, 15
      %s251 = smul.addr %s248, 16
      %s252 = sadd.s32 %s250, %s251
      %s253 = scalar_lea.vmem %s1, %s252
      %p254 = pneg %p80
      %p255 = pneg %p77
      %p256 = pneg %p101
      %p257 = pneg %p98
      %p258 = pneg %p129
      %p259 = pneg %p126
      %s260 = smul.u32 16, %s22
      %p261 = scmp.lt.s32.totalorder %s21, 1
      %s262 = scalar_select %p261, %s21, 1
      %p263 = scmp.lt.s32.totalorder %s260, 15
      %s264 = scalar_select %p263, %s260, 15
      %s265 = smul.addr %s262, 16
      %s266 = sadd.s32 %s264, %s265
      %s267 = scalar_lea.vmem %s3, %s266
      %p268 = pneg %p155
      %p269 = pneg %p152
      %p270 = scmp.lt.s32.totalorder %s21, 1
      %s271 = scalar_select %p270, %s21, 1
      %s272 = scalar_lea.vmem %s4, %s271
      %p273 = pneg %p181
      %p274 = pneg %p178
      %p275 = scmp.lt.s32.totalorder %s21, 1
      %s276 = scalar_select %p275, %s21, 1
      %s277 = scalar_lea.vmem %s5, %s276
      %s278 = smul.u32 16, %s22
      %p279 = scmp.lt.s32.totalorder %s21, 1
      %s280 = scalar_select %p279, %s21, 1
      %p281 = scmp.lt.s32.totalorder %s278, 15
      %s282 = scalar_select %p281, %s278, 15
      %s283 = smul.addr %s280, 16
      %s284 = sadd.s32 %s282, %s283
      %s285 = smul.addr %s284, 8
      %s286 = scalar_lea.vmem %s0, %s285
      %s287 = smul.u32 16, %s22
      %s288 = smul.u32 16, %s22
      %p289 = scmp.lt.s32.totalorder %s21, 1
      %s290 = scalar_select %p289, %s21, 1
      %p291 = scmp.lt.s32.totalorder %s288, 15
      %s292 = scalar_select %p291, %s288, 15
      %s293 = smul.addr %s290, 16
      %s294 = sadd.s32 %s292, %s293
      %s295 = scalar_lea.vmem %s1, %s294
      %s296 = smul.u32 16, %s22
      %s297 = smul.u32 16, %s22
      %p298 = scmp.lt.s32.totalorder %s21, 1
      %s299 = scalar_select %p298, %s21, 1
      %p300 = scmp.lt.s32.totalorder %s297, 15
      %s301 = scalar_select %p300, %s297, 15
      %s302 = smul.addr %s299, 16
      %s303 = sadd.s32 %s301, %s302
      %s304 = scalar_lea.vmem %s3, %s303
      %s305 = smul.u32 16, %s22
      %p306 = scmp.lt.s32.totalorder %s21, 1
      %s307 = scalar_select %p306, %s21, 1
      %s308 = scalar_lea.vmem %s4, %s307
      %p309 = scmp.lt.s32.totalorder %s21, 1
      %s310 = scalar_select %p309, %s21, 1
      %s311 = scalar_lea.vmem %s5, %s310
      %p312 = scmp.eq.s32.totalorder %s22, 0
      // Predicated region
      $region33: #{dc_and_ce_loss.3} parent=31 // pred_check
        %p313 = pneg %p312
      $region34: #{dc_and_ce_loss.3} parent=31 // pred_check_branch
        %315 = sbr.rel (%p313) target = $region36
      $region35: #{dc_and_ce_loss.3} parent=31 // pred_region
        %316 = vst [vmem:[#allocation2] sm:$0xff] 0.0
        %317 = vst [vmem:[#allocation2 + $0x8] sm:$0xff] 0.0
        %318 = vst [vmem:[#allocation3] sm:$0xff] 0.0
        %319 = vst [vmem:[#allocation3 + $0x8] sm:$0xff] 0.0
      $region36: #{dc_and_ce_loss.3} parent=31 // pred_fallthru
        _
      %v320 = vld [vmem:[%s286] sm:$0xff]
      %v321 = vld [vmem:[%s286 + $0x8] sm:$0xff]
      %v322 = vld [vmem:[%s286 + $0x10] sm:$0xff]
      %v323 = vld [vmem:[%s286 + $0x18] sm:$0xff]
      %v324 = vld [vmem:[%s286 + $0x20] sm:$0xff]
      %v325 = vld [vmem:[%s286 + $0x28] sm:$0xff]
      %v326 = vld [vmem:[%s286 + $0x30] sm:$0xff]
      %v327 = vld [vmem:[%s286 + $0x38] sm:$0xff]
      %v328 = vld [vmem:[%s286 + $0x40] sm:$0xff]
      %v329 = vld [vmem:[%s286 + $0x48] sm:$0xff]
      %v330 = vld [vmem:[%s286 + $0x50] sm:$0xff]
      %v331 = vld [vmem:[%s286 + $0x58] sm:$0xff]
      %v332 = vld [vmem:[%s286 + $0x60] sm:$0xff]
      %v333 = vld [vmem:[%s286 + $0x68] sm:$0xff]
      %v334 = vld [vmem:[%s286 + $0x70] sm:$0xff]
      %v335 = vld [vmem:[%s286 + $0x78] sm:$0xff]
      %v336 = vld [vmem:[%s2] sm:$0xff]
      %v337 = vld [vmem:[%s295] sm:$0xff]
      %v338 = vld [vmem:[%s295 + $0x8] sm:$0xff]
      %v339 = vunpack.c.0.s8 %v337
      %v340 = vunpack.c.1.s8 %v337
      %v341 = vunpack.c.2.s8 %v337
      %v342 = vunpack.c.3.s8 %v337
      %v343 = vunpack.c.0.s8 %v338
      %v344 = vunpack.c.1.s8 %v338
      %v345 = vunpack.c.2.s8 %v338
      %v346 = vunpack.c.3.s8 %v338
      %348 = vset.pattern.permute.xlu0 0
      %349 = vperm.xlu0 %348, %v336
      %v350 = vpop.permute.xlu0 %349
      %v352 = vmul.f32 %v320, %v350
      %v353 = vmul.f32 %v321, %v350
      %v354 = vmul.f32 %v322, %v350
      %v355 = vmul.f32 %v323, %v350
      %v356 = vmul.f32 %v324, %v350
      %v357 = vmul.f32 %v325, %v350
      %v358 = vmul.f32 %v326, %v350
      %v359 = vmul.f32 %v327, %v350
      %v360 = vmul.f32 %v328, %v350
      %v361 = vmul.f32 %v329, %v350
      %v362 = vmul.f32 %v330, %v350
      %v363 = vmul.f32 %v331, %v350
      %v364 = vmul.f32 %v332, %v350
      %v365 = vmul.f32 %v333, %v350
      %v366 = vmul.f32 %v334, %v350
      %v367 = vmul.f32 %v335, %v350
      %v368 = vrot.slane %v352, 4
      %v369 = vadd.f32 %v352, %v368
      %v370 = vrot.slane %v369, 2
      %v371 = vadd.f32 %v369, %v370
      %v372 = vrot.slane %v371, 1
      %v373 = vadd.f32 %v371, %v372
      %v374 = vrot.slane %v353, 4
      %v375 = vadd.f32 %v353, %v374
      %v376 = vrot.slane %v375, 2
      %v377 = vadd.f32 %v375, %v376
      %v378 = vrot.slane %v377, 1
      %v379 = vadd.f32 %v377, %v378
      %v380 = vrot.slane %v354, 4
      %v381 = vadd.f32 %v354, %v380
      %v382 = vrot.slane %v381, 2
      %v383 = vadd.f32 %v381, %v382
      %v384 = vrot.slane %v383, 1
      %v385 = vadd.f32 %v383, %v384
      %v386 = vrot.slane %v355, 4
      %v387 = vadd.f32 %v355, %v386
      %v388 = vrot.slane %v387, 2
      %v389 = vadd.f32 %v387, %v388
      %v390 = vrot.slane %v389, 1
      %v391 = vadd.f32 %v389, %v390
      %v392 = vrot.slane %v356, 4
      %v393 = vadd.f32 %v356, %v392
      %v394 = vrot.slane %v393, 2
      %v395 = vadd.f32 %v393, %v394
      %v396 = vrot.slane %v395, 1
      %v397 = vadd.f32 %v395, %v396
      %v398 = vrot.slane %v357, 4
      %v399 = vadd.f32 %v357, %v398
      %v400 = vrot.slane %v399, 2
      %v401 = vadd.f32 %v399, %v400
      %v402 = vrot.slane %v401, 1
      %v403 = vadd.f32 %v401, %v402
      %v404 = vrot.slane %v358, 4
      %v405 = vadd.f32 %v358, %v404
      %v406 = vrot.slane %v405, 2
      %v407 = vadd.f32 %v405, %v406
      %v408 = vrot.slane %v407, 1
      %v409 = vadd.f32 %v407, %v408
      %v410 = vrot.slane %v359, 4
      %v411 = vadd.f32 %v359, %v410
      %v412 = vrot.slane %v411, 2
      %v413 = vadd.f32 %v411, %v412
      %v414 = vrot.slane %v413, 1
      %v415 = vadd.f32 %v413, %v414
      %v416 = vrot.slane %v360, 4
      %v417 = vadd.f32 %v360, %v416
      %v418 = vrot.slane %v417, 2
      %v419 = vadd.f32 %v417, %v418
      %v420 = vrot.slane %v419, 1
      %v421 = vadd.f32 %v419, %v420
      %v422 = vrot.slane %v361, 4
      %v423 = vadd.f32 %v361, %v422
      %v424 = vrot.slane %v423, 2
      %v425 = vadd.f32 %v423, %v424
      %v426 = vrot.slane %v425, 1
      %v427 = vadd.f32 %v425, %v426
      %v428 = vrot.slane %v362, 4
      %v429 = vadd.f32 %v362, %v428
      %v430 = vrot.slane %v429, 2
      %v431 = vadd.f32 %v429, %v430
      %v432 = vrot.slane %v431, 1
      %v433 = vadd.f32 %v431, %v432
      %v434 = vrot.slane %v363, 4
      %v435 = vadd.f32 %v363, %v434
      %v436 = vrot.slane %v435, 2
      %v437 = vadd.f32 %v435, %v436
      %v438 = vrot.slane %v437, 1
      %v439 = vadd.f32 %v437, %v438
      %v440 = vrot.slane %v364, 4
      %v441 = vadd.f32 %v364, %v440
      %v442 = vrot.slane %v441, 2
      %v443 = vadd.f32 %v441, %v442
      %v444 = vrot.slane %v443, 1
      %v445 = vadd.f32 %v443, %v444
      %v446 = vrot.slane %v365, 4
      %v447 = vadd.f32 %v365, %v446
      %v448 = vrot.slane %v447, 2
      %v449 = vadd.f32 %v447, %v448
      %v450 = vrot.slane %v449, 1
      %v451 = vadd.f32 %v449, %v450
      %v452 = vrot.slane %v366, 4
      %v453 = vadd.f32 %v366, %v452
      %v454 = vrot.slane %v453, 2
      %v455 = vadd.f32 %v453, %v454
      %v456 = vrot.slane %v455, 1
      %v457 = vadd.f32 %v455, %v456
      %v458 = vrot.slane %v367, 4
      %v459 = vadd.f32 %v367, %v458
      %v460 = vrot.slane %v459, 2
      %v461 = vadd.f32 %v459, %v460
      %v462 = vrot.slane %v461, 1
      %v463 = vadd.f32 %v461, %v462
      %v464 = vmul.f32 %v320, %v320
      %v465 = vmul.f32 %v321, %v321
      %v466 = vmul.f32 %v322, %v322
      %v467 = vmul.f32 %v323, %v323
      %v468 = vmul.f32 %v324, %v324
      %v469 = vmul.f32 %v325, %v325
      %v470 = vmul.f32 %v326, %v326
      %v471 = vmul.f32 %v327, %v327
      %v472 = vmul.f32 %v328, %v328
      %v473 = vmul.f32 %v329, %v329
      %v474 = vmul.f32 %v330, %v330
      %v475 = vmul.f32 %v331, %v331
      %v476 = vmul.f32 %v332, %v332
      %v477 = vmul.f32 %v333, %v333
      %v478 = vmul.f32 %v334, %v334
      %v479 = vmul.f32 %v335, %v335
      %v480 = vrot.slane %v464, 4
      %v481 = vadd.f32 %v464, %v480
      %v482 = vrot.slane %v481, 2
      %v483 = vadd.f32 %v481, %v482
      %v484 = vrot.slane %v483, 1
      %v485 = vadd.f32 %v483, %v484
      %v486 = vrot.slane %v465, 4
      %v487 = vadd.f32 %v465, %v486
      %v488 = vrot.slane %v487, 2
      %v489 = vadd.f32 %v487, %v488
      %v490 = vrot.slane %v489, 1
      %v491 = vadd.f32 %v489, %v490
      %v492 = vrot.slane %v466, 4
      %v493 = vadd.f32 %v466, %v492
      %v494 = vrot.slane %v493, 2
      %v495 = vadd.f32 %v493, %v494
      %v496 = vrot.slane %v495, 1
      %v497 = vadd.f32 %v495, %v496
      %v498 = vrot.slane %v467, 4
      %v499 = vadd.f32 %v467, %v498
      %v500 = vrot.slane %v499, 2
      %v501 = vadd.f32 %v499, %v500
      %v502 = vrot.slane %v501, 1
      %v503 = vadd.f32 %v501, %v502
      %v504 = vrot.slane %v468, 4
      %v505 = vadd.f32 %v468, %v504
      %v506 = vrot.slane %v505, 2
      %v507 = vadd.f32 %v505, %v506
      %v508 = vrot.slane %v507, 1
      %v509 = vadd.f32 %v507, %v508
      %v510 = vrot.slane %v469, 4
      %v511 = vadd.f32 %v469, %v510
      %v512 = vrot.slane %v511, 2
      %v513 = vadd.f32 %v511, %v512
      %v514 = vrot.slane %v513, 1
      %v515 = vadd.f32 %v513, %v514
      %v516 = vrot.slane %v470, 4
      %v517 = vadd.f32 %v470, %v516
      %v518 = vrot.slane %v517, 2
      %v519 = vadd.f32 %v517, %v518
      %v520 = vrot.slane %v519, 1
      %v521 = vadd.f32 %v519, %v520
      %v522 = vrot.slane %v471, 4
      %v523 = vadd.f32 %v471, %v522
      %v524 = vrot.slane %v523, 2
      %v525 = vadd.f32 %v523, %v524
      %v526 = vrot.slane %v525, 1
      %v527 = vadd.f32 %v525, %v526
      %v528 = vrot.slane %v472, 4
      %v529 = vadd.f32 %v472, %v528
      %v530 = vrot.slane %v529, 2
      %v531 = vadd.f32 %v529, %v530
      %v532 = vrot.slane %v531, 1
      %v533 = vadd.f32 %v531, %v532
      %v534 = vrot.slane %v473, 4
      %v535 = vadd.f32 %v473, %v534
      %v536 = vrot.slane %v535, 2
      %v537 = vadd.f32 %v535, %v536
      %v538 = vrot.slane %v537, 1
      %v539 = vadd.f32 %v537, %v538
      %v540 = vrot.slane %v474, 4
      %v541 = vadd.f32 %v474, %v540
      %v542 = vrot.slane %v541, 2
      %v543 = vadd.f32 %v541, %v542
      %v544 = vrot.slane %v543, 1
      %v545 = vadd.f32 %v543, %v544
      %v546 = vrot.slane %v475, 4
      %v547 = vadd.f32 %v475, %v546
      %v548 = vrot.slane %v547, 2
      %v549 = vadd.f32 %v547, %v548
      %v550 = vrot.slane %v549, 1
      %v551 = vadd.f32 %v549, %v550
      %v552 = vrot.slane %v476, 4
      %v553 = vadd.f32 %v476, %v552
      %v554 = vrot.slane %v553, 2
      %v555 = vadd.f32 %v553, %v554
      %v556 = vrot.slane %v555, 1
      %v557 = vadd.f32 %v555, %v556
      %v558 = vrot.slane %v477, 4
      %v559 = vadd.f32 %v477, %v558
      %v560 = vrot.slane %v559, 2
      %v561 = vadd.f32 %v559, %v560
      %v562 = vrot.slane %v561, 1
      %v563 = vadd.f32 %v561, %v562
      %v564 = vrot.slane %v478, 4
      %v565 = vadd.f32 %v478, %v564
      %v566 = vrot.slane %v565, 2
      %v567 = vadd.f32 %v565, %v566
      %v568 = vrot.slane %v567, 1
      %v569 = vadd.f32 %v567, %v568
      %v570 = vrot.slane %v479, 4
      %v571 = vadd.f32 %v479, %v570
      %v572 = vrot.slane %v571, 2
      %v573 = vadd.f32 %v571, %v572
      %v574 = vrot.slane %v573, 1
      %v575 = vadd.f32 %v573, %v574
      %v576 = vmax.f32 %v485, 1e-24
      %v577 = vmax.f32 %v491, 1e-24
      %v578 = vmax.f32 %v497, 1e-24
      %v579 = vmax.f32 %v503, 1e-24
      %v580 = vmax.f32 %v509, 1e-24
      %v581 = vmax.f32 %v515, 1e-24
      %v582 = vmax.f32 %v521, 1e-24
      %v583 = vmax.f32 %v527, 1e-24
      %v584 = vmax.f32 %v533, 1e-24
      %v585 = vmax.f32 %v539, 1e-24
      %v586 = vmax.f32 %v545, 1e-24
      %v587 = vmax.f32 %v551, 1e-24
      %v588 = vmax.f32 %v557, 1e-24
      %v589 = vmax.f32 %v563, 1e-24
      %v590 = vmax.f32 %v569, 1e-24
      %v591 = vmax.f32 %v575, 1e-24
      %v592 = vrsqrt.pop %v576
      %v593 = vrsqrt.pop %v577
      %v594 = vrsqrt.pop %v578
      %v595 = vrsqrt.pop %v579
      %v596 = vrsqrt.pop %v580
      %v597 = vrsqrt.pop %v581
      %v598 = vrsqrt.pop %v582
      %v599 = vrsqrt.pop %v583
      %v600 = vrsqrt.pop %v584
      %v601 = vrsqrt.pop %v585
      %v602 = vrsqrt.pop %v586
      %v603 = vrsqrt.pop %v587
      %v604 = vrsqrt.pop %v588
      %v605 = vrsqrt.pop %v589
      %v606 = vrsqrt.pop %v590
      %v607 = vrsqrt.pop %v591
      %v608 = vmul.f32 %v373, %v592
      %v609 = vmul.f32 %v379, %v593
      %v610 = vmul.f32 %v385, %v594
      %v611 = vmul.f32 %v391, %v595
      %v612 = vmul.f32 %v397, %v596
      %v613 = vmul.f32 %v403, %v597
      %v614 = vmul.f32 %v409, %v598
      %v615 = vmul.f32 %v415, %v599
      %v616 = vmul.f32 %v421, %v600
      %v617 = vmul.f32 %v427, %v601
      %v618 = vmul.f32 %v433, %v602
      %v619 = vmul.f32 %v439, %v603
      %v620 = vmul.f32 %v445, %v604
      %v621 = vmul.f32 %v451, %v605
      %v622 = vmul.f32 %v457, %v606
      %v623 = vmul.f32 %v463, %v607
      %v640 = vcombine.low %v608, %v609
      %v641 = vcombine.low %v610, %v611
      %v642 = vcombine.low %v612, %v613
      %v643 = vcombine.low %v614, %v615
      %v645 = vunpack.c.l.s4 1966171168
      %v646 = vunpack.c.0.s8 %v645
      %v647 = vlaneseq
      %v648 = vshrl.u32 %v647, 7
      %v649 = vsub.s32 %v646, %v648
      %v650 = vrot.slane %v640, %v649
      %v652 = vunpack.c.l.s4 1966171168
      %v653 = vunpack.c.0.s8 %v652
      %v654 = vlaneseq
      %v655 = vshrl.u32 %v654, 7
      %v656 = vsub.s32 %v653, %v655
      %v657 = vrot.slane %v641, %v656
      %v659 = vunpack.c.l.s4 1966171168
      %v660 = vunpack.c.0.s8 %v659
      %v661 = vlaneseq
      %v662 = vshrl.u32 %v661, 7
      %v663 = vsub.s32 %v660, %v662
      %v664 = vrot.slane %v642, %v663
      %v666 = vunpack.c.l.s4 1966171168
      %v667 = vunpack.c.0.s8 %v666
      %v668 = vlaneseq
      %v669 = vshrl.u32 %v668, 7
      %v670 = vsub.s32 %v667, %v669
      %v671 = vrot.slane %v643, %v670
      %v672 = vcombine.low %v650, %v657
      %v673 = vcombine.low %v664, %v671
      %v675 = vunpack.c.l.s4 1966171168
      %v676 = vunpack.c.0.s8 %v675
      %v677 = vlaneseq
      %v678 = vshrl.u32 %v677, 7
      %v679 = vsub.s32 %v676, %v678
      %v680 = vrot.slane %v672, %v679
      %v682 = vunpack.c.l.s4 1966171168
      %v683 = vunpack.c.0.s8 %v682
      %v684 = vlaneseq
      %v685 = vshrl.u32 %v684, 7
      %v686 = vsub.s32 %v683, %v685
      %v687 = vrot.slane %v673, %v686
      %v688 = vcombine.low %v680, %v687
      %v689 = vcombine.low %v616, %v617
      %v690 = vcombine.low %v618, %v619
      %v691 = vcombine.low %v620, %v621
      %v692 = vcombine.low %v622, %v623
      %v694 = vunpack.c.l.s4 1966171168
      %v695 = vunpack.c.0.s8 %v694
      %v696 = vlaneseq
      %v697 = vshrl.u32 %v696, 7
      %v698 = vsub.s32 %v695, %v697
      %v699 = vrot.slane %v689, %v698
      %v701 = vunpack.c.l.s4 1966171168
      %v702 = vunpack.c.0.s8 %v701
      %v703 = vlaneseq
      %v704 = vshrl.u32 %v703, 7
      %v705 = vsub.s32 %v702, %v704
      %v706 = vrot.slane %v690, %v705
      %v708 = vunpack.c.l.s4 1966171168
      %v709 = vunpack.c.0.s8 %v708
      %v710 = vlaneseq
      %v711 = vshrl.u32 %v710, 7
      %v712 = vsub.s32 %v709, %v711
      %v713 = vrot.slane %v691, %v712
      %v715 = vunpack.c.l.s4 1966171168
      %v716 = vunpack.c.0.s8 %v715
      %v717 = vlaneseq
      %v718 = vshrl.u32 %v717, 7
      %v719 = vsub.s32 %v716, %v718
      %v720 = vrot.slane %v692, %v719
      %v721 = vcombine.low %v699, %v706
      %v722 = vcombine.low %v713, %v720
      %v724 = vunpack.c.l.s4 1966171168
      %v725 = vunpack.c.0.s8 %v724
      %v726 = vlaneseq
      %v727 = vshrl.u32 %v726, 7
      %v728 = vsub.s32 %v725, %v727
      %v729 = vrot.slane %v721, %v728
      %v731 = vunpack.c.l.s4 1966171168
      %v732 = vunpack.c.0.s8 %v731
      %v733 = vlaneseq
      %v734 = vshrl.u32 %v733, 7
      %v735 = vsub.s32 %v732, %v734
      %v736 = vrot.slane %v722, %v735
      %v737 = vcombine.low %v729, %v736
      %740 = vst [vmem:[%s304] sm:$0xff] %v688
      %741 = vst [vmem:[%s304 + $0x8] sm:$0xff] %v737
      %vm742 = vcmp.eq.s32.totalorder %v339, 1
      %vm743 = vcmp.eq.s32.totalorder %v340, 1
      %vm744 = vcmp.eq.s32.totalorder %v341, 1
      %vm745 = vcmp.eq.s32.totalorder %v342, 1
      %vm746 = vcmp.eq.s32.totalorder %v343, 1
      %vm747 = vcmp.eq.s32.totalorder %v344, 1
      %vm748 = vcmp.eq.s32.totalorder %v345, 1
      %vm749 = vcmp.eq.s32.totalorder %v346, 1
      %v750 = vsel %vm742, 1, 0
      %v751 = vsel %vm743, 1, 0
      %v752 = vsel %vm744, 1, 0
      %v753 = vsel %vm745, 1, 0
      %v754 = vsel %vm746, 1, 0
      %v755 = vsel %vm747, 1, 0
      %v756 = vsel %vm748, 1, 0
      %v757 = vsel %vm749, 1, 0
      %v758 = vcvt.s32.f32 %v750
      %v759 = vcvt.s32.f32 %v751
      %v760 = vcvt.s32.f32 %v752
      %v761 = vcvt.s32.f32 %v753
      %v762 = vcvt.s32.f32 %v754
      %v763 = vcvt.s32.f32 %v755
      %v764 = vcvt.s32.f32 %v756
      %v765 = vcvt.s32.f32 %v757
      %vm766 = vcmp.eq.s32.totalorder %v339, 2
      %vm767 = vcmp.eq.s32.totalorder %v340, 2
      %vm768 = vcmp.eq.s32.totalorder %v341, 2
      %vm769 = vcmp.eq.s32.totalorder %v342, 2
      %vm770 = vcmp.eq.s32.totalorder %v343, 2
      %vm771 = vcmp.eq.s32.totalorder %v344, 2
      %vm772 = vcmp.eq.s32.totalorder %v345, 2
      %vm773 = vcmp.eq.s32.totalorder %v346, 2
      %v774 = vsel %vm766, 1, 0
      %v775 = vsel %vm767, 1, 0
      %v776 = vsel %vm768, 1, 0
      %v777 = vsel %vm769, 1, 0
      %v778 = vsel %vm770, 1, 0
      %v779 = vsel %vm771, 1, 0
      %v780 = vsel %vm772, 1, 0
      %v781 = vsel %vm773, 1, 0
      %v782 = vcvt.s32.f32 %v774
      %v783 = vcvt.s32.f32 %v775
      %v784 = vcvt.s32.f32 %v776
      %v785 = vcvt.s32.f32 %v777
      %v786 = vcvt.s32.f32 %v778
      %v787 = vcvt.s32.f32 %v779
      %v788 = vcvt.s32.f32 %v780
      %v789 = vcvt.s32.f32 %v781
      %v790 = vld [vmem:[#allocation2] sm:$0xff]
      %v791 = vld [vmem:[#allocation2 + $0x8] sm:$0xff]
      %v800 = vlaneseq
      %v801 = vshrl.u32 %v800, 7
      %v802 = vsub.s32 0, %v801
      %v803 = vrot.slane %v758, %v802
      %v804 = vlaneseq
      %v805 = vshrl.u32 %v804, 7
      %v806 = vsub.s32 4, %v805
      %v807 = vrot.slane %v758, %v806
      %v808 = vlaneseq
      %v809 = vshrl.u32 %v808, 7
      %v810 = vsub.s32 0, %v809
      %v811 = vrot.slane %v759, %v810
      %v812 = vlaneseq
      %v813 = vshrl.u32 %v812, 7
      %v814 = vsub.s32 4, %v813
      %v815 = vrot.slane %v759, %v814
      %v816 = vlaneseq
      %v817 = vshrl.u32 %v816, 7
      %v818 = vsub.s32 0, %v817
      %v819 = vrot.slane %v760, %v818
      %v820 = vlaneseq
      %v821 = vshrl.u32 %v820, 7
      %v822 = vsub.s32 4, %v821
      %v823 = vrot.slane %v760, %v822
      %v824 = vlaneseq
      %v825 = vshrl.u32 %v824, 7
      %v826 = vsub.s32 0, %v825
      %v827 = vrot.slane %v761, %v826
      %v828 = vlaneseq
      %v829 = vshrl.u32 %v828, 7
      %v830 = vsub.s32 4, %v829
      %v831 = vrot.slane %v761, %v830
      %v832 = vlaneseq
      %v833 = vshrl.u32 %v832, 7
      %v834 = vsub.s32 0, %v833
      %v835 = vrot.slane %v762, %v834
      %v836 = vlaneseq
      %v837 = vshrl.u32 %v836, 7
      %v838 = vsub.s32 4, %v837
      %v839 = vrot.slane %v762, %v838
      %v840 = vlaneseq
      %v841 = vshrl.u32 %v840, 7
      %v842 = vsub.s32 0, %v841
      %v843 = vrot.slane %v763, %v842
      %v844 = vlaneseq
      %v845 = vshrl.u32 %v844, 7
      %v846 = vsub.s32 4, %v845
      %v847 = vrot.slane %v763, %v846
      %v848 = vlaneseq
      %v849 = vshrl.u32 %v848, 7
      %v850 = vsub.s32 0, %v849
      %v851 = vrot.slane %v764, %v850
      %v852 = vlaneseq
      %v853 = vshrl.u32 %v852, 7
      %v854 = vsub.s32 4, %v853
      %v855 = vrot.slane %v764, %v854
      %v856 = vlaneseq
      %v857 = vshrl.u32 %v856, 7
      %v858 = vsub.s32 0, %v857
      %v859 = vrot.slane %v765, %v858
      %v860 = vlaneseq
      %v861 = vshrl.u32 %v860, 7
      %v862 = vsub.s32 4, %v861
      %v863 = vrot.slane %v765, %v862
      %v880 = vmul.f32 %v608, %v803
      %v881 = vmul.f32 %v609, %v807
      %v882 = vmul.f32 %v610, %v811
      %v883 = vmul.f32 %v611, %v815
      %v884 = vmul.f32 %v612, %v819
      %v885 = vmul.f32 %v613, %v823
      %v886 = vmul.f32 %v614, %v827
      %v887 = vmul.f32 %v615, %v831
      %v888 = vmul.f32 %v616, %v835
      %v889 = vmul.f32 %v617, %v839
      %v890 = vmul.f32 %v618, %v843
      %v891 = vmul.f32 %v619, %v847
      %v892 = vmul.f32 %v620, %v851
      %v893 = vmul.f32 %v621, %v855
      %v894 = vmul.f32 %v622, %v859
      %v895 = vmul.f32 %v623, %v863
      %v912 = vcombine.low %v880, %v881
      %v913 = vcombine.low %v882, %v883
      %v914 = vcombine.low %v884, %v885
      %v915 = vcombine.low %v886, %v887
      %v917 = vunpack.c.l.s4 1966171168
      %v918 = vunpack.c.0.s8 %v917
      %v919 = vlaneseq
      %v920 = vshrl.u32 %v919, 7
      %v921 = vsub.s32 %v918, %v920
      %v922 = vrot.slane %v912, %v921
      %v924 = vunpack.c.l.s4 1966171168
      %v925 = vunpack.c.0.s8 %v924
      %v926 = vlaneseq
      %v927 = vshrl.u32 %v926, 7
      %v928 = vsub.s32 %v925, %v927
      %v929 = vrot.slane %v913, %v928
      %v931 = vunpack.c.l.s4 1966171168
      %v932 = vunpack.c.0.s8 %v931
      %v933 = vlaneseq
      %v934 = vshrl.u32 %v933, 7
      %v935 = vsub.s32 %v932, %v934
      %v936 = vrot.slane %v914, %v935
      %v938 = vunpack.c.l.s4 1966171168
      %v939 = vunpack.c.0.s8 %v938
      %v940 = vlaneseq
      %v941 = vshrl.u32 %v940, 7
      %v942 = vsub.s32 %v939, %v941
      %v943 = vrot.slane %v915, %v942
      %v944 = vcombine.low %v922, %v929
      %v945 = vcombine.low %v936, %v943
      %v947 = vunpack.c.l.s4 1966171168
      %v948 = vunpack.c.0.s8 %v947
      %v949 = vlaneseq
      %v950 = vshrl.u32 %v949, 7
      %v951 = vsub.s32 %v948, %v950
      %v952 = vrot.slane %v944, %v951
      %v954 = vunpack.c.l.s4 1966171168
      %v955 = vunpack.c.0.s8 %v954
      %v956 = vlaneseq
      %v957 = vshrl.u32 %v956, 7
      %v958 = vsub.s32 %v955, %v957
      %v959 = vrot.slane %v945, %v958
      %v960 = vcombine.low %v952, %v959
      %v961 = vcombine.low %v888, %v889
      %v962 = vcombine.low %v890, %v891
      %v963 = vcombine.low %v892, %v893
      %v964 = vcombine.low %v894, %v895
      %v966 = vunpack.c.l.s4 1966171168
      %v967 = vunpack.c.0.s8 %v966
      %v968 = vlaneseq
      %v969 = vshrl.u32 %v968, 7
      %v970 = vsub.s32 %v967, %v969
      %v971 = vrot.slane %v961, %v970
      %v973 = vunpack.c.l.s4 1966171168
      %v974 = vunpack.c.0.s8 %v973
      %v975 = vlaneseq
      %v976 = vshrl.u32 %v975, 7
      %v977 = vsub.s32 %v974, %v976
      %v978 = vrot.slane %v962, %v977
      %v980 = vunpack.c.l.s4 1966171168
      %v981 = vunpack.c.0.s8 %v980
      %v982 = vlaneseq
      %v983 = vshrl.u32 %v982, 7
      %v984 = vsub.s32 %v981, %v983
      %v985 = vrot.slane %v963, %v984
      %v987 = vunpack.c.l.s4 1966171168
      %v988 = vunpack.c.0.s8 %v987
      %v989 = vlaneseq
      %v990 = vshrl.u32 %v989, 7
      %v991 = vsub.s32 %v988, %v990
      %v992 = vrot.slane %v964, %v991
      %v993 = vcombine.low %v971, %v978
      %v994 = vcombine.low %v985, %v992
      %v996 = vunpack.c.l.s4 1966171168
      %v997 = vunpack.c.0.s8 %v996
      %v998 = vlaneseq
      %v999 = vshrl.u32 %v998, 7
      %v1000 = vsub.s32 %v997, %v999
      %v1001 = vrot.slane %v993, %v1000
      %v1003 = vunpack.c.l.s4 1966171168
      %v1004 = vunpack.c.0.s8 %v1003
      %v1005 = vlaneseq
      %v1006 = vshrl.u32 %v1005, 7
      %v1007 = vsub.s32 %v1004, %v1006
      %v1008 = vrot.slane %v994, %v1007
      %v1009 = vcombine.low %v1001, %v1008
      %v1012 = vadd.f32 %v790, %v960
      %v1013 = vadd.f32 %v791, %v1009
      %1014 = vst [vmem:[#allocation2] sm:$0xff] %v1012
      %1015 = vst [vmem:[#allocation2 + $0x8] sm:$0xff] %v1013
      %v1016 = vld [vmem:[#allocation3] sm:$0xff]
      %v1017 = vld [vmem:[#allocation3 + $0x8] sm:$0xff]
      %v1018 = vmax.f32 %v608, 0.0
      %v1019 = vmax.f32 %v609, 0.0
      %v1020 = vmax.f32 %v610, 0.0
      %v1021 = vmax.f32 %v611, 0.0
      %v1022 = vmax.f32 %v612, 0.0
      %v1023 = vmax.f32 %v613, 0.0
      %v1024 = vmax.f32 %v614, 0.0
      %v1025 = vmax.f32 %v615, 0.0
      %v1026 = vmax.f32 %v616, 0.0
      %v1027 = vmax.f32 %v617, 0.0
      %v1028 = vmax.f32 %v618, 0.0
      %v1029 = vmax.f32 %v619, 0.0
      %v1030 = vmax.f32 %v620, 0.0
      %v1031 = vmax.f32 %v621, 0.0
      %v1032 = vmax.f32 %v622, 0.0
      %v1033 = vmax.f32 %v623, 0.0
      %v1042 = vlaneseq
      %v1043 = vshrl.u32 %v1042, 7
      %v1044 = vsub.s32 0, %v1043
      %v1045 = vrot.slane %v782, %v1044
      %v1046 = vlaneseq
      %v1047 = vshrl.u32 %v1046, 7
      %v1048 = vsub.s32 4, %v1047
      %v1049 = vrot.slane %v782, %v1048
      %v1050 = vlaneseq
      %v1051 = vshrl.u32 %v1050, 7
      %v1052 = vsub.s32 0, %v1051
      %v1053 = vrot.slane %v783, %v1052
      %v1054 = vlaneseq
      %v1055 = vshrl.u32 %v1054, 7
      %v1056 = vsub.s32 4, %v1055
      %v1057 = vrot.slane %v783, %v1056
      %v1058 = vlaneseq
      %v1059 = vshrl.u32 %v1058, 7
      %v1060 = vsub.s32 0, %v1059
      %v1061 = vrot.slane %v784, %v1060
      %v1062 = vlaneseq
      %v1063 = vshrl.u32 %v1062, 7
      %v1064 = vsub.s32 4, %v1063
      %v1065 = vrot.slane %v784, %v1064
      %v1066 = vlaneseq
      %v1067 = vshrl.u32 %v1066, 7
      %v1068 = vsub.s32 0, %v1067
      %v1069 = vrot.slane %v785, %v1068
      %v1070 = vlaneseq
      %v1071 = vshrl.u32 %v1070, 7
      %v1072 = vsub.s32 4, %v1071
      %v1073 = vrot.slane %v785, %v1072
      %v1074 = vlaneseq
      %v1075 = vshrl.u32 %v1074, 7
      %v1076 = vsub.s32 0, %v1075
      %v1077 = vrot.slane %v786, %v1076
      %v1078 = vlaneseq
      %v1079 = vshrl.u32 %v1078, 7
      %v1080 = vsub.s32 4, %v1079
      %v1081 = vrot.slane %v786, %v1080
      %v1082 = vlaneseq
      %v1083 = vshrl.u32 %v1082, 7
      %v1084 = vsub.s32 0, %v1083
      %v1085 = vrot.slane %v787, %v1084
      %v1086 = vlaneseq
      %v1087 = vshrl.u32 %v1086, 7
      %v1088 = vsub.s32 4, %v1087
      %v1089 = vrot.slane %v787, %v1088
      %v1090 = vlaneseq
      %v1091 = vshrl.u32 %v1090, 7
      %v1092 = vsub.s32 0, %v1091
      %v1093 = vrot.slane %v788, %v1092
      %v1094 = vlaneseq
      %v1095 = vshrl.u32 %v1094, 7
      %v1096 = vsub.s32 4, %v1095
      %v1097 = vrot.slane %v788, %v1096
      %v1098 = vlaneseq
      %v1099 = vshrl.u32 %v1098, 7
      %v1100 = vsub.s32 0, %v1099
      %v1101 = vrot.slane %v789, %v1100
      %v1102 = vlaneseq
      %v1103 = vshrl.u32 %v1102, 7
      %v1104 = vsub.s32 4, %v1103
      %v1105 = vrot.slane %v789, %v1104
      %v1122 = vmul.f32 %v1018, %v1045
      %v1123 = vmul.f32 %v1019, %v1049
      %v1124 = vmul.f32 %v1020, %v1053
      %v1125 = vmul.f32 %v1021, %v1057
      %v1126 = vmul.f32 %v1022, %v1061
      %v1127 = vmul.f32 %v1023, %v1065
      %v1128 = vmul.f32 %v1024, %v1069
      %v1129 = vmul.f32 %v1025, %v1073
      %v1130 = vmul.f32 %v1026, %v1077
      %v1131 = vmul.f32 %v1027, %v1081
      %v1132 = vmul.f32 %v1028, %v1085
      %v1133 = vmul.f32 %v1029, %v1089
      %v1134 = vmul.f32 %v1030, %v1093
      %v1135 = vmul.f32 %v1031, %v1097
      %v1136 = vmul.f32 %v1032, %v1101
      %v1137 = vmul.f32 %v1033, %v1105
      %v1154 = vcombine.low %v1122, %v1123
      %v1155 = vcombine.low %v1124, %v1125
      %v1156 = vcombine.low %v1126, %v1127
      %v1157 = vcombine.low %v1128, %v1129
      %v1159 = vunpack.c.l.s4 1966171168
      %v1160 = vunpack.c.0.s8 %v1159
      %v1161 = vlaneseq
      %v1162 = vshrl.u32 %v1161, 7
      %v1163 = vsub.s32 %v1160, %v1162
      %v1164 = vrot.slane %v1154, %v1163
      %v1166 = vunpack.c.l.s4 1966171168
      %v1167 = vunpack.c.0.s8 %v1166
      %v1168 = vlaneseq
      %v1169 = vshrl.u32 %v1168, 7
      %v1170 = vsub.s32 %v1167, %v1169
      %v1171 = vrot.slane %v1155, %v1170
      %v1173 = vunpack.c.l.s4 1966171168
      %v1174 = vunpack.c.0.s8 %v1173
      %v1175 = vlaneseq
      %v1176 = vshrl.u32 %v1175, 7
      %v1177 = vsub.s32 %v1174, %v1176
      %v1178 = vrot.slane %v1156, %v1177
      %v1180 = vunpack.c.l.s4 1966171168
      %v1181 = vunpack.c.0.s8 %v1180
      %v1182 = vlaneseq
      %v1183 = vshrl.u32 %v1182, 7
      %v1184 = vsub.s32 %v1181, %v1183
      %v1185 = vrot.slane %v1157, %v1184
      %v1186 = vcombine.low %v1164, %v1171
      %v1187 = vcombine.low %v1178, %v1185
      %v1189 = vunpack.c.l.s4 1966171168
      %v1190 = vunpack.c.0.s8 %v1189
      %v1191 = vlaneseq
      %v1192 = vshrl.u32 %v1191, 7
      %v1193 = vsub.s32 %v1190, %v1192
      %v1194 = vrot.slane %v1186, %v1193
      %v1196 = vunpack.c.l.s4 1966171168
      %v1197 = vunpack.c.0.s8 %v1196
      %v1198 = vlaneseq
      %v1199 = vshrl.u32 %v1198, 7
      %v1200 = vsub.s32 %v1197, %v1199
      %v1201 = vrot.slane %v1187, %v1200
      %v1202 = vcombine.low %v1194, %v1201
      %v1203 = vcombine.low %v1130, %v1131
      %v1204 = vcombine.low %v1132, %v1133
      %v1205 = vcombine.low %v1134, %v1135
      %v1206 = vcombine.low %v1136, %v1137
      %v1208 = vunpack.c.l.s4 1966171168
      %v1209 = vunpack.c.0.s8 %v1208
      %v1210 = vlaneseq
      %v1211 = vshrl.u32 %v1210, 7
      %v1212 = vsub.s32 %v1209, %v1211
      %v1213 = vrot.slane %v1203, %v1212
      %v1215 = vunpack.c.l.s4 1966171168
      %v1216 = vunpack.c.0.s8 %v1215
      %v1217 = vlaneseq
      %v1218 = vshrl.u32 %v1217, 7
      %v1219 = vsub.s32 %v1216, %v1218
      %v1220 = vrot.slane %v1204, %v1219
      %v1222 = vunpack.c.l.s4 1966171168
      %v1223 = vunpack.c.0.s8 %v1222
      %v1224 = vlaneseq
      %v1225 = vshrl.u32 %v1224, 7
      %v1226 = vsub.s32 %v1223, %v1225
      %v1227 = vrot.slane %v1205, %v1226
      %v1229 = vunpack.c.l.s4 1966171168
      %v1230 = vunpack.c.0.s8 %v1229
      %v1231 = vlaneseq
      %v1232 = vshrl.u32 %v1231, 7
      %v1233 = vsub.s32 %v1230, %v1232
      %v1234 = vrot.slane %v1206, %v1233
      %v1235 = vcombine.low %v1213, %v1220
      %v1236 = vcombine.low %v1227, %v1234
      %v1238 = vunpack.c.l.s4 1966171168
      %v1239 = vunpack.c.0.s8 %v1238
      %v1240 = vlaneseq
      %v1241 = vshrl.u32 %v1240, 7
      %v1242 = vsub.s32 %v1239, %v1241
      %v1243 = vrot.slane %v1235, %v1242
      %v1245 = vunpack.c.l.s4 1966171168
      %v1246 = vunpack.c.0.s8 %v1245
      %v1247 = vlaneseq
      %v1248 = vshrl.u32 %v1247, 7
      %v1249 = vsub.s32 %v1246, %v1248
      %v1250 = vrot.slane %v1236, %v1249
      %v1251 = vcombine.low %v1243, %v1250
      %v1254 = vadd.f32 %v1016, %v1202
      %v1255 = vadd.f32 %v1017, %v1251
      %1256 = vst [vmem:[#allocation3] sm:$0xff] %v1254
      %1257 = vst [vmem:[#allocation3 + $0x8] sm:$0xff] %v1255
      // Predicated region
      $region37: #{dc_and_ce_loss.3} parent=31 // pred_check
        %p1258 = pneg %p312
      $region38: #{dc_and_ce_loss.3} parent=31 // pred_check_branch
        %1260 = sbr.rel (%p1258) target = $region40
      $region39: #{dc_and_ce_loss.3} parent=31 // pred_region
        %v1261 = vld [vmem:[#allocation2] sm:$0xff]
        %v1262 = vld [vmem:[#allocation2 + $0x8] sm:$0xff]
        %v1265 = vlaneseq
        %v1266 = vshrl.u32 %v1265, 7
        %v1267 = vsub.s32 0, %v1266
        %v1268 = vrot.slane %v1261, %v1267
        %v1269 = vlaneseq
        %v1270 = vshrl.u32 %v1269, 7
        %v1271 = vsub.s32 1, %v1270
        %v1272 = vrot.slane %v1261, %v1271
        %v1273 = vlaneseq
        %v1274 = vshrl.u32 %v1273, 7
        %v1275 = vsub.s32 2, %v1274
        %v1276 = vrot.slane %v1261, %v1275
        %v1277 = vlaneseq
        %v1278 = vshrl.u32 %v1277, 7
        %v1279 = vsub.s32 3, %v1278
        %v1280 = vrot.slane %v1261, %v1279
        %v1281 = vlaneseq
        %v1282 = vshrl.u32 %v1281, 7
        %v1283 = vsub.s32 4, %v1282
        %v1284 = vrot.slane %v1261, %v1283
        %v1285 = vlaneseq
        %v1286 = vshrl.u32 %v1285, 7
        %v1287 = vsub.s32 5, %v1286
        %v1288 = vrot.slane %v1261, %v1287
        %v1289 = vlaneseq
        %v1290 = vshrl.u32 %v1289, 7
        %v1291 = vsub.s32 6, %v1290
        %v1292 = vrot.slane %v1261, %v1291
        %v1293 = vlaneseq
        %v1294 = vshrl.u32 %v1293, 7
        %v1295 = vsub.s32 7, %v1294
        %v1296 = vrot.slane %v1261, %v1295
        %v1297 = vlaneseq
        %v1298 = vshrl.u32 %v1297, 7
        %v1299 = vsub.s32 0, %v1298
        %v1300 = vrot.slane %v1262, %v1299
        %v1301 = vlaneseq
        %v1302 = vshrl.u32 %v1301, 7
        %v1303 = vsub.s32 1, %v1302
        %v1304 = vrot.slane %v1262, %v1303
        %v1305 = vlaneseq
        %v1306 = vshrl.u32 %v1305, 7
        %v1307 = vsub.s32 2, %v1306
        %v1308 = vrot.slane %v1262, %v1307
        %v1309 = vlaneseq
        %v1310 = vshrl.u32 %v1309, 7
        %v1311 = vsub.s32 3, %v1310
        %v1312 = vrot.slane %v1262, %v1311
        %v1313 = vlaneseq
        %v1314 = vshrl.u32 %v1313, 7
        %v1315 = vsub.s32 4, %v1314
        %v1316 = vrot.slane %v1262, %v1315
        %v1317 = vlaneseq
        %v1318 = vshrl.u32 %v1317, 7
        %v1319 = vsub.s32 5, %v1318
        %v1320 = vrot.slane %v1262, %v1319
        %v1321 = vlaneseq
        %v1322 = vshrl.u32 %v1321, 7
        %v1323 = vsub.s32 6, %v1322
        %v1324 = vrot.slane %v1262, %v1323
        %v1325 = vlaneseq
        %v1326 = vshrl.u32 %v1325, 7
        %v1327 = vsub.s32 7, %v1326
        %v1328 = vrot.slane %v1262, %v1327
        %vm1345 = vcmask 1040384
        %v1346 = vsel %vm1345, %v1268, 0.0
        %v1347 = vsel %vm1345, %v1272, 0.0
        %v1348 = vadd.f32 %v1346, %v1347
        %v1349 = vsel %vm1345, %v1276, 0.0
        %v1350 = vadd.f32 %v1348, %v1349
        %v1351 = vsel %vm1345, %v1280, 0.0
        %v1352 = vadd.f32 %v1350, %v1351
        %v1353 = vsel %vm1345, %v1284, 0.0
        %v1354 = vadd.f32 %v1352, %v1353
        %v1355 = vsel %vm1345, %v1288, 0.0
        %v1356 = vadd.f32 %v1354, %v1355
        %v1357 = vsel %vm1345, %v1292, 0.0
        %v1358 = vadd.f32 %v1356, %v1357
        %v1359 = vsel %vm1345, %v1296, 0.0
        %v1360 = vadd.f32 %v1358, %v1359
        %v1361 = vsel %vm1345, %v1300, 0.0
        %v1362 = vadd.f32 %v1360, %v1361
        %v1363 = vsel %vm1345, %v1304, 0.0
        %v1364 = vadd.f32 %v1362, %v1363
        %v1365 = vsel %vm1345, %v1308, 0.0
        %v1366 = vadd.f32 %v1364, %v1365
        %v1367 = vsel %vm1345, %v1312, 0.0
        %v1368 = vadd.f32 %v1366, %v1367
        %v1369 = vsel %vm1345, %v1316, 0.0
        %v1370 = vadd.f32 %v1368, %v1369
        %v1371 = vsel %vm1345, %v1320, 0.0
        %v1372 = vadd.f32 %v1370, %v1371
        %v1373 = vsel %vm1345, %v1324, 0.0
        %v1374 = vadd.f32 %v1372, %v1373
        %v1375 = vsel %vm1345, %v1328, 0.0
        %v1376 = vadd.f32 %v1374, %v1375
        %1377 = vadd.xlane.f32.xlu0 %v1376
        %v1378 = vpop.xlane.xlu0 %1377
        %vm1379 = vcmask 0
        %1380 = vst.msk [vmem:[%s308] sm:$0x1] %vm1379, %v1378
        %v1381 = vld [vmem:[#allocation3] sm:$0xff]
        %v1382 = vld [vmem:[#allocation3 + $0x8] sm:$0xff]
        %v1385 = vlaneseq
        %v1386 = vshrl.u32 %v1385, 7
        %v1387 = vsub.s32 0, %v1386
        %v1388 = vrot.slane %v1381, %v1387
        %v1389 = vlaneseq
        %v1390 = vshrl.u32 %v1389, 7
        %v1391 = vsub.s32 1, %v1390
        %v1392 = vrot.slane %v1381, %v1391
        %v1393 = vlaneseq
        %v1394 = vshrl.u32 %v1393, 7
        %v1395 = vsub.s32 2, %v1394
        %v1396 = vrot.slane %v1381, %v1395
        %v1397 = vlaneseq
        %v1398 = vshrl.u32 %v1397, 7
        %v1399 = vsub.s32 3, %v1398
        %v1400 = vrot.slane %v1381, %v1399
        %v1401 = vlaneseq
        %v1402 = vshrl.u32 %v1401, 7
        %v1403 = vsub.s32 4, %v1402
        %v1404 = vrot.slane %v1381, %v1403
        %v1405 = vlaneseq
        %v1406 = vshrl.u32 %v1405, 7
        %v1407 = vsub.s32 5, %v1406
        %v1408 = vrot.slane %v1381, %v1407
        %v1409 = vlaneseq
        %v1410 = vshrl.u32 %v1409, 7
        %v1411 = vsub.s32 6, %v1410
        %v1412 = vrot.slane %v1381, %v1411
        %v1413 = vlaneseq
        %v1414 = vshrl.u32 %v1413, 7
        %v1415 = vsub.s32 7, %v1414
        %v1416 = vrot.slane %v1381, %v1415
        %v1417 = vlaneseq
        %v1418 = vshrl.u32 %v1417, 7
        %v1419 = vsub.s32 0, %v1418
        %v1420 = vrot.slane %v1382, %v1419
        %v1421 = vlaneseq
        %v1422 = vshrl.u32 %v1421, 7
        %v1423 = vsub.s32 1, %v1422
        %v1424 = vrot.slane %v1382, %v1423
        %v1425 = vlaneseq
        %v1426 = vshrl.u32 %v1425, 7
        %v1427 = vsub.s32 2, %v1426
        %v1428 = vrot.slane %v1382, %v1427
        %v1429 = vlaneseq
        %v1430 = vshrl.u32 %v1429, 7
        %v1431 = vsub.s32 3, %v1430
        %v1432 = vrot.slane %v1382, %v1431
        %v1433 = vlaneseq
        %v1434 = vshrl.u32 %v1433, 7
        %v1435 = vsub.s32 4, %v1434
        %v1436 = vrot.slane %v1382, %v1435
        %v1437 = vlaneseq
        %v1438 = vshrl.u32 %v1437, 7
        %v1439 = vsub.s32 5, %v1438
        %v1440 = vrot.slane %v1382, %v1439
        %v1441 = vlaneseq
        %v1442 = vshrl.u32 %v1441, 7
        %v1443 = vsub.s32 6, %v1442
        %v1444 = vrot.slane %v1382, %v1443
        %v1445 = vlaneseq
        %v1446 = vshrl.u32 %v1445, 7
        %v1447 = vsub.s32 7, %v1446
        %v1448 = vrot.slane %v1382, %v1447
        %v1465 = vsel %vm1345, %v1388, 0.0
        %v1466 = vsel %vm1345, %v1392, 0.0
        %v1467 = vadd.f32 %v1465, %v1466
        %v1468 = vsel %vm1345, %v1396, 0.0
        %v1469 = vadd.f32 %v1467, %v1468
        %v1470 = vsel %vm1345, %v1400, 0.0
        %v1471 = vadd.f32 %v1469, %v1470
        %v1472 = vsel %vm1345, %v1404, 0.0
        %v1473 = vadd.f32 %v1471, %v1472
        %v1474 = vsel %vm1345, %v1408, 0.0
        %v1475 = vadd.f32 %v1473, %v1474
        %v1476 = vsel %vm1345, %v1412, 0.0
        %v1477 = vadd.f32 %v1475, %v1476
        %v1478 = vsel %vm1345, %v1416, 0.0
        %v1479 = vadd.f32 %v1477, %v1478
        %v1480 = vsel %vm1345, %v1420, 0.0
        %v1481 = vadd.f32 %v1479, %v1480
        %v1482 = vsel %vm1345, %v1424, 0.0
        %v1483 = vadd.f32 %v1481, %v1482
        %v1484 = vsel %vm1345, %v1428, 0.0
        %v1485 = vadd.f32 %v1483, %v1484
        %v1486 = vsel %vm1345, %v1432, 0.0
        %v1487 = vadd.f32 %v1485, %v1486
        %v1488 = vsel %vm1345, %v1436, 0.0
        %v1489 = vadd.f32 %v1487, %v1488
        %v1490 = vsel %vm1345, %v1440, 0.0
        %v1491 = vadd.f32 %v1489, %v1490
        %v1492 = vsel %vm1345, %v1444, 0.0
        %v1493 = vadd.f32 %v1491, %v1492
        %v1494 = vsel %vm1345, %v1448, 0.0
        %v1495 = vadd.f32 %v1493, %v1494
        %1496 = vadd.xlane.f32.xlu0 %v1495
        %v1497 = vpop.xlane.xlu0 %1496
        %1498 = vst.msk [vmem:[%s311] sm:$0x1] %vm1379, %v1497
      $region40: #{dc_and_ce_loss.3} parent=31 // pred_fallthru
        _
      %s1499 = smul.u32 16, %s22
      %p1500 = scmp.lt.s32.totalorder %s21, 1
      %s1501 = scalar_select %p1500, %s21, 1
      %p1502 = scmp.lt.s32.totalorder %s1499, 15
      %s1503 = scalar_select %p1502, %s1499, 15
      %s1504 = smul.addr %s1501, 16
      %s1505 = sadd.s32 %s1503, %s1504
      %s1506 = scalar_lea.vmem %s3, %s1505
      %p1507 = scmp.lt.s32.totalorder %s21, 1
      %s1508 = scalar_select %p1507, %s21, 1
      %s1509 = scalar_lea.vmem %s4, %s1508
      %p1510 = scmp.lt.s32.totalorder %s21, 1
      %s1511 = scalar_select %p1510, %s21, 1
      %s1512 = scalar_lea.vmem %s5, %s1511
      // Predicated region
      $region41: #{dc_and_ce_loss.3} parent=31 // pred_check
        %p1513 = pneg %p126
      $region42: #{dc_and_ce_loss.3} parent=31 // pred_check_branch
        %1515 = sbr.rel (%p1513) target = $region44
      $region43: #{dc_and_ce_loss.3} parent=31 // pred_region
        %s1516 = smul.u32 16, %s22
      $region44: #{dc_and_ce_loss.3} parent=31 // pred_fallthru
        _
      // Predicated region
      $region45: #{dc_and_ce_loss.3} parent=31 // pred_check
        %p1517 = pneg %p152
      $region46: #{dc_and_ce_loss.3} parent=31 // pred_check_branch
        %1519 = sbr.rel (%p1517) target = $region48
      $region47: #{dc_and_ce_loss.3} parent=31 // pred_region
        _
      $region48: #{dc_and_ce_loss.3} parent=31 // pred_fallthru
        _
      // Predicated region
      $region49: #{dc_and_ce_loss.3} parent=31 // pred_check
        %p1520 = pneg %p178
      $region50: #{dc_and_ce_loss.3} parent=31 // pred_check_branch
        %1522 = sbr.rel (%p1520) target = $region52
      $region51: #{dc_and_ce_loss.3} parent=31 // pred_region
        _
      $region52: #{dc_and_ce_loss.3} parent=31 // pred_fallthru
        _
    $region32: #{dc_and_ce_loss.3} parent=5 // pred_fallthru
      _
    %p1523 = scmp.le.s32.totalorder 2, %s12
    // Predicated region
    $region53: #{dc_and_ce_loss.3} parent=5 // pred_check
      %p1524 = pneg %p1523
    $region54: #{dc_and_ce_loss.3} parent=5 // pred_check_branch
      %1526 = sbr.rel (%p1524) target = $region56
    $region55: #{dc_and_ce_loss.3} parent=5 // pred_region
      %s1527 = ssub.s32 %s12, 2
      // Predicated region
      $region57: #{dc_and_ce_loss.3} parent=55 // pred_check
        %p1528 = pneg %p132
      $region58: #{dc_and_ce_loss.3} parent=55 // pred_check_branch
        %1530 = sbr.rel (%p1528) target = $region60
      $region59: #{dc_and_ce_loss.3} parent=55 // pred_region
        %s1531 = smul.u32 16, %s24
        %p1532 = scmp.lt.s32.totalorder %s23, 1
        %s1533 = scalar_select %p1532, %s23, 1
        %p1534 = scmp.lt.s32.totalorder %s1531, 15
        %s1535 = scalar_select %p1534, %s1531, 15
        %s1536 = smul.addr %s1533, 16
        %s1537 = sadd.s32 %s1535, %s1536
        %s1538 = scalar_lea.vmem %s3, %s1537
      $region60: #{dc_and_ce_loss.3} parent=55 // pred_fallthru
        _
      // Predicated region
      $region61: #{dc_and_ce_loss.3} parent=55 // pred_check
        %p1539 = pneg %p158
      $region62: #{dc_and_ce_loss.3} parent=55 // pred_check_branch
        %1541 = sbr.rel (%p1539) target = $region64
      $region63: #{dc_and_ce_loss.3} parent=55 // pred_region
        %p1542 = scmp.lt.s32.totalorder %s23, 1
        %s1543 = scalar_select %p1542, %s23, 1
        %s1544 = scalar_lea.vmem %s4, %s1543
      $region64: #{dc_and_ce_loss.3} parent=55 // pred_fallthru
        _
      // Predicated region
      $region65: #{dc_and_ce_loss.3} parent=55 // pred_check
        %p1545 = pneg %p184
      $region66: #{dc_and_ce_loss.3} parent=55 // pred_check_branch
        %1547 = sbr.rel (%p1545) target = $region68
      $region67: #{dc_and_ce_loss.3} parent=55 // pred_region
        %p1548 = scmp.lt.s32.totalorder %s23, 1
        %s1549 = scalar_select %p1548, %s23, 1
        %s1550 = scalar_lea.vmem %s5, %s1549
      $region68: #{dc_and_ce_loss.3} parent=55 // pred_fallthru
        _
    $region56: #{dc_and_ce_loss.3} parent=5 // pred_fallthru
      _
  $region6: #{dc_and_ce_loss.3} parent=0 // loop_footer
    %s16 = sadd.s32 1, %s12
  $region7: #{dc_and_ce_loss.3} parent=0 // loop_footer_branch
    %11 = sbr.rel target = $region3
  $region8: #{dc_and_ce_loss.3} parent=0 // loop_exit
    _

</llo_original>
